<compile_context>
chip_gen: v7x
topology: tpu7x:2x2x1
jax: 0.10.0
libtpu: 0.0.40
codegen_flags: <defaults>
</compile_context>

<pallas_src>
import numpy as np
import jax
import jax.numpy as jnp
from jax.experimental import pallas as pl
from jax.experimental.pallas import tpu as pltpu

BN_EPS = 1e-5
_TAPS = tuple((dy, dx) for dy in (-1, 0, 1) for dx in (-1, 0, 1))


# ---------------------------------------------------------------------------
# host-side constant builders
# ---------------------------------------------------------------------------
def _shift_masks(N, H, W):
    """(9, 1, P) f32: mask[t, 0, p] == 1 iff pixel p shifted by tap t stays inside its image."""
    P = N * H * W
    p = np.arange(P)
    h = (p // W) % H
    w = p % W
    masks = np.zeros((9, 1, P), np.float32)
    for t, (dy, dx) in enumerate(_TAPS):
        ok = (h + dy >= 0) & (h + dy < H) & (w + dx >= 0) & (w + dx < W)
        masks[t, 0, :] = ok.astype(np.float32)
    return masks


def _pool_select(N, H, W):
    """(P, P/4) f32 selector: picks the (even h, even w) representative of each 2x2 window."""
    Hp, Wp = H // 2, W // 2
    P, Pout = N * H * W, N * Hp * Wp
    G = np.zeros((P, Pout), np.float32)
    for n in range(N):
        for ho in range(Hp):
            for wo in range(Wp):
                src = n * H * W + (2 * ho) * W + (2 * wo)
                dst = n * Hp * Wp + ho * Wp + wo
                G[src, dst] = 1.0
    return G


def _cat_embed(C_in, C_out):
    """(2, C_out, C_in): e[0] embeds x into rows [0,C_in), e[1] embeds path2 into rows [C_in,2*C_in)."""
    e = np.zeros((2, C_out, C_in), np.float32)
    e[0, :C_in, :] = np.eye(C_in, dtype=np.float32)
    e[1, C_in:2 * C_in, :] = np.eye(C_in, dtype=np.float32)
    return e


# ---------------------------------------------------------------------------
# kernel
# ---------------------------------------------------------------------------
def _make_kernel(N, H, W):
    P = N * H * W
    inv_count = 1.0 / float(P)          # BN stats are over (N, H, W) == the whole lane axis
    # pltpu.roll == jnp.roll: result[p] = x[(p - shift) mod P]; we want x[p + dy*W + dx].
    shifts = tuple((-(dy * W + dx)) % P for dy, dx in _TAPS)

    def bn_relu(y, gamma, beta):
        # training-mode BN (biased variance) + affine + ReLU, fully vectorized over the slab
        mean = jnp.sum(y, axis=1, keepdims=True) * inv_count
        var = jnp.sum(y * y, axis=1, keepdims=True) * inv_count - mean * mean
        var = jnp.maximum(var, 0.0)
        scale = jax.lax.rsqrt(var + BN_EPS) * gamma
        return jnp.maximum((y - mean) * scale + beta, 0.0)

    def conv1x1_block(x, w_ref, p_ref):
        y = jnp.dot(w_ref[...], x, preferred_element_type=jnp.float32) + p_ref[0]
        return bn_relu(y, p_ref[1], p_ref[2])

    def conv3x3_block(x, w_ref, p_ref, masks):
        acc = jnp.dot(w_ref[4], x, preferred_element_type=jnp.float32)   # centre tap, no shift
        for t in range(9):
            if t == 4:
                continue
            shifted = pltpu.roll(x, shifts[t], 1) * masks[t]
            acc = acc + jnp.dot(w_ref[t], shifted, preferred_element_type=jnp.float32)
        return bn_relu(acc + p_ref[0], p_ref[1], p_ref[2])

    def kernel(x_ref, w1_ref, p1_ref, w2_ref, p2_ref, w3_ref, p3_ref,
               w4_ref, p4_ref, masks_ref, ecat_ref, pool_ref, out_ref):
        x = x_ref[...]                                            # (C_in, P)
        masks = masks_ref[...]                                    # (9, 1, P) loaded once

        # path1: 3x3 -> 1x1 -> 3x3 conv blocks
        a1 = conv3x3_block(x, w1_ref, p1_ref, masks)              # (C_out, P)
        a2 = conv1x1_block(a1, w2_ref, p2_ref)                    # (C_out, P)
        path1 = conv3x3_block(a2, w3_ref, p3_ref, masks)          # (C_out, P)

        # path2: 1x1 conv block on x (C_in -> C_in)
        path2 = conv1x1_block(x, w4_ref, p4_ref)                  # (C_in, P)

        # concat([x, path2], channel) via constant embedding matmuls, then add path1
        cat = (jnp.dot(ecat_ref[0], x, preferred_element_type=jnp.float32)
               + jnp.dot(ecat_ref[1], path2, preferred_element_type=jnp.float32))
        s = path1 + cat                                           # (C_out, P)

        # 2x2 stride-2 max pool: pairwise maxes via lane rolls, then a selection matmul
        # compacts the (even h, even w) window maxima into a lane-dense (C_out, P/4) slab.
        m = jnp.maximum(s, pltpu.roll(s, P - 1, 1))               # max over (w, w+1)
        m = jnp.maximum(m, pltpu.roll(m, P - W, 1))               # max over (h, h+1)
        out_ref[...] = jnp.dot(m, pool_ref[...],
                               preferred_element_type=jnp.float32).astype(out_ref.dtype)

    return kernel


def _full_spec(shape):
    n = len(shape)
    return pl.BlockSpec(shape, lambda i: (0,) * n)


# ---------------------------------------------------------------------------
# wrapper
# ---------------------------------------------------------------------------
def contraction_block(x, w1, b1, g1, be1, w2, b2, g2, be2,
                      w3, b3, g3, be3, w4, b4, g4, be4):
    """ContractionBlock(residual=False) forward.  x: (N, C_in, H, W) f32, H and W even.
    Conv weights in PyTorch layout: w1 (C_out,C_in,3,3), w2 (C_out,C_out,1,1),
    w3 (C_out,C_out,3,3), w4 (C_in,C_in,1,1)."""
    N, C_in, H, W = x.shape
    C_out = w1.shape[0]
    assert C_out == 2 * C_in, "ContractionBlock's add requires out_channels == 2*in_channels"
    assert H % 2 == 0 and W % 2 == 0
    P = N * H * W
    Hp, Wp = H // 2, W // 2
    Pout = N * Hp * Wp

    # channels-as-rows / pixels-as-lanes slab (lane axis = N*H*W, multiple of 128)
    x_flat = jnp.transpose(x, (1, 0, 2, 3)).reshape(C_in, P).astype(jnp.float32)

    # 3x3 weights -> tap-major (9, C_out, C_prev); 1x1 weights -> plain matrices
    w1_t = jnp.transpose(w1, (2, 3, 0, 1)).reshape(9, C_out, C_in)
    w3_t = jnp.transpose(w3, (2, 3, 0, 1)).reshape(9, C_out, C_out)
    w2_m = w2.reshape(C_out, C_out)
    w4_m = w4.reshape(C_in, C_in)

    def per_channel(b, g, be):          # (3, C, 1) = [conv bias, bn gamma, bn beta]
        return jnp.stack([b, g, be], axis=0)[:, :, None].astype(jnp.float32)

    masks = jnp.asarray(_shift_masks(N, H, W))
    ecat = jnp.asarray(_cat_embed(C_in, C_out))
    pool = jnp.asarray(_pool_select(N, H, W))

    args = (x_flat, w1_t, per_channel(b1, g1, be1),
            w2_m, per_channel(b2, g2, be2),
            w3_t, per_channel(b3, g3, be3),
            w4_m, per_channel(b4, g4, be4),
            masks, ecat, pool)

    out_flat = pl.pallas_call(
        _make_kernel(N, H, W),
        out_shape=jax.ShapeDtypeStruct((C_out, Pout), jnp.float32),
        grid=(1,),   # single step: training-mode BN needs whole-batch statistics
        in_specs=[_full_spec(a.shape) for a in args],
        out_specs=_full_spec((C_out, Pout)),
        compiler_params=pltpu.CompilerParams(dimension_semantics=("arbitrary",)),
    )(*args)

    # lane-dense (C_out, N*Hp*Wp) slab -> NCHW
    return jnp.transpose(out_flat.reshape(C_out, N, Hp, Wp), (1, 0, 2, 3))


# ---------------------------------------------------------------------------
# pure-JAX reference (for validation)
# ---------------------------------------------------------------------------
def _conv2d_ref(x, w, b):
    pad = w.shape[-1] // 2
    y = jax.lax.conv_general_dilated(
        x, w, window_strides=(1, 1), padding=((pad, pad), (pad, pad)),
        dimension_numbers=("NCHW", "OIHW", "NCHW"),
        precision=jax.lax.Precision.HIGHEST)
    return y + b[None, :, None, None]


def _bn_relu_ref(y, g, be):
    mean = jnp.mean(y, axis=(0, 2, 3), keepdims=True)
    var = jnp.mean((y - mean) ** 2, axis=(0, 2, 3), keepdims=True)
    y = (y - mean) * jax.lax.rsqrt(var + BN_EPS)
    y = y * g[None, :, None, None] + be[None, :, None, None]
    return jnp.maximum(y, 0.0)


def reference(x, w1, b1, g1, be1, w2, b2, g2, be2, w3, b3, g3, be3, w4, b4, g4, be4):
    a1 = _bn_relu_ref(_conv2d_ref(x, w1, b1), g1, be1)
    a2 = _bn_relu_ref(_conv2d_ref(a1, w2, b2), g2, be2)
    p1 = _bn_relu_ref(_conv2d_ref(a2, w3, b3), g3, be3)
    p2 = _bn_relu_ref(_conv2d_ref(x, w4, b4), g4, be4)
    s = p1 + jnp.concatenate([x, p2], axis=1)
    return jax.lax.reduce_window(s, -jnp.inf, jax.lax.max,
                                 (1, 1, 2, 2), (1, 1, 2, 2), "VALID")


if __name__ == "__main__":
    N, C_in, H, W = 2, 4, 16, 16
    C_out = 2 * C_in   # required by ContractionBlock's path sum

    key = jax.random.PRNGKey(0)
    keys = jax.random.split(key, 9)
    x = jax.random.normal(keys[0], (N, C_in, H, W), dtype=jnp.float32)

    def conv_init(k, co, ci, ksz):
        kw, kb = jax.random.split(k)
        bound = 1.0 / np.sqrt(ci * ksz * ksz)
        w = jax.random.uniform(kw, (co, ci, ksz, ksz), jnp.float32, -bound, bound)
        b = jax.random.uniform(kb, (co,), jnp.float32, -bound, bound)
        return w, b

    def bn_init(k, c):
        kg, kb = jax.random.split(k)
        return (1.0 + 0.1 * jax.random.normal(kg, (c,), jnp.float32),
                0.1 * jax.random.normal(kb, (c,), jnp.float32))

    w1, b1 = conv_init(keys[1], C_out, C_in, 3)
    g1, be1 = bn_init(keys[2], C_out)
    w2, b2 = conv_init(keys[3], C_out, C_out, 1)
    g2, be2 = bn_init(keys[4], C_out)
    w3, b3 = conv_init(keys[5], C_out, C_out, 3)
    g3, be3 = bn_init(keys[6], C_out)
    w4, b4 = conv_init(keys[7], C_in, C_in, 1)
    g4, be4 = bn_init(keys[8], C_in)

    params = (w1, b1, g1, be1, w2, b2, g2, be2, w3, b3, g3, be3, w4, b4, g4, be4)

    out = jax.block_until_ready(contraction_block(x, *params))
    ref = jax.block_until_ready(reference(x, *params))

    assert out.shape == (N, C_out, H // 2, W // 2)
    np.testing.assert_allclose(np.asarray(out), np.asarray(ref), rtol=1e-3, atol=1e-3)
    print("KERNEL_OK")
</pallas_src>

<mosaic_0001>
module attributes {stable_mosaic.version = 11 : i64} {
  func.func @kernel(%arg0: i32, %arg1: memref<4x512xf32, #tpu.memory_space<vmem>>, %arg2: memref<9x8x4xf32, #tpu.memory_space<vmem>>, %arg3: memref<3x8x1xf32, #tpu.memory_space<vmem>>, %arg4: memref<8x8xf32, #tpu.memory_space<vmem>>, %arg5: memref<3x8x1xf32, #tpu.memory_space<vmem>>, %arg6: memref<9x8x8xf32, #tpu.memory_space<vmem>>, %arg7: memref<3x8x1xf32, #tpu.memory_space<vmem>>, %arg8: memref<4x4xf32, #tpu.memory_space<vmem>>, %arg9: memref<3x4x1xf32, #tpu.memory_space<vmem>>, %arg10: memref<9x1x512xf32, #tpu.memory_space<vmem>>, %arg11: memref<2x8x4xf32, #tpu.memory_space<vmem>>, %arg12: memref<512x128xf32, #tpu.memory_space<vmem>>, %arg13: memref<8x128xf32, #tpu.memory_space<vmem>>) attributes {dimension_semantics = [#tpu.dimension_semantics<arbitrary>], iteration_bounds = array<i64: 1>, scalar_prefetch = 0 : i64, scratch_operands = 0 : i64, tpu.core_type = #tpu.core_type<tc>, window_params = [{pipeline_mode = #tpu.pipeline_mode<synchronous>, transform_indices = @transform_0, window_bounds = array<i64: 4, 512>}, {pipeline_mode = #tpu.pipeline_mode<synchronous>, transform_indices = @transform_1, window_bounds = array<i64: 9, 8, 4>}, {pipeline_mode = #tpu.pipeline_mode<synchronous>, transform_indices = @transform_2, window_bounds = array<i64: 3, 8, 1>}, {pipeline_mode = #tpu.pipeline_mode<synchronous>, transform_indices = @transform_3, window_bounds = array<i64: 8, 8>}, {pipeline_mode = #tpu.pipeline_mode<synchronous>, transform_indices = @transform_4, window_bounds = array<i64: 3, 8, 1>}, {pipeline_mode = #tpu.pipeline_mode<synchronous>, transform_indices = @transform_5, window_bounds = array<i64: 9, 8, 8>}, {pipeline_mode = #tpu.pipeline_mode<synchronous>, transform_indices = @transform_6, window_bounds = array<i64: 3, 8, 1>}, {pipeline_mode = #tpu.pipeline_mode<synchronous>, transform_indices = @transform_7, window_bounds = array<i64: 4, 4>}, {pipeline_mode = #tpu.pipeline_mode<synchronous>, transform_indices = @transform_8, window_bounds = array<i64: 3, 4, 1>}, {pipeline_mode = #tpu.pipeline_mode<synchronous>, transform_indices = @transform_9, window_bounds = array<i64: 9, 1, 512>}, {pipeline_mode = #tpu.pipeline_mode<synchronous>, transform_indices = @transform_10, window_bounds = array<i64: 2, 8, 4>}, {pipeline_mode = #tpu.pipeline_mode<synchronous>, transform_indices = @transform_11, window_bounds = array<i64: 512, 128>}, {pipeline_mode = #tpu.pipeline_mode<synchronous>, transform_indices = @transform_12, window_bounds = array<i64: 8, 128>}]} {
    %c0 = arith.constant 0 : index
    %c0_0 = arith.constant 0 : index
    %0 = vector.load %arg1[%c0, %c0_0] : memref<4x512xf32, #tpu.memory_space<vmem>>, vector<4x512xf32>
    %c0_1 = arith.constant 0 : index
    %c0_2 = arith.constant 0 : index
    %c0_3 = arith.constant 0 : index
    %1 = vector.load %arg10[%c0_1, %c0_2, %c0_3] : memref<9x1x512xf32, #tpu.memory_space<vmem>>, vector<9x1x512xf32>
    %c4 = arith.constant 4 : index
    %c0_4 = arith.constant 0 : index
    %c0_5 = arith.constant 0 : index
    %2 = vector.load %arg2[%c4, %c0_4, %c0_5] : memref<9x8x4xf32, #tpu.memory_space<vmem>>, vector<1x8x4xf32>
    %3 = vector.shape_cast %2 : vector<1x8x4xf32> to vector<8x4xf32>
    %cst = arith.constant dense<0.000000e+00> : vector<8x512xf32>
    %4 = tpu.matmul %3, %0, %cst {dimension_numbers = #tpu.dot_dimension_numbers<[1], [0], [0], [1], [0, 0, 1, 1], [], []>} : vector<8x4xf32>, vector<4x512xf32>, vector<8x512xf32> -> vector<8x512xf32>
    %c17_i32 = arith.constant 17 : i32
    %5 = tpu.dynamic_rotate %0 by %c17_i32 dim 1 : vector<4x512xf32>, i32 -> vector<4x512xf32>
    %6 = vector.extract_strided_slice %1 {offsets = [0, 0, 0], sizes = [1, 1, 512], strides = [1, 1, 1]} : vector<9x1x512xf32> to vector<1x1x512xf32>
    %7 = vector.shape_cast %6 : vector<1x1x512xf32> to vector<1x512xf32>
    %8 = vector.broadcast %7 : vector<1x512xf32> to vector<4x512xf32>
    %9 = arith.mulf %5, %8 : vector<4x512xf32>
    %c0_6 = arith.constant 0 : index
    %c0_7 = arith.constant 0 : index
    %c0_8 = arith.constant 0 : index
    %10 = vector.load %arg2[%c0_6, %c0_7, %c0_8] : memref<9x8x4xf32, #tpu.memory_space<vmem>>, vector<1x8x4xf32>
    %11 = vector.shape_cast %10 : vector<1x8x4xf32> to vector<8x4xf32>
    %cst_9 = arith.constant dense<0.000000e+00> : vector<8x512xf32>
    %12 = tpu.matmul %11, %9, %cst_9 {dimension_numbers = #tpu.dot_dimension_numbers<[1], [0], [0], [1], [0, 0, 1, 1], [], []>} : vector<8x4xf32>, vector<4x512xf32>, vector<8x512xf32> -> vector<8x512xf32>
    %13 = arith.addf %4, %12 : vector<8x512xf32>
    %c16_i32 = arith.constant 16 : i32
    %14 = tpu.dynamic_rotate %0 by %c16_i32 dim 1 : vector<4x512xf32>, i32 -> vector<4x512xf32>
    %15 = vector.extract_strided_slice %1 {offsets = [1, 0, 0], sizes = [1, 1, 512], strides = [1, 1, 1]} : vector<9x1x512xf32> to vector<1x1x512xf32>
    %16 = vector.shape_cast %15 : vector<1x1x512xf32> to vector<1x512xf32>
    %17 = vector.broadcast %16 : vector<1x512xf32> to vector<4x512xf32>
    %18 = arith.mulf %14, %17 : vector<4x512xf32>
    %c1 = arith.constant 1 : index
    %c0_10 = arith.constant 0 : index
    %c0_11 = arith.constant 0 : index
    %19 = vector.load %arg2[%c1, %c0_10, %c0_11] : memref<9x8x4xf32, #tpu.memory_space<vmem>>, vector<1x8x4xf32>
    %20 = vector.shape_cast %19 : vector<1x8x4xf32> to vector<8x4xf32>
    %cst_12 = arith.constant dense<0.000000e+00> : vector<8x512xf32>
    %21 = tpu.matmul %20, %18, %cst_12 {dimension_numbers = #tpu.dot_dimension_numbers<[1], [0], [0], [1], [0, 0, 1, 1], [], []>} : vector<8x4xf32>, vector<4x512xf32>, vector<8x512xf32> -> vector<8x512xf32>
    %22 = arith.addf %13, %21 : vector<8x512xf32>
    %c15_i32 = arith.constant 15 : i32
    %23 = tpu.dynamic_rotate %0 by %c15_i32 dim 1 : vector<4x512xf32>, i32 -> vector<4x512xf32>
    %24 = vector.extract_strided_slice %1 {offsets = [2, 0, 0], sizes = [1, 1, 512], strides = [1, 1, 1]} : vector<9x1x512xf32> to vector<1x1x512xf32>
    %25 = vector.shape_cast %24 : vector<1x1x512xf32> to vector<1x512xf32>
    %26 = vector.broadcast %25 : vector<1x512xf32> to vector<4x512xf32>
    %27 = arith.mulf %23, %26 : vector<4x512xf32>
    %c2 = arith.constant 2 : index
    %c0_13 = arith.constant 0 : index
    %c0_14 = arith.constant 0 : index
    %28 = vector.load %arg2[%c2, %c0_13, %c0_14] : memref<9x8x4xf32, #tpu.memory_space<vmem>>, vector<1x8x4xf32>
    %29 = vector.shape_cast %28 : vector<1x8x4xf32> to vector<8x4xf32>
    %cst_15 = arith.constant dense<0.000000e+00> : vector<8x512xf32>
    %30 = tpu.matmul %29, %27, %cst_15 {dimension_numbers = #tpu.dot_dimension_numbers<[1], [0], [0], [1], [0, 0, 1, 1], [], []>} : vector<8x4xf32>, vector<4x512xf32>, vector<8x512xf32> -> vector<8x512xf32>
    %31 = arith.addf %22, %30 : vector<8x512xf32>
    %c1_i32 = arith.constant 1 : i32
    %32 = tpu.dynamic_rotate %0 by %c1_i32 dim 1 : vector<4x512xf32>, i32 -> vector<4x512xf32>
    %33 = vector.extract_strided_slice %1 {offsets = [3, 0, 0], sizes = [1, 1, 512], strides = [1, 1, 1]} : vector<9x1x512xf32> to vector<1x1x512xf32>
    %34 = vector.shape_cast %33 : vector<1x1x512xf32> to vector<1x512xf32>
    %35 = vector.broadcast %34 : vector<1x512xf32> to vector<4x512xf32>
    %36 = arith.mulf %32, %35 : vector<4x512xf32>
    %c3 = arith.constant 3 : index
    %c0_16 = arith.constant 0 : index
    %c0_17 = arith.constant 0 : index
    %37 = vector.load %arg2[%c3, %c0_16, %c0_17] : memref<9x8x4xf32, #tpu.memory_space<vmem>>, vector<1x8x4xf32>
    %38 = vector.shape_cast %37 : vector<1x8x4xf32> to vector<8x4xf32>
    %cst_18 = arith.constant dense<0.000000e+00> : vector<8x512xf32>
    %39 = tpu.matmul %38, %36, %cst_18 {dimension_numbers = #tpu.dot_dimension_numbers<[1], [0], [0], [1], [0, 0, 1, 1], [], []>} : vector<8x4xf32>, vector<4x512xf32>, vector<8x512xf32> -> vector<8x512xf32>
    %40 = arith.addf %31, %39 : vector<8x512xf32>
    %c511_i32 = arith.constant 511 : i32
    %41 = tpu.dynamic_rotate %0 by %c511_i32 dim 1 : vector<4x512xf32>, i32 -> vector<4x512xf32>
    %42 = vector.extract_strided_slice %1 {offsets = [5, 0, 0], sizes = [1, 1, 512], strides = [1, 1, 1]} : vector<9x1x512xf32> to vector<1x1x512xf32>
    %43 = vector.shape_cast %42 : vector<1x1x512xf32> to vector<1x512xf32>
    %44 = vector.broadcast %43 : vector<1x512xf32> to vector<4x512xf32>
    %45 = arith.mulf %41, %44 : vector<4x512xf32>
    %c5 = arith.constant 5 : index
    %c0_19 = arith.constant 0 : index
    %c0_20 = arith.constant 0 : index
    %46 = vector.load %arg2[%c5, %c0_19, %c0_20] : memref<9x8x4xf32, #tpu.memory_space<vmem>>, vector<1x8x4xf32>
    %47 = vector.shape_cast %46 : vector<1x8x4xf32> to vector<8x4xf32>
    %cst_21 = arith.constant dense<0.000000e+00> : vector<8x512xf32>
    %48 = tpu.matmul %47, %45, %cst_21 {dimension_numbers = #tpu.dot_dimension_numbers<[1], [0], [0], [1], [0, 0, 1, 1], [], []>} : vector<8x4xf32>, vector<4x512xf32>, vector<8x512xf32> -> vector<8x512xf32>
    %49 = arith.addf %40, %48 : vector<8x512xf32>
    %c497_i32 = arith.constant 497 : i32
    %50 = tpu.dynamic_rotate %0 by %c497_i32 dim 1 : vector<4x512xf32>, i32 -> vector<4x512xf32>
    %51 = vector.extract_strided_slice %1 {offsets = [6, 0, 0], sizes = [1, 1, 512], strides = [1, 1, 1]} : vector<9x1x512xf32> to vector<1x1x512xf32>
    %52 = vector.shape_cast %51 : vector<1x1x512xf32> to vector<1x512xf32>
    %53 = vector.broadcast %52 : vector<1x512xf32> to vector<4x512xf32>
    %54 = arith.mulf %50, %53 : vector<4x512xf32>
    %c6 = arith.constant 6 : index
    %c0_22 = arith.constant 0 : index
    %c0_23 = arith.constant 0 : index
    %55 = vector.load %arg2[%c6, %c0_22, %c0_23] : memref<9x8x4xf32, #tpu.memory_space<vmem>>, vector<1x8x4xf32>
    %56 = vector.shape_cast %55 : vector<1x8x4xf32> to vector<8x4xf32>
    %cst_24 = arith.constant dense<0.000000e+00> : vector<8x512xf32>
    %57 = tpu.matmul %56, %54, %cst_24 {dimension_numbers = #tpu.dot_dimension_numbers<[1], [0], [0], [1], [0, 0, 1, 1], [], []>} : vector<8x4xf32>, vector<4x512xf32>, vector<8x512xf32> -> vector<8x512xf32>
    %58 = arith.addf %49, %57 : vector<8x512xf32>
    %c496_i32 = arith.constant 496 : i32
    %59 = tpu.dynamic_rotate %0 by %c496_i32 dim 1 : vector<4x512xf32>, i32 -> vector<4x512xf32>
    %60 = vector.extract_strided_slice %1 {offsets = [7, 0, 0], sizes = [1, 1, 512], strides = [1, 1, 1]} : vector<9x1x512xf32> to vector<1x1x512xf32>
    %61 = vector.shape_cast %60 : vector<1x1x512xf32> to vector<1x512xf32>
    %62 = vector.broadcast %61 : vector<1x512xf32> to vector<4x512xf32>
    %63 = arith.mulf %59, %62 : vector<4x512xf32>
    %c7 = arith.constant 7 : index
    %c0_25 = arith.constant 0 : index
    %c0_26 = arith.constant 0 : index
    %64 = vector.load %arg2[%c7, %c0_25, %c0_26] : memref<9x8x4xf32, #tpu.memory_space<vmem>>, vector<1x8x4xf32>
    %65 = vector.shape_cast %64 : vector<1x8x4xf32> to vector<8x4xf32>
    %cst_27 = arith.constant dense<0.000000e+00> : vector<8x512xf32>
    %66 = tpu.matmul %65, %63, %cst_27 {dimension_numbers = #tpu.dot_dimension_numbers<[1], [0], [0], [1], [0, 0, 1, 1], [], []>} : vector<8x4xf32>, vector<4x512xf32>, vector<8x512xf32> -> vector<8x512xf32>
    %67 = arith.addf %58, %66 : vector<8x512xf32>
    %c495_i32 = arith.constant 495 : i32
    %68 = tpu.dynamic_rotate %0 by %c495_i32 dim 1 : vector<4x512xf32>, i32 -> vector<4x512xf32>
    %69 = vector.extract_strided_slice %1 {offsets = [8, 0, 0], sizes = [1, 1, 512], strides = [1, 1, 1]} : vector<9x1x512xf32> to vector<1x1x512xf32>
    %70 = vector.shape_cast %69 : vector<1x1x512xf32> to vector<1x512xf32>
    %71 = vector.broadcast %70 : vector<1x512xf32> to vector<4x512xf32>
    %72 = arith.mulf %68, %71 : vector<4x512xf32>
    %c8 = arith.constant 8 : index
    %c0_28 = arith.constant 0 : index
    %c0_29 = arith.constant 0 : index
    %73 = vector.load %arg2[%c8, %c0_28, %c0_29] : memref<9x8x4xf32, #tpu.memory_space<vmem>>, vector<1x8x4xf32>
    %74 = vector.shape_cast %73 : vector<1x8x4xf32> to vector<8x4xf32>
    %cst_30 = arith.constant dense<0.000000e+00> : vector<8x512xf32>
    %75 = tpu.matmul %74, %72, %cst_30 {dimension_numbers = #tpu.dot_dimension_numbers<[1], [0], [0], [1], [0, 0, 1, 1], [], []>} : vector<8x4xf32>, vector<4x512xf32>, vector<8x512xf32> -> vector<8x512xf32>
    %76 = arith.addf %67, %75 : vector<8x512xf32>
    %c0_31 = arith.constant 0 : index
    %c0_32 = arith.constant 0 : index
    %c0_33 = arith.constant 0 : index
    %77 = vector.load %arg3[%c0_31, %c0_32, %c0_33] : memref<3x8x1xf32, #tpu.memory_space<vmem>>, vector<1x8x1xf32>
    %78 = vector.shape_cast %77 : vector<1x8x1xf32> to vector<8x1xf32>
    %79 = vector.broadcast %78 : vector<8x1xf32> to vector<8x512xf32>
    %80 = arith.addf %76, %79 : vector<8x512xf32>
    %c1_34 = arith.constant 1 : index
    %c0_35 = arith.constant 0 : index
    %c0_36 = arith.constant 0 : index
    %81 = vector.load %arg3[%c1_34, %c0_35, %c0_36] : memref<3x8x1xf32, #tpu.memory_space<vmem>>, vector<1x8x1xf32>
    %82 = vector.shape_cast %81 : vector<1x8x1xf32> to vector<8x1xf32>
    %c2_37 = arith.constant 2 : index
    %c0_38 = arith.constant 0 : index
    %c0_39 = arith.constant 0 : index
    %83 = vector.load %arg3[%c2_37, %c0_38, %c0_39] : memref<3x8x1xf32, #tpu.memory_space<vmem>>, vector<1x8x1xf32>
    %84 = vector.shape_cast %83 : vector<1x8x1xf32> to vector<8x1xf32>
    %cst_40 = arith.constant dense<0.000000e+00> : vector<8xf32>
    %85 = vector.multi_reduction <add>, %80, %cst_40 [1] : vector<8x512xf32> to vector<8xf32>
    %86 = vector.shape_cast %85 : vector<8xf32> to vector<8x1xf32>
    %cst_41 = arith.constant 0.001953125 : f32
    %87 = vector.broadcast %cst_41 : f32 to vector<8x1xf32>
    %88 = arith.mulf %86, %87 : vector<8x1xf32>
    %89 = arith.mulf %80, %80 : vector<8x512xf32>
    %cst_42 = arith.constant dense<0.000000e+00> : vector<8xf32>
    %90 = vector.multi_reduction <add>, %89, %cst_42 [1] : vector<8x512xf32> to vector<8xf32>
    %91 = vector.shape_cast %90 : vector<8xf32> to vector<8x1xf32>
    %cst_43 = arith.constant 0.001953125 : f32
    %92 = vector.broadcast %cst_43 : f32 to vector<8x1xf32>
    %93 = arith.mulf %91, %92 : vector<8x1xf32>
    %94 = arith.mulf %88, %88 : vector<8x1xf32>
    %95 = arith.subf %93, %94 : vector<8x1xf32>
    %cst_44 = arith.constant 0.000000e+00 : f32
    %96 = vector.broadcast %cst_44 : f32 to vector<8x1xf32>
    %97 = arith.maximumf %95, %96 : vector<8x1xf32>
    %cst_45 = arith.constant 9.99999974E-6 : f32
    %98 = vector.broadcast %cst_45 : f32 to vector<8x1xf32>
    %99 = arith.addf %97, %98 : vector<8x1xf32>
    %100 = math.rsqrt %99 : vector<8x1xf32>
    %101 = arith.mulf %100, %82 : vector<8x1xf32>
    %102 = vector.broadcast %88 : vector<8x1xf32> to vector<8x512xf32>
    %103 = arith.subf %80, %102 : vector<8x512xf32>
    %104 = vector.broadcast %101 : vector<8x1xf32> to vector<8x512xf32>
    %105 = arith.mulf %103, %104 : vector<8x512xf32>
    %106 = vector.broadcast %84 : vector<8x1xf32> to vector<8x512xf32>
    %107 = arith.addf %105, %106 : vector<8x512xf32>
    %cst_46 = arith.constant 0.000000e+00 : f32
    %108 = vector.broadcast %cst_46 : f32 to vector<8x512xf32>
    %109 = arith.maximumf %107, %108 : vector<8x512xf32>
    %c0_47 = arith.constant 0 : index
    %c0_48 = arith.constant 0 : index
    %110 = vector.load %arg4[%c0_47, %c0_48] : memref<8x8xf32, #tpu.memory_space<vmem>>, vector<8x8xf32>
    %cst_49 = arith.constant dense<0.000000e+00> : vector<8x512xf32>
    %111 = tpu.matmul %110, %109, %cst_49 {dimension_numbers = #tpu.dot_dimension_numbers<[1], [0], [0], [1], [0, 0, 1, 1], [], []>} : vector<8x8xf32>, vector<8x512xf32>, vector<8x512xf32> -> vector<8x512xf32>
    %c0_50 = arith.constant 0 : index
    %c0_51 = arith.constant 0 : index
    %c0_52 = arith.constant 0 : index
    %112 = vector.load %arg5[%c0_50, %c0_51, %c0_52] : memref<3x8x1xf32, #tpu.memory_space<vmem>>, vector<1x8x1xf32>
    %113 = vector.shape_cast %112 : vector<1x8x1xf32> to vector<8x1xf32>
    %114 = vector.broadcast %113 : vector<8x1xf32> to vector<8x512xf32>
    %115 = arith.addf %111, %114 : vector<8x512xf32>
    %c1_53 = arith.constant 1 : index
    %c0_54 = arith.constant 0 : index
    %c0_55 = arith.constant 0 : index
    %116 = vector.load %arg5[%c1_53, %c0_54, %c0_55] : memref<3x8x1xf32, #tpu.memory_space<vmem>>, vector<1x8x1xf32>
    %117 = vector.shape_cast %116 : vector<1x8x1xf32> to vector<8x1xf32>
    %c2_56 = arith.constant 2 : index
    %c0_57 = arith.constant 0 : index
    %c0_58 = arith.constant 0 : index
    %118 = vector.load %arg5[%c2_56, %c0_57, %c0_58] : memref<3x8x1xf32, #tpu.memory_space<vmem>>, vector<1x8x1xf32>
    %119 = vector.shape_cast %118 : vector<1x8x1xf32> to vector<8x1xf32>
    %cst_59 = arith.constant dense<0.000000e+00> : vector<8xf32>
    %120 = vector.multi_reduction <add>, %115, %cst_59 [1] : vector<8x512xf32> to vector<8xf32>
    %121 = vector.shape_cast %120 : vector<8xf32> to vector<8x1xf32>
    %cst_60 = arith.constant 0.001953125 : f32
    %122 = vector.broadcast %cst_60 : f32 to vector<8x1xf32>
    %123 = arith.mulf %121, %122 : vector<8x1xf32>
    %124 = arith.mulf %115, %115 : vector<8x512xf32>
    %cst_61 = arith.constant dense<0.000000e+00> : vector<8xf32>
    %125 = vector.multi_reduction <add>, %124, %cst_61 [1] : vector<8x512xf32> to vector<8xf32>
    %126 = vector.shape_cast %125 : vector<8xf32> to vector<8x1xf32>
    %cst_62 = arith.constant 0.001953125 : f32
    %127 = vector.broadcast %cst_62 : f32 to vector<8x1xf32>
    %128 = arith.mulf %126, %127 : vector<8x1xf32>
    %129 = arith.mulf %123, %123 : vector<8x1xf32>
    %130 = arith.subf %128, %129 : vector<8x1xf32>
    %cst_63 = arith.constant 0.000000e+00 : f32
    %131 = vector.broadcast %cst_63 : f32 to vector<8x1xf32>
    %132 = arith.maximumf %130, %131 : vector<8x1xf32>
    %cst_64 = arith.constant 9.99999974E-6 : f32
    %133 = vector.broadcast %cst_64 : f32 to vector<8x1xf32>
    %134 = arith.addf %132, %133 : vector<8x1xf32>
    %135 = math.rsqrt %134 : vector<8x1xf32>
    %136 = arith.mulf %135, %117 : vector<8x1xf32>
    %137 = vector.broadcast %123 : vector<8x1xf32> to vector<8x512xf32>
    %138 = arith.subf %115, %137 : vector<8x512xf32>
    %139 = vector.broadcast %136 : vector<8x1xf32> to vector<8x512xf32>
    %140 = arith.mulf %138, %139 : vector<8x512xf32>
    %141 = vector.broadcast %119 : vector<8x1xf32> to vector<8x512xf32>
    %142 = arith.addf %140, %141 : vector<8x512xf32>
    %cst_65 = arith.constant 0.000000e+00 : f32
    %143 = vector.broadcast %cst_65 : f32 to vector<8x512xf32>
    %144 = arith.maximumf %142, %143 : vector<8x512xf32>
    %c4_66 = arith.constant 4 : index
    %c0_67 = arith.constant 0 : index
    %c0_68 = arith.constant 0 : index
    %145 = vector.load %arg6[%c4_66, %c0_67, %c0_68] : memref<9x8x8xf32, #tpu.memory_space<vmem>>, vector<1x8x8xf32>
    %146 = vector.shape_cast %145 : vector<1x8x8xf32> to vector<8x8xf32>
    %cst_69 = arith.constant dense<0.000000e+00> : vector<8x512xf32>
    %147 = tpu.matmul %146, %144, %cst_69 {dimension_numbers = #tpu.dot_dimension_numbers<[1], [0], [0], [1], [0, 0, 1, 1], [], []>} : vector<8x8xf32>, vector<8x512xf32>, vector<8x512xf32> -> vector<8x512xf32>
    %c17_i32_70 = arith.constant 17 : i32
    %148 = tpu.dynamic_rotate %144 by %c17_i32_70 dim 1 : vector<8x512xf32>, i32 -> vector<8x512xf32>
    %149 = vector.extract_strided_slice %1 {offsets = [0, 0, 0], sizes = [1, 1, 512], strides = [1, 1, 1]} : vector<9x1x512xf32> to vector<1x1x512xf32>
    %150 = vector.shape_cast %149 : vector<1x1x512xf32> to vector<1x512xf32>
    %151 = vector.broadcast %150 : vector<1x512xf32> to vector<8x512xf32>
    %152 = arith.mulf %148, %151 : vector<8x512xf32>
    %c0_71 = arith.constant 0 : index
    %c0_72 = arith.constant 0 : index
    %c0_73 = arith.constant 0 : index
    %153 = vector.load %arg6[%c0_71, %c0_72, %c0_73] : memref<9x8x8xf32, #tpu.memory_space<vmem>>, vector<1x8x8xf32>
    %154 = vector.shape_cast %153 : vector<1x8x8xf32> to vector<8x8xf32>
    %cst_74 = arith.constant dense<0.000000e+00> : vector<8x512xf32>
    %155 = tpu.matmul %154, %152, %cst_74 {dimension_numbers = #tpu.dot_dimension_numbers<[1], [0], [0], [1], [0, 0, 1, 1], [], []>} : vector<8x8xf32>, vector<8x512xf32>, vector<8x512xf32> -> vector<8x512xf32>
    %156 = arith.addf %147, %155 : vector<8x512xf32>
    %c16_i32_75 = arith.constant 16 : i32
    %157 = tpu.dynamic_rotate %144 by %c16_i32_75 dim 1 : vector<8x512xf32>, i32 -> vector<8x512xf32>
    %158 = vector.extract_strided_slice %1 {offsets = [1, 0, 0], sizes = [1, 1, 512], strides = [1, 1, 1]} : vector<9x1x512xf32> to vector<1x1x512xf32>
    %159 = vector.shape_cast %158 : vector<1x1x512xf32> to vector<1x512xf32>
    %160 = vector.broadcast %159 : vector<1x512xf32> to vector<8x512xf32>
    %161 = arith.mulf %157, %160 : vector<8x512xf32>
    %c1_76 = arith.constant 1 : index
    %c0_77 = arith.constant 0 : index
    %c0_78 = arith.constant 0 : index
    %162 = vector.load %arg6[%c1_76, %c0_77, %c0_78] : memref<9x8x8xf32, #tpu.memory_space<vmem>>, vector<1x8x8xf32>
    %163 = vector.shape_cast %162 : vector<1x8x8xf32> to vector<8x8xf32>
    %cst_79 = arith.constant dense<0.000000e+00> : vector<8x512xf32>
    %164 = tpu.matmul %163, %161, %cst_79 {dimension_numbers = #tpu.dot_dimension_numbers<[1], [0], [0], [1], [0, 0, 1, 1], [], []>} : vector<8x8xf32>, vector<8x512xf32>, vector<8x512xf32> -> vector<8x512xf32>
    %165 = arith.addf %156, %164 : vector<8x512xf32>
    %c15_i32_80 = arith.constant 15 : i32
    %166 = tpu.dynamic_rotate %144 by %c15_i32_80 dim 1 : vector<8x512xf32>, i32 -> vector<8x512xf32>
    %167 = vector.extract_strided_slice %1 {offsets = [2, 0, 0], sizes = [1, 1, 512], strides = [1, 1, 1]} : vector<9x1x512xf32> to vector<1x1x512xf32>
    %168 = vector.shape_cast %167 : vector<1x1x512xf32> to vector<1x512xf32>
    %169 = vector.broadcast %168 : vector<1x512xf32> to vector<8x512xf32>
    %170 = arith.mulf %166, %169 : vector<8x512xf32>
    %c2_81 = arith.constant 2 : index
    %c0_82 = arith.constant 0 : index
    %c0_83 = arith.constant 0 : index
    %171 = vector.load %arg6[%c2_81, %c0_82, %c0_83] : memref<9x8x8xf32, #tpu.memory_space<vmem>>, vector<1x8x8xf32>
    %172 = vector.shape_cast %171 : vector<1x8x8xf32> to vector<8x8xf32>
    %cst_84 = arith.constant dense<0.000000e+00> : vector<8x512xf32>
    %173 = tpu.matmul %172, %170, %cst_84 {dimension_numbers = #tpu.dot_dimension_numbers<[1], [0], [0], [1], [0, 0, 1, 1], [], []>} : vector<8x8xf32>, vector<8x512xf32>, vector<8x512xf32> -> vector<8x512xf32>
    %174 = arith.addf %165, %173 : vector<8x512xf32>
    %c1_i32_85 = arith.constant 1 : i32
    %175 = tpu.dynamic_rotate %144 by %c1_i32_85 dim 1 : vector<8x512xf32>, i32 -> vector<8x512xf32>
    %176 = vector.extract_strided_slice %1 {offsets = [3, 0, 0], sizes = [1, 1, 512], strides = [1, 1, 1]} : vector<9x1x512xf32> to vector<1x1x512xf32>
    %177 = vector.shape_cast %176 : vector<1x1x512xf32> to vector<1x512xf32>
    %178 = vector.broadcast %177 : vector<1x512xf32> to vector<8x512xf32>
    %179 = arith.mulf %175, %178 : vector<8x512xf32>
    %c3_86 = arith.constant 3 : index
    %c0_87 = arith.constant 0 : index
    %c0_88 = arith.constant 0 : index
    %180 = vector.load %arg6[%c3_86, %c0_87, %c0_88] : memref<9x8x8xf32, #tpu.memory_space<vmem>>, vector<1x8x8xf32>
    %181 = vector.shape_cast %180 : vector<1x8x8xf32> to vector<8x8xf32>
    %cst_89 = arith.constant dense<0.000000e+00> : vector<8x512xf32>
    %182 = tpu.matmul %181, %179, %cst_89 {dimension_numbers = #tpu.dot_dimension_numbers<[1], [0], [0], [1], [0, 0, 1, 1], [], []>} : vector<8x8xf32>, vector<8x512xf32>, vector<8x512xf32> -> vector<8x512xf32>
    %183 = arith.addf %174, %182 : vector<8x512xf32>
    %c511_i32_90 = arith.constant 511 : i32
    %184 = tpu.dynamic_rotate %144 by %c511_i32_90 dim 1 : vector<8x512xf32>, i32 -> vector<8x512xf32>
    %185 = vector.extract_strided_slice %1 {offsets = [5, 0, 0], sizes = [1, 1, 512], strides = [1, 1, 1]} : vector<9x1x512xf32> to vector<1x1x512xf32>
    %186 = vector.shape_cast %185 : vector<1x1x512xf32> to vector<1x512xf32>
    %187 = vector.broadcast %186 : vector<1x512xf32> to vector<8x512xf32>
    %188 = arith.mulf %184, %187 : vector<8x512xf32>
    %c5_91 = arith.constant 5 : index
    %c0_92 = arith.constant 0 : index
    %c0_93 = arith.constant 0 : index
    %189 = vector.load %arg6[%c5_91, %c0_92, %c0_93] : memref<9x8x8xf32, #tpu.memory_space<vmem>>, vector<1x8x8xf32>
    %190 = vector.shape_cast %189 : vector<1x8x8xf32> to vector<8x8xf32>
    %cst_94 = arith.constant dense<0.000000e+00> : vector<8x512xf32>
    %191 = tpu.matmul %190, %188, %cst_94 {dimension_numbers = #tpu.dot_dimension_numbers<[1], [0], [0], [1], [0, 0, 1, 1], [], []>} : vector<8x8xf32>, vector<8x512xf32>, vector<8x512xf32> -> vector<8x512xf32>
    %192 = arith.addf %183, %191 : vector<8x512xf32>
    %c497_i32_95 = arith.constant 497 : i32
    %193 = tpu.dynamic_rotate %144 by %c497_i32_95 dim 1 : vector<8x512xf32>, i32 -> vector<8x512xf32>
    %194 = vector.extract_strided_slice %1 {offsets = [6, 0, 0], sizes = [1, 1, 512], strides = [1, 1, 1]} : vector<9x1x512xf32> to vector<1x1x512xf32>
    %195 = vector.shape_cast %194 : vector<1x1x512xf32> to vector<1x512xf32>
    %196 = vector.broadcast %195 : vector<1x512xf32> to vector<8x512xf32>
    %197 = arith.mulf %193, %196 : vector<8x512xf32>
    %c6_96 = arith.constant 6 : index
    %c0_97 = arith.constant 0 : index
    %c0_98 = arith.constant 0 : index
    %198 = vector.load %arg6[%c6_96, %c0_97, %c0_98] : memref<9x8x8xf32, #tpu.memory_space<vmem>>, vector<1x8x8xf32>
    %199 = vector.shape_cast %198 : vector<1x8x8xf32> to vector<8x8xf32>
    %cst_99 = arith.constant dense<0.000000e+00> : vector<8x512xf32>
    %200 = tpu.matmul %199, %197, %cst_99 {dimension_numbers = #tpu.dot_dimension_numbers<[1], [0], [0], [1], [0, 0, 1, 1], [], []>} : vector<8x8xf32>, vector<8x512xf32>, vector<8x512xf32> -> vector<8x512xf32>
    %201 = arith.addf %192, %200 : vector<8x512xf32>
    %c496_i32_100 = arith.constant 496 : i32
    %202 = tpu.dynamic_rotate %144 by %c496_i32_100 dim 1 : vector<8x512xf32>, i32 -> vector<8x512xf32>
    %203 = vector.extract_strided_slice %1 {offsets = [7, 0, 0], sizes = [1, 1, 512], strides = [1, 1, 1]} : vector<9x1x512xf32> to vector<1x1x512xf32>
    %204 = vector.shape_cast %203 : vector<1x1x512xf32> to vector<1x512xf32>
    %205 = vector.broadcast %204 : vector<1x512xf32> to vector<8x512xf32>
    %206 = arith.mulf %202, %205 : vector<8x512xf32>
    %c7_101 = arith.constant 7 : index
    %c0_102 = arith.constant 0 : index
    %c0_103 = arith.constant 0 : index
    %207 = vector.load %arg6[%c7_101, %c0_102, %c0_103] : memref<9x8x8xf32, #tpu.memory_space<vmem>>, vector<1x8x8xf32>
    %208 = vector.shape_cast %207 : vector<1x8x8xf32> to vector<8x8xf32>
    %cst_104 = arith.constant dense<0.000000e+00> : vector<8x512xf32>
    %209 = tpu.matmul %208, %206, %cst_104 {dimension_numbers = #tpu.dot_dimension_numbers<[1], [0], [0], [1], [0, 0, 1, 1], [], []>} : vector<8x8xf32>, vector<8x512xf32>, vector<8x512xf32> -> vector<8x512xf32>
    %210 = arith.addf %201, %209 : vector<8x512xf32>
    %c495_i32_105 = arith.constant 495 : i32
    %211 = tpu.dynamic_rotate %144 by %c495_i32_105 dim 1 : vector<8x512xf32>, i32 -> vector<8x512xf32>
    %212 = vector.extract_strided_slice %1 {offsets = [8, 0, 0], sizes = [1, 1, 512], strides = [1, 1, 1]} : vector<9x1x512xf32> to vector<1x1x512xf32>
    %213 = vector.shape_cast %212 : vector<1x1x512xf32> to vector<1x512xf32>
    %214 = vector.broadcast %213 : vector<1x512xf32> to vector<8x512xf32>
    %215 = arith.mulf %211, %214 : vector<8x512xf32>
    %c8_106 = arith.constant 8 : index
    %c0_107 = arith.constant 0 : index
    %c0_108 = arith.constant 0 : index
    %216 = vector.load %arg6[%c8_106, %c0_107, %c0_108] : memref<9x8x8xf32, #tpu.memory_space<vmem>>, vector<1x8x8xf32>
    %217 = vector.shape_cast %216 : vector<1x8x8xf32> to vector<8x8xf32>
    %cst_109 = arith.constant dense<0.000000e+00> : vector<8x512xf32>
    %218 = tpu.matmul %217, %215, %cst_109 {dimension_numbers = #tpu.dot_dimension_numbers<[1], [0], [0], [1], [0, 0, 1, 1], [], []>} : vector<8x8xf32>, vector<8x512xf32>, vector<8x512xf32> -> vector<8x512xf32>
    %219 = arith.addf %210, %218 : vector<8x512xf32>
    %c0_110 = arith.constant 0 : index
    %c0_111 = arith.constant 0 : index
    %c0_112 = arith.constant 0 : index
    %220 = vector.load %arg7[%c0_110, %c0_111, %c0_112] : memref<3x8x1xf32, #tpu.memory_space<vmem>>, vector<1x8x1xf32>
    %221 = vector.shape_cast %220 : vector<1x8x1xf32> to vector<8x1xf32>
    %222 = vector.broadcast %221 : vector<8x1xf32> to vector<8x512xf32>
    %223 = arith.addf %219, %222 : vector<8x512xf32>
    %c1_113 = arith.constant 1 : index
    %c0_114 = arith.constant 0 : index
    %c0_115 = arith.constant 0 : index
    %224 = vector.load %arg7[%c1_113, %c0_114, %c0_115] : memref<3x8x1xf32, #tpu.memory_space<vmem>>, vector<1x8x1xf32>
    %225 = vector.shape_cast %224 : vector<1x8x1xf32> to vector<8x1xf32>
    %c2_116 = arith.constant 2 : index
    %c0_117 = arith.constant 0 : index
    %c0_118 = arith.constant 0 : index
    %226 = vector.load %arg7[%c2_116, %c0_117, %c0_118] : memref<3x8x1xf32, #tpu.memory_space<vmem>>, vector<1x8x1xf32>
    %227 = vector.shape_cast %226 : vector<1x8x1xf32> to vector<8x1xf32>
    %cst_119 = arith.constant dense<0.000000e+00> : vector<8xf32>
    %228 = vector.multi_reduction <add>, %223, %cst_119 [1] : vector<8x512xf32> to vector<8xf32>
    %229 = vector.shape_cast %228 : vector<8xf32> to vector<8x1xf32>
    %cst_120 = arith.constant 0.001953125 : f32
    %230 = vector.broadcast %cst_120 : f32 to vector<8x1xf32>
    %231 = arith.mulf %229, %230 : vector<8x1xf32>
    %232 = arith.mulf %223, %223 : vector<8x512xf32>
    %cst_121 = arith.constant dense<0.000000e+00> : vector<8xf32>
    %233 = vector.multi_reduction <add>, %232, %cst_121 [1] : vector<8x512xf32> to vector<8xf32>
    %234 = vector.shape_cast %233 : vector<8xf32> to vector<8x1xf32>
    %cst_122 = arith.constant 0.001953125 : f32
    %235 = vector.broadcast %cst_122 : f32 to vector<8x1xf32>
    %236 = arith.mulf %234, %235 : vector<8x1xf32>
    %237 = arith.mulf %231, %231 : vector<8x1xf32>
    %238 = arith.subf %236, %237 : vector<8x1xf32>
    %cst_123 = arith.constant 0.000000e+00 : f32
    %239 = vector.broadcast %cst_123 : f32 to vector<8x1xf32>
    %240 = arith.maximumf %238, %239 : vector<8x1xf32>
    %cst_124 = arith.constant 9.99999974E-6 : f32
    %241 = vector.broadcast %cst_124 : f32 to vector<8x1xf32>
    %242 = arith.addf %240, %241 : vector<8x1xf32>
    %243 = math.rsqrt %242 : vector<8x1xf32>
    %244 = arith.mulf %243, %225 : vector<8x1xf32>
    %245 = vector.broadcast %231 : vector<8x1xf32> to vector<8x512xf32>
    %246 = arith.subf %223, %245 : vector<8x512xf32>
    %247 = vector.broadcast %244 : vector<8x1xf32> to vector<8x512xf32>
    %248 = arith.mulf %246, %247 : vector<8x512xf32>
    %249 = vector.broadcast %227 : vector<8x1xf32> to vector<8x512xf32>
    %250 = arith.addf %248, %249 : vector<8x512xf32>
    %cst_125 = arith.constant 0.000000e+00 : f32
    %251 = vector.broadcast %cst_125 : f32 to vector<8x512xf32>
    %252 = arith.maximumf %250, %251 : vector<8x512xf32>
    %c0_126 = arith.constant 0 : index
    %c0_127 = arith.constant 0 : index
    %253 = vector.load %arg8[%c0_126, %c0_127] : memref<4x4xf32, #tpu.memory_space<vmem>>, vector<4x4xf32>
    %cst_128 = arith.constant dense<0.000000e+00> : vector<4x512xf32>
    %254 = tpu.matmul %253, %0, %cst_128 {dimension_numbers = #tpu.dot_dimension_numbers<[1], [0], [0], [1], [0, 0, 1, 1], [], []>} : vector<4x4xf32>, vector<4x512xf32>, vector<4x512xf32> -> vector<4x512xf32>
    %c0_129 = arith.constant 0 : index
    %c0_130 = arith.constant 0 : index
    %c0_131 = arith.constant 0 : index
    %255 = vector.load %arg9[%c0_129, %c0_130, %c0_131] : memref<3x4x1xf32, #tpu.memory_space<vmem>>, vector<1x4x1xf32>
    %256 = vector.shape_cast %255 : vector<1x4x1xf32> to vector<4x1xf32>
    %257 = vector.broadcast %256 : vector<4x1xf32> to vector<4x512xf32>
    %258 = arith.addf %254, %257 : vector<4x512xf32>
    %c1_132 = arith.constant 1 : index
    %c0_133 = arith.constant 0 : index
    %c0_134 = arith.constant 0 : index
    %259 = vector.load %arg9[%c1_132, %c0_133, %c0_134] : memref<3x4x1xf32, #tpu.memory_space<vmem>>, vector<1x4x1xf32>
    %260 = vector.shape_cast %259 : vector<1x4x1xf32> to vector<4x1xf32>
    %c2_135 = arith.constant 2 : index
    %c0_136 = arith.constant 0 : index
    %c0_137 = arith.constant 0 : index
    %261 = vector.load %arg9[%c2_135, %c0_136, %c0_137] : memref<3x4x1xf32, #tpu.memory_space<vmem>>, vector<1x4x1xf32>
    %262 = vector.shape_cast %261 : vector<1x4x1xf32> to vector<4x1xf32>
    %cst_138 = arith.constant dense<0.000000e+00> : vector<4xf32>
    %263 = vector.multi_reduction <add>, %258, %cst_138 [1] : vector<4x512xf32> to vector<4xf32>
    %264 = vector.shape_cast %263 : vector<4xf32> to vector<4x1xf32>
    %cst_139 = arith.constant 0.001953125 : f32
    %265 = vector.broadcast %cst_139 : f32 to vector<4x1xf32>
    %266 = arith.mulf %264, %265 : vector<4x1xf32>
    %267 = arith.mulf %258, %258 : vector<4x512xf32>
    %cst_140 = arith.constant dense<0.000000e+00> : vector<4xf32>
    %268 = vector.multi_reduction <add>, %267, %cst_140 [1] : vector<4x512xf32> to vector<4xf32>
    %269 = vector.shape_cast %268 : vector<4xf32> to vector<4x1xf32>
    %cst_141 = arith.constant 0.001953125 : f32
    %270 = vector.broadcast %cst_141 : f32 to vector<4x1xf32>
    %271 = arith.mulf %269, %270 : vector<4x1xf32>
    %272 = arith.mulf %266, %266 : vector<4x1xf32>
    %273 = arith.subf %271, %272 : vector<4x1xf32>
    %cst_142 = arith.constant 0.000000e+00 : f32
    %274 = vector.broadcast %cst_142 : f32 to vector<4x1xf32>
    %275 = arith.maximumf %273, %274 : vector<4x1xf32>
    %cst_143 = arith.constant 9.99999974E-6 : f32
    %276 = vector.broadcast %cst_143 : f32 to vector<4x1xf32>
    %277 = arith.addf %275, %276 : vector<4x1xf32>
    %278 = math.rsqrt %277 : vector<4x1xf32>
    %279 = arith.mulf %278, %260 : vector<4x1xf32>
    %280 = vector.broadcast %266 : vector<4x1xf32> to vector<4x512xf32>
    %281 = arith.subf %258, %280 : vector<4x512xf32>
    %282 = vector.broadcast %279 : vector<4x1xf32> to vector<4x512xf32>
    %283 = arith.mulf %281, %282 : vector<4x512xf32>
    %284 = vector.broadcast %262 : vector<4x1xf32> to vector<4x512xf32>
    %285 = arith.addf %283, %284 : vector<4x512xf32>
    %cst_144 = arith.constant 0.000000e+00 : f32
    %286 = vector.broadcast %cst_144 : f32 to vector<4x512xf32>
    %287 = arith.maximumf %285, %286 : vector<4x512xf32>
    %c0_145 = arith.constant 0 : index
    %c0_146 = arith.constant 0 : index
    %c0_147 = arith.constant 0 : index
    %288 = vector.load %arg11[%c0_145, %c0_146, %c0_147] : memref<2x8x4xf32, #tpu.memory_space<vmem>>, vector<1x8x4xf32>
    %289 = vector.shape_cast %288 : vector<1x8x4xf32> to vector<8x4xf32>
    %cst_148 = arith.constant dense<0.000000e+00> : vector<8x512xf32>
    %290 = tpu.matmul %289, %0, %cst_148 {dimension_numbers = #tpu.dot_dimension_numbers<[1], [0], [0], [1], [0, 0, 1, 1], [], []>} : vector<8x4xf32>, vector<4x512xf32>, vector<8x512xf32> -> vector<8x512xf32>
    %c1_149 = arith.constant 1 : index
    %c0_150 = arith.constant 0 : index
    %c0_151 = arith.constant 0 : index
    %291 = vector.load %arg11[%c1_149, %c0_150, %c0_151] : memref<2x8x4xf32, #tpu.memory_space<vmem>>, vector<1x8x4xf32>
    %292 = vector.shape_cast %291 : vector<1x8x4xf32> to vector<8x4xf32>
    %cst_152 = arith.constant dense<0.000000e+00> : vector<8x512xf32>
    %293 = tpu.matmul %292, %287, %cst_152 {dimension_numbers = #tpu.dot_dimension_numbers<[1], [0], [0], [1], [0, 0, 1, 1], [], []>} : vector<8x4xf32>, vector<4x512xf32>, vector<8x512xf32> -> vector<8x512xf32>
    %294 = arith.addf %290, %293 : vector<8x512xf32>
    %295 = arith.addf %252, %294 : vector<8x512xf32>
    %c511_i32_153 = arith.constant 511 : i32
    %296 = tpu.dynamic_rotate %295 by %c511_i32_153 dim 1 : vector<8x512xf32>, i32 -> vector<8x512xf32>
    %297 = arith.maximumf %295, %296 : vector<8x512xf32>
    %c496_i32_154 = arith.constant 496 : i32
    %298 = tpu.dynamic_rotate %297 by %c496_i32_154 dim 1 : vector<8x512xf32>, i32 -> vector<8x512xf32>
    %299 = arith.maximumf %297, %298 : vector<8x512xf32>
    %c0_155 = arith.constant 0 : index
    %c0_156 = arith.constant 0 : index
    %300 = vector.load %arg12[%c0_155, %c0_156] : memref<512x128xf32, #tpu.memory_space<vmem>>, vector<512x128xf32>
    %cst_157 = arith.constant dense<0.000000e+00> : vector<8x128xf32>
    %301 = tpu.matmul %299, %300, %cst_157 {dimension_numbers = #tpu.dot_dimension_numbers<[1], [0], [0], [1], [0, 0, 1, 1], [], []>} : vector<8x512xf32>, vector<512x128xf32>, vector<8x128xf32> -> vector<8x128xf32>
    %c0_158 = arith.constant 0 : index
    %c0_159 = arith.constant 0 : index
    %302 = vector.load %arg13[%c0_158, %c0_159] : memref<8x128xf32, #tpu.memory_space<vmem>>, vector<8x128xf32>
    tpu.vector_store %arg13[%c0_158, %c0_159], %301 {strides = array<i32>} : memref<8x128xf32, #tpu.memory_space<vmem>>, vector<8x128xf32>,
    return
  }
  func.func @transform_0(%arg0: i32) -> (i32, i32) {
    %c0_i32 = arith.constant 0 : i32
    %c0_i32_0 = arith.constant 0 : i32
    %c0_i32_1 = arith.constant 0 : i32
    return %c0_i32, %c0_i32_0 : i32, i32
  }
  func.func @transform_1(%arg0: i32) -> (i32, i32, i32) {
    %c0_i32 = arith.constant 0 : i32
    %c0_i32_0 = arith.constant 0 : i32
    %c0_i32_1 = arith.constant 0 : i32
    %c0_i32_2 = arith.constant 0 : i32
    return %c0_i32, %c0_i32_0, %c0_i32_1 : i32, i32, i32
  }
  func.func @transform_2(%arg0: i32) -> (i32, i32, i32) {
    %c0_i32 = arith.constant 0 : i32
    %c0_i32_0 = arith.constant 0 : i32
    %c0_i32_1 = arith.constant 0 : i32
    %c0_i32_2 = arith.constant 0 : i32
    return %c0_i32, %c0_i32_0, %c0_i32_1 : i32, i32, i32
  }
  func.func @transform_3(%arg0: i32) -> (i32, i32) {
    %c0_i32 = arith.constant 0 : i32
    %c0_i32_0 = arith.constant 0 : i32
    %c0_i32_1 = arith.constant 0 : i32
    return %c0_i32, %c0_i32_0 : i32, i32
  }
  func.func @transform_4(%arg0: i32) -> (i32, i32, i32) {
    %c0_i32 = arith.constant 0 : i32
    %c0_i32_0 = arith.constant 0 : i32
    %c0_i32_1 = arith.constant 0 : i32
    %c0_i32_2 = arith.constant 0 : i32
    return %c0_i32, %c0_i32_0, %c0_i32_1 : i32, i32, i32
  }
  func.func @transform_5(%arg0: i32) -> (i32, i32, i32) {
    %c0_i32 = arith.constant 0 : i32
    %c0_i32_0 = arith.constant 0 : i32
    %c0_i32_1 = arith.constant 0 : i32
    %c0_i32_2 = arith.constant 0 : i32
    return %c0_i32, %c0_i32_0, %c0_i32_1 : i32, i32, i32
  }
  func.func @transform_6(%arg0: i32) -> (i32, i32, i32) {
    %c0_i32 = arith.constant 0 : i32
    %c0_i32_0 = arith.constant 0 : i32
    %c0_i32_1 = arith.constant 0 : i32
    %c0_i32_2 = arith.constant 0 : i32
    return %c0_i32, %c0_i32_0, %c0_i32_1 : i32, i32, i32
  }
  func.func @transform_7(%arg0: i32) -> (i32, i32) {
    %c0_i32 = arith.constant 0 : i32
    %c0_i32_0 = arith.constant 0 : i32
    %c0_i32_1 = arith.constant 0 : i32
    return %c0_i32, %c0_i32_0 : i32, i32
  }
  func.func @transform_8(%arg0: i32) -> (i32, i32, i32) {
    %c0_i32 = arith.constant 0 : i32
    %c0_i32_0 = arith.constant 0 : i32
    %c0_i32_1 = arith.constant 0 : i32
    %c0_i32_2 = arith.constant 0 : i32
    return %c0_i32, %c0_i32_0, %c0_i32_1 : i32, i32, i32
  }
  func.func @transform_9(%arg0: i32) -> (i32, i32, i32) {
    %c0_i32 = arith.constant 0 : i32
    %c0_i32_0 = arith.constant 0 : i32
    %c0_i32_1 = arith.constant 0 : i32
    %c0_i32_2 = arith.constant 0 : i32
    return %c0_i32, %c0_i32_0, %c0_i32_1 : i32, i32, i32
  }
  func.func @transform_10(%arg0: i32) -> (i32, i32, i32) {
    %c0_i32 = arith.constant 0 : i32
    %c0_i32_0 = arith.constant 0 : i32
    %c0_i32_1 = arith.constant 0 : i32
    %c0_i32_2 = arith.constant 0 : i32
    return %c0_i32, %c0_i32_0, %c0_i32_1 : i32, i32, i32
  }
  func.func @transform_11(%arg0: i32) -> (i32, i32) {
    %c0_i32 = arith.constant 0 : i32
    %c0_i32_0 = arith.constant 0 : i32
    %c0_i32_1 = arith.constant 0 : i32
    return %c0_i32, %c0_i32_0 : i32, i32
  }
  func.func @transform_12(%arg0: i32) -> (i32, i32) {
    %c0_i32 = arith.constant 0 : i32
    %c0_i32_0 = arith.constant 0 : i32
    %c0_i32_1 = arith.constant 0 : i32
    return %c0_i32, %c0_i32_0 : i32, i32
  }
}

</mosaic_0001>

<llo_original>
// kernel: tpu_custom_call.1
$region0: #{tpu_custom_call.1}
  #allocation0 [shape = 'u32[]', space=smem, size = 0x4, offset = 0x4, fixed_abs, tag = 'smem constant byte address 0x4 - core index']
  #allocation1 [shape = 'u32[144,128]{1,0:T(1,128)}', space=vmem, size = 0x12000, scoped, tag = 'internal scratch']
  %s0 = inlined_call_operand.vmem [shape: f32[4,512], index: 0, kind: input, shape index: {}]
  %s1 = inlined_call_operand.vmem [shape: f32[9,8,4], index: 1, kind: input, shape index: {}]
  %s2 = inlined_call_operand.vmem [shape: f32[3,8,1], index: 2, kind: input, shape index: {}]
  %s3 = inlined_call_operand.vmem [shape: f32[8,8], index: 3, kind: input, shape index: {}]
  %s4 = inlined_call_operand.vmem [shape: f32[3,8,1], index: 4, kind: input, shape index: {}]
  %s5 = inlined_call_operand.vmem [shape: f32[9,8,8], index: 5, kind: input, shape index: {}]
  %s6 = inlined_call_operand.vmem [shape: f32[3,8,1], index: 6, kind: input, shape index: {}]
  %s7 = inlined_call_operand.vmem [shape: f32[4,4], index: 7, kind: input, shape index: {}]
  %s8 = inlined_call_operand.vmem [shape: f32[3,4,1], index: 8, kind: input, shape index: {}]
  %s9 = inlined_call_operand.vmem [shape: f32[9,1,512], index: 9, kind: input, shape index: {}]
  %s10 = inlined_call_operand.vmem [shape: f32[2,8,4], index: 10, kind: input, shape index: {}]
  %s11 = inlined_call_operand.hbm [shape: f32[512,128], index: 11, kind: input, shape index: {}]
  %s12 = inlined_call_operand.hbm [shape: f32[8,128], index: 12, kind: output, shape index: {}]
  %s13 = sld [smem:[#allocation0]]
  $region62: #{tpu_custom_call.1} parent=0
    _
  %s15 = ssub.s32 1, %s13
  %s16 = scalar_select 0, %s15, %s13
  $region1: #{tpu_custom_call.1} parent=0
    #allocation2 [shape = 'u8[262144]{0}', space=vmem, size = 0x40000, scoped, tag = 'input window, operand 11, single buffered']
    #allocation3 [shape = 's32[1]{0}', space=sflag, size = 0x4, scoped, tag = 'scoped memory for tpu_custom_call.1']
    #allocation4 [shape = 's32[1]{0}', space=sflag, size = 0x4, scoped, tag = 'scoped memory for tpu_custom_call.1']
    #allocation5 [shape = 'u8[4096]{0}', space=vmem, size = 0x1000, scoped, tag = 'output window, operand 0, single buffered']
    %17 = vsyncpa [#allocation3], 0
    %18 = vsyncpa [#allocation4], 0
    // Predicated region
    $region2: #{tpu_custom_call.1} parent=1 // pred_check
      _
    $region3: #{tpu_custom_call.1} parent=1 // pred_check_branch
      %20 = sbr.rel (0) target = $region5
    $region4: #{tpu_custom_call.1} parent=1 // pred_region
      _
    $region5: #{tpu_custom_call.1} parent=1 // pred_fallthru
      _
    // Predicated region
    $region6: #{tpu_custom_call.1} parent=1 // pred_check
      _
    $region7: #{tpu_custom_call.1} parent=1 // pred_check_branch
      %22 = sbr.rel (0) target = $region9
    $region8: #{tpu_custom_call.1} parent=1 // pred_region
      _
    $region9: #{tpu_custom_call.1} parent=1 // pred_fallthru
      _
    // Predicated region
    $region10: #{tpu_custom_call.1} parent=1 // pred_check
      _
    $region11: #{tpu_custom_call.1} parent=1 // pred_check_branch
      %24 = sbr.rel (0) target = $region13
    $region12: #{tpu_custom_call.1} parent=1 // pred_region
      _
    $region13: #{tpu_custom_call.1} parent=1 // pred_fallthru
      _
    // Predicated region
    $region14: #{tpu_custom_call.1} parent=1 // pred_check
      _
    $region15: #{tpu_custom_call.1} parent=1 // pred_check_branch
      %26 = sbr.rel (0) target = $region17
    $region16: #{tpu_custom_call.1} parent=1 // pred_region
      _
    $region17: #{tpu_custom_call.1} parent=1 // pred_fallthru
      _
    // Predicated region
    $region18: #{tpu_custom_call.1} parent=1 // pred_check
      _
    $region19: #{tpu_custom_call.1} parent=1 // pred_check_branch
      %28 = sbr.rel (0) target = $region21
    $region20: #{tpu_custom_call.1} parent=1 // pred_region
      _
    $region21: #{tpu_custom_call.1} parent=1 // pred_fallthru
      _
    // Predicated region
    $region22: #{tpu_custom_call.1} parent=1 // pred_check
      _
    $region23: #{tpu_custom_call.1} parent=1 // pred_check_branch
      %30 = sbr.rel (0) target = $region25
    $region24: #{tpu_custom_call.1} parent=1 // pred_region
      _
    $region25: #{tpu_custom_call.1} parent=1 // pred_fallthru
      _
    // Predicated region
    $region26: #{tpu_custom_call.1} parent=1 // pred_check
      _
    $region27: #{tpu_custom_call.1} parent=1 // pred_check_branch
      %32 = sbr.rel (0) target = $region29
    $region28: #{tpu_custom_call.1} parent=1 // pred_region
      _
    $region29: #{tpu_custom_call.1} parent=1 // pred_fallthru
      _
    // Predicated region
    $region30: #{tpu_custom_call.1} parent=1 // pred_check
      _
    $region31: #{tpu_custom_call.1} parent=1 // pred_check_branch
      %34 = sbr.rel (0) target = $region33
    $region32: #{tpu_custom_call.1} parent=1 // pred_region
      _
    $region33: #{tpu_custom_call.1} parent=1 // pred_fallthru
      _
    // Predicated region
    $region34: #{tpu_custom_call.1} parent=1 // pred_check
      _
    $region35: #{tpu_custom_call.1} parent=1 // pred_check_branch
      %36 = sbr.rel (0) target = $region37
    $region36: #{tpu_custom_call.1} parent=1 // pred_region
      _
    $region37: #{tpu_custom_call.1} parent=1 // pred_fallthru
      _
    // Predicated region
    $region38: #{tpu_custom_call.1} parent=1 // pred_check
      _
    $region39: #{tpu_custom_call.1} parent=1 // pred_check_branch
      %38 = sbr.rel (0) target = $region41
    $region40: #{tpu_custom_call.1} parent=1 // pred_region
      _
    $region41: #{tpu_custom_call.1} parent=1 // pred_fallthru
      _
    // Predicated region
    $region42: #{tpu_custom_call.1} parent=1 // pred_check
      _
    $region43: #{tpu_custom_call.1} parent=1 // pred_check_branch
      %40 = sbr.rel (0) target = $region45
    $region44: #{tpu_custom_call.1} parent=1 // pred_region
      _
    $region45: #{tpu_custom_call.1} parent=1 // pred_fallthru
      _
    // Predicated region
    $region46: #{tpu_custom_call.1} parent=1 // pred_check
      _
    $region47: #{tpu_custom_call.1} parent=1 // pred_check_branch
      %42 = sbr.rel (0) target = $region49
    $region48: #{tpu_custom_call.1} parent=1 // pred_region
      %s44 = ssub.s32 8192, 8192
      %45 = vsyncadd [#allocation3], %s44
      %s46 = sshll.u32 [#allocation2], 4
      %s47 = int_to_ptr.vmem [resolvable:$true] %s46
      %52 = dma.hbm_to_vmem [thread:$0]  %s11, 8192, %s47, [#allocation3], 128, 128, 8
    $region49: #{tpu_custom_call.1} parent=1 // pred_fallthru
      _
    // Predicated region
    $region50: #{tpu_custom_call.1} parent=1 // pred_check
      _
    $region51: #{tpu_custom_call.1} parent=1 // pred_check_branch
      %54 = sbr.rel (0) target = $region53
    $region52: #{tpu_custom_call.1} parent=1 // pred_region
      %55 = dma.done [#allocation3], 8192
    $region53: #{tpu_custom_call.1} parent=1 // pred_fallthru
      _
    %v56 = vld [vmem:[%s0] sm:$0xff]
    %v57 = vld [vmem:[%s0 + $0x8] sm:$0xff]
    %v58 = vld [vmem:[%s9] sm:$0xf]
    %v59 = vld [vmem:[%s9 + $0x4] sm:$0xf]
    %v60 = vld [vmem:[%s9 + $0x8] sm:$0xf]
    %v61 = vld [vmem:[%s9 + $0xc] sm:$0xf]
    %v62 = vld [vmem:[%s9 + $0x14] sm:$0xf]
    %v63 = vld [vmem:[%s9 + $0x18] sm:$0xf]
    %v64 = vld [vmem:[%s9 + $0x1c] sm:$0xf]
    %v65 = vld [vmem:[%s9 + $0x20] sm:$0xf]
    %s66 = scalar_lea.vmem %s1, 32
    %v67 = vld [vmem:[%s66] sm:$0xff]
    %v70 = vcombine.high %v56, %v56
    %v71 = vcombine.high %v57, %v57
    %74 = vrot.lane.b32.xlu0 %v56, 17
    %v75 = vpop.permute.xlu0 %74
    %76 = vrot.lane.b32.xlu0 %v70, 17
    %v77 = vpop.permute.xlu0 %76
    %78 = vrot.lane.b32.xlu0 %v57, 17
    %v79 = vpop.permute.xlu0 %78
    %80 = vrot.lane.b32.xlu0 %v71, 17
    %v81 = vpop.permute.xlu0 %80
    %v82 = vlaneseq
    %v83 = vand.u32 %v82, 127
    %vm84 = vcmp.lt.s32.totalorder %v83, 17
    %v85 = vsel %vm84, %v79, %v81
    %v86 = vsel %vm84, %v77, %v79
    %v87 = vsel %vm84, %v75, %v77
    %v88 = vsel %vm84, %v81, %v75
    %v90 = vlaneseq
    %v91 = vshrl.u32 %v90, 7
    %v92 = vsub.s32 0, %v91
    %v93 = vrot.slane %v58, %v92
    %v94 = vlaneseq
    %v95 = vshrl.u32 %v94, 7
    %v96 = vsub.s32 1, %v95
    %v97 = vrot.slane %v58, %v96
    %v98 = vlaneseq
    %v99 = vshrl.u32 %v98, 7
    %v100 = vsub.s32 2, %v99
    %v101 = vrot.slane %v58, %v100
    %v102 = vlaneseq
    %v103 = vshrl.u32 %v102, 7
    %v104 = vsub.s32 3, %v103
    %v105 = vrot.slane %v58, %v104
    %v110 = vmul.f32 %v88, %v93
    %v111 = vmul.f32 %v87, %v97
    %v112 = vmul.f32 %v86, %v101
    %v113 = vmul.f32 %v85, %v105
    %v114 = vld [vmem:[%s1] sm:$0xff]
    %vm115 = vcmask 31744
    %v117 = vsel %vm115, %v114, 0
    %vm119 = vcmask 1043456
    %v121 = vsel %vm119, %v110, 0
    %v124 = vsel %vm119, %v111, 0
    %v127 = vsel %vm119, %v112, 0
    %v130 = vsel %vm119, %v113, 0
    %132 = vmatprep.subr.mxu0 %v124
    %133 = vmatpush1.msra.mxu0 %v121
    %134 = vmatprep.subr.mxu0 0.0
    %135 = vmatpush1.msra.mxu0 0.0
    %136 = vmatprep.subr.mxu0 0.0
    %137 = vmatpush1.msra.mxu0 0.0
    %138 = vmatprep.subr.mxu0 0.0
    %139 = vmatpush1.msra.mxu0 0.0
    %140 = vmatprep.subr.mxu0 0.0
    %141 = vmatpush1.msra.mxu0 0.0
    %142 = vmatprep.subr.mxu0 0.0
    %143 = vmatpush1.msra.mxu0 0.0
    %144 = vmatprep.subr.mxu0 0.0
    %145 = vmatpush1.msra.mxu0 0.0
    %146 = vmatprep.subr.mxu0 0.0
    %147 = vmatpush1.msra.mxu0 0.0
    %148 = vmatprep.subr.mxu0 0.0
    %149 = vmatpush1.msra.mxu0 0.0
    %150 = vmatprep.subr.mxu0 0.0
    %151 = vmatpush1.msra.mxu0 0.0
    %152 = vmatprep.subr.mxu0 0.0
    %153 = vmatpush1.msra.mxu0 0.0
    %154 = vmatprep.subr.mxu0 0.0
    %155 = vmatpush1.msra.mxu0 0.0
    %156 = vmatprep.subr.mxu0 0.0
    %157 = vmatpush1.msra.mxu0 0.0
    %158 = vmatprep.subr.mxu0 0.0
    %159 = vmatpush1.msra.mxu0 0.0
    %160 = vmatprep.subr.mxu0 0.0
    %161 = vmatpush1.msra.mxu0 0.0
    %162 = vmatprep.subr.mxu0 0.0
    %163 = vmatpush1.msra.mxu0 0.0
    %164 = vmatprep.subr.mxu0 0.0
    %165 = vmatpush1.msra.mxu0 0.0
    %166 = vmatprep.subr.mxu0 0.0
    %167 = vmatpush1.msra.mxu0 0.0
    %168 = vmatprep.subr.mxu0 0.0
    %169 = vmatpush1.msra.mxu0 0.0
    %170 = vmatprep.subr.mxu0 0.0
    %171 = vmatpush1.msra.mxu0 0.0
    %172 = vmatprep.subr.mxu0 0.0
    %173 = vmatpush1.msra.mxu0 0.0
    %174 = vmatprep.subr.mxu0 0.0
    %175 = vmatpush1.msra.mxu0 0.0
    %176 = vmatprep.subr.mxu0 0.0
    %177 = vmatpush1.msra.mxu0 0.0
    %178 = vmatprep.subr.mxu0 0.0
    %179 = vmatpush1.msra.mxu0 0.0
    %180 = vmatprep.subr.mxu0 0.0
    %181 = vmatpush1.msra.mxu0 0.0
    %182 = vmatprep.subr.mxu0 0.0
    %183 = vmatpush1.msra.mxu0 0.0
    %184 = vmatprep.subr.mxu0 0.0
    %185 = vmatpush1.msra.mxu0 0.0
    %186 = vmatprep.subr.mxu0 0.0
    %187 = vmatpush1.msra.mxu0 0.0
    %188 = vmatprep.subr.mxu0 0.0
    %189 = vmatpush1.msra.mxu0 0.0
    %190 = vmatprep.subr.mxu0 0.0
    %191 = vmatpush1.msra.mxu0 0.0
    %192 = vmatprep.subr.mxu0 0.0
    %193 = vmatpush1.msra.mxu0 0.0
    %194 = vmatprep.subr.mxu0 0.0
    %195 = vmatpush1.msra.mxu0 0.0
    %196 = vmatprep.mubr.f32.mxu0 0.0
    %197 = vmatmul.mubr.f32.gmra.mrb[0].mxu0 %v117
    %v198 = vpop.f32.mrb[0].mxu0
    %v199 = vadd.f32 0.0, %v198
    %v200 = vpop.f32.mrb[0].mxu0
    %v201 = vadd.f32 0.0, %v200
    %202 = vdwg.mxu0
    %203 = vmatprep.subr.mxu0 %v130
    %204 = vmatpush1.msra.mxu0 %v127
    %205 = vmatprep.subr.mxu0 0.0
    %206 = vmatpush1.msra.mxu0 0.0
    %207 = vmatprep.subr.mxu0 0.0
    %208 = vmatpush1.msra.mxu0 0.0
    %209 = vmatprep.subr.mxu0 0.0
    %210 = vmatpush1.msra.mxu0 0.0
    %211 = vmatprep.subr.mxu0 0.0
    %212 = vmatpush1.msra.mxu0 0.0
    %213 = vmatprep.subr.mxu0 0.0
    %214 = vmatpush1.msra.mxu0 0.0
    %215 = vmatprep.subr.mxu0 0.0
    %216 = vmatpush1.msra.mxu0 0.0
    %217 = vmatprep.subr.mxu0 0.0
    %218 = vmatpush1.msra.mxu0 0.0
    %219 = vmatprep.subr.mxu0 0.0
    %220 = vmatpush1.msra.mxu0 0.0
    %221 = vmatprep.subr.mxu0 0.0
    %222 = vmatpush1.msra.mxu0 0.0
    %223 = vmatprep.subr.mxu0 0.0
    %224 = vmatpush1.msra.mxu0 0.0
    %225 = vmatprep.subr.mxu0 0.0
    %226 = vmatpush1.msra.mxu0 0.0
    %227 = vmatprep.subr.mxu0 0.0
    %228 = vmatpush1.msra.mxu0 0.0
    %229 = vmatprep.subr.mxu0 0.0
    %230 = vmatpush1.msra.mxu0 0.0
    %231 = vmatprep.subr.mxu0 0.0
    %232 = vmatpush1.msra.mxu0 0.0
    %233 = vmatprep.subr.mxu0 0.0
    %234 = vmatpush1.msra.mxu0 0.0
    %235 = vmatprep.subr.mxu0 0.0
    %236 = vmatpush1.msra.mxu0 0.0
    %237 = vmatprep.subr.mxu0 0.0
    %238 = vmatpush1.msra.mxu0 0.0
    %239 = vmatprep.subr.mxu0 0.0
    %240 = vmatpush1.msra.mxu0 0.0
    %241 = vmatprep.subr.mxu0 0.0
    %242 = vmatpush1.msra.mxu0 0.0
    %243 = vmatprep.subr.mxu0 0.0
    %244 = vmatpush1.msra.mxu0 0.0
    %245 = vmatprep.subr.mxu0 0.0
    %246 = vmatpush1.msra.mxu0 0.0
    %247 = vmatprep.subr.mxu0 0.0
    %248 = vmatpush1.msra.mxu0 0.0
    %249 = vmatprep.subr.mxu0 0.0
    %250 = vmatpush1.msra.mxu0 0.0
    %251 = vmatprep.subr.mxu0 0.0
    %252 = vmatpush1.msra.mxu0 0.0
    %253 = vmatprep.subr.mxu0 0.0
    %254 = vmatpush1.msra.mxu0 0.0
    %255 = vmatprep.subr.mxu0 0.0
    %256 = vmatpush1.msra.mxu0 0.0
    %257 = vmatprep.subr.mxu0 0.0
    %258 = vmatpush1.msra.mxu0 0.0
    %259 = vmatprep.subr.mxu0 0.0
    %260 = vmatpush1.msra.mxu0 0.0
    %261 = vmatprep.subr.mxu0 0.0
    %262 = vmatpush1.msra.mxu0 0.0
    %263 = vmatprep.subr.mxu0 0.0
    %264 = vmatpush1.msra.mxu0 0.0
    %265 = vmatprep.subr.mxu0 0.0
    %266 = vmatpush1.msra.mxu0 0.0
    %267 = vmatprep.mubr.f32.mxu0 0.0
    %268 = vmatmul.mubr.f32.gmra.mrb[0].mxu0 %v117
    %v269 = vpop.f32.mrb[0].mxu0
    %v270 = vadd.f32 0.0, %v269
    %v271 = vpop.f32.mrb[0].mxu0
    %v272 = vadd.f32 0.0, %v271
    %273 = vdwg.mxu0
    %v275 = vsel %vm115, %v67, 0
    %v277 = vsel %vm119, %v56, 0
    %v279 = vsel %vm119, %v70, 0
    %v281 = vsel %vm119, %v57, 0
    %v283 = vsel %vm119, %v71, 0
    %285 = vmatprep.subr.mxu0 %v279
    %286 = vmatpush1.msra.mxu0 %v277
    %287 = vmatprep.subr.mxu0 0.0
    %288 = vmatpush1.msra.mxu0 0.0
    %289 = vmatprep.subr.mxu0 0.0
    %290 = vmatpush1.msra.mxu0 0.0
    %291 = vmatprep.subr.mxu0 0.0
    %292 = vmatpush1.msra.mxu0 0.0
    %293 = vmatprep.subr.mxu0 0.0
    %294 = vmatpush1.msra.mxu0 0.0
    %295 = vmatprep.subr.mxu0 0.0
    %296 = vmatpush1.msra.mxu0 0.0
    %297 = vmatprep.subr.mxu0 0.0
    %298 = vmatpush1.msra.mxu0 0.0
    %299 = vmatprep.subr.mxu0 0.0
    %300 = vmatpush1.msra.mxu0 0.0
    %301 = vmatprep.subr.mxu0 0.0
    %302 = vmatpush1.msra.mxu0 0.0
    %303 = vmatprep.subr.mxu0 0.0
    %304 = vmatpush1.msra.mxu0 0.0
    %305 = vmatprep.subr.mxu0 0.0
    %306 = vmatpush1.msra.mxu0 0.0
    %307 = vmatprep.subr.mxu0 0.0
    %308 = vmatpush1.msra.mxu0 0.0
    %309 = vmatprep.subr.mxu0 0.0
    %310 = vmatpush1.msra.mxu0 0.0
    %311 = vmatprep.subr.mxu0 0.0
    %312 = vmatpush1.msra.mxu0 0.0
    %313 = vmatprep.subr.mxu0 0.0
    %314 = vmatpush1.msra.mxu0 0.0
    %315 = vmatprep.subr.mxu0 0.0
    %316 = vmatpush1.msra.mxu0 0.0
    %317 = vmatprep.subr.mxu0 0.0
    %318 = vmatpush1.msra.mxu0 0.0
    %319 = vmatprep.subr.mxu0 0.0
    %320 = vmatpush1.msra.mxu0 0.0
    %321 = vmatprep.subr.mxu0 0.0
    %322 = vmatpush1.msra.mxu0 0.0
    %323 = vmatprep.subr.mxu0 0.0
    %324 = vmatpush1.msra.mxu0 0.0
    %325 = vmatprep.subr.mxu0 0.0
    %326 = vmatpush1.msra.mxu0 0.0
    %327 = vmatprep.subr.mxu0 0.0
    %328 = vmatpush1.msra.mxu0 0.0
    %329 = vmatprep.subr.mxu0 0.0
    %330 = vmatpush1.msra.mxu0 0.0
    %331 = vmatprep.subr.mxu0 0.0
    %332 = vmatpush1.msra.mxu0 0.0
    %333 = vmatprep.subr.mxu0 0.0
    %334 = vmatpush1.msra.mxu0 0.0
    %335 = vmatprep.subr.mxu0 0.0
    %336 = vmatpush1.msra.mxu0 0.0
    %337 = vmatprep.subr.mxu0 0.0
    %338 = vmatpush1.msra.mxu0 0.0
    %339 = vmatprep.subr.mxu0 0.0
    %340 = vmatpush1.msra.mxu0 0.0
    %341 = vmatprep.subr.mxu0 0.0
    %342 = vmatpush1.msra.mxu0 0.0
    %343 = vmatprep.subr.mxu0 0.0
    %344 = vmatpush1.msra.mxu0 0.0
    %345 = vmatprep.subr.mxu0 0.0
    %346 = vmatpush1.msra.mxu0 0.0
    %347 = vmatprep.subr.mxu0 0.0
    %348 = vmatpush1.msra.mxu0 0.0
    %349 = vmatprep.mubr.f32.mxu0 0.0
    %350 = vmatmul.mubr.f32.gmra.mrb[0].mxu0 %v275
    %v351 = vpop.f32.mrb[0].mxu0
    %v352 = vadd.f32 %v199, %v351
    %v353 = vpop.f32.mrb[0].mxu0
    %v354 = vadd.f32 %v201, %v353
    %355 = vdwg.mxu0
    %356 = vmatprep.subr.mxu0 %v283
    %357 = vmatpush1.msra.mxu0 %v281
    %358 = vmatprep.subr.mxu0 0.0
    %359 = vmatpush1.msra.mxu0 0.0
    %360 = vmatprep.subr.mxu0 0.0
    %361 = vmatpush1.msra.mxu0 0.0
    %362 = vmatprep.subr.mxu0 0.0
    %363 = vmatpush1.msra.mxu0 0.0
    %364 = vmatprep.subr.mxu0 0.0
    %365 = vmatpush1.msra.mxu0 0.0
    %366 = vmatprep.subr.mxu0 0.0
    %367 = vmatpush1.msra.mxu0 0.0
    %368 = vmatprep.subr.mxu0 0.0
    %369 = vmatpush1.msra.mxu0 0.0
    %370 = vmatprep.subr.mxu0 0.0
    %371 = vmatpush1.msra.mxu0 0.0
    %372 = vmatprep.subr.mxu0 0.0
    %373 = vmatpush1.msra.mxu0 0.0
    %374 = vmatprep.subr.mxu0 0.0
    %375 = vmatpush1.msra.mxu0 0.0
    %376 = vmatprep.subr.mxu0 0.0
    %377 = vmatpush1.msra.mxu0 0.0
    %378 = vmatprep.subr.mxu0 0.0
    %379 = vmatpush1.msra.mxu0 0.0
    %380 = vmatprep.subr.mxu0 0.0
    %381 = vmatpush1.msra.mxu0 0.0
    %382 = vmatprep.subr.mxu0 0.0
    %383 = vmatpush1.msra.mxu0 0.0
    %384 = vmatprep.subr.mxu0 0.0
    %385 = vmatpush1.msra.mxu0 0.0
    %386 = vmatprep.subr.mxu0 0.0
    %387 = vmatpush1.msra.mxu0 0.0
    %388 = vmatprep.subr.mxu0 0.0
    %389 = vmatpush1.msra.mxu0 0.0
    %390 = vmatprep.subr.mxu0 0.0
    %391 = vmatpush1.msra.mxu0 0.0
    %392 = vmatprep.subr.mxu0 0.0
    %393 = vmatpush1.msra.mxu0 0.0
    %394 = vmatprep.subr.mxu0 0.0
    %395 = vmatpush1.msra.mxu0 0.0
    %396 = vmatprep.subr.mxu0 0.0
    %397 = vmatpush1.msra.mxu0 0.0
    %398 = vmatprep.subr.mxu0 0.0
    %399 = vmatpush1.msra.mxu0 0.0
    %400 = vmatprep.subr.mxu0 0.0
    %401 = vmatpush1.msra.mxu0 0.0
    %402 = vmatprep.subr.mxu0 0.0
    %403 = vmatpush1.msra.mxu0 0.0
    %404 = vmatprep.subr.mxu0 0.0
    %405 = vmatpush1.msra.mxu0 0.0
    %406 = vmatprep.subr.mxu0 0.0
    %407 = vmatpush1.msra.mxu0 0.0
    %408 = vmatprep.subr.mxu0 0.0
    %409 = vmatpush1.msra.mxu0 0.0
    %410 = vmatprep.subr.mxu0 0.0
    %411 = vmatpush1.msra.mxu0 0.0
    %412 = vmatprep.subr.mxu0 0.0
    %413 = vmatpush1.msra.mxu0 0.0
    %414 = vmatprep.subr.mxu0 0.0
    %415 = vmatpush1.msra.mxu0 0.0
    %416 = vmatprep.subr.mxu0 0.0
    %417 = vmatpush1.msra.mxu0 0.0
    %418 = vmatprep.subr.mxu0 0.0
    %419 = vmatpush1.msra.mxu0 0.0
    %420 = vmatprep.mubr.f32.mxu0 0.0
    %421 = vmatmul.mubr.f32.gmra.mrb[0].mxu0 %v275
    %v422 = vpop.f32.mrb[0].mxu0
    %v423 = vadd.f32 %v270, %v422
    %v424 = vpop.f32.mrb[0].mxu0
    %v425 = vadd.f32 %v272, %v424
    %426 = vdwg.mxu0
    %427 = vrot.lane.b32.xlu0 %v56, 16
    %v428 = vpop.permute.xlu0 %427
    %429 = vrot.lane.b32.xlu0 %v70, 16
    %v430 = vpop.permute.xlu0 %429
    %431 = vrot.lane.b32.xlu0 %v57, 16
    %v432 = vpop.permute.xlu0 %431
    %433 = vrot.lane.b32.xlu0 %v71, 16
    %v434 = vpop.permute.xlu0 %433
    %vm435 = vcmp.lt.s32.totalorder %v83, 16
    %v436 = vsel %vm435, %v432, %v434
    %v437 = vsel %vm435, %v430, %v432
    %v438 = vsel %vm435, %v428, %v430
    %v439 = vsel %vm435, %v434, %v428
    %v441 = vlaneseq
    %v442 = vshrl.u32 %v441, 7
    %v443 = vsub.s32 0, %v442
    %v444 = vrot.slane %v59, %v443
    %v445 = vlaneseq
    %v446 = vshrl.u32 %v445, 7
    %v447 = vsub.s32 1, %v446
    %v448 = vrot.slane %v59, %v447
    %v449 = vlaneseq
    %v450 = vshrl.u32 %v449, 7
    %v451 = vsub.s32 2, %v450
    %v452 = vrot.slane %v59, %v451
    %v453 = vlaneseq
    %v454 = vshrl.u32 %v453, 7
    %v455 = vsub.s32 3, %v454
    %v456 = vrot.slane %v59, %v455
    %v461 = vmul.f32 %v439, %v444
    %v462 = vmul.f32 %v438, %v448
    %v463 = vmul.f32 %v437, %v452
    %v464 = vmul.f32 %v436, %v456
    %s465 = scalar_lea.vmem %s1, 8
    %v466 = vld [vmem:[%s465] sm:$0xff]
    %v468 = vsel %vm115, %v466, 0
    %v471 = vsel %vm119, %v461, 0
    %v474 = vsel %vm119, %v462, 0
    %v477 = vsel %vm119, %v463, 0
    %v480 = vsel %vm119, %v464, 0
    %482 = vmatprep.subr.mxu0 %v474
    %483 = vmatpush1.msra.mxu0 %v471
    %484 = vmatprep.subr.mxu0 0.0
    %485 = vmatpush1.msra.mxu0 0.0
    %486 = vmatprep.subr.mxu0 0.0
    %487 = vmatpush1.msra.mxu0 0.0
    %488 = vmatprep.subr.mxu0 0.0
    %489 = vmatpush1.msra.mxu0 0.0
    %490 = vmatprep.subr.mxu0 0.0
    %491 = vmatpush1.msra.mxu0 0.0
    %492 = vmatprep.subr.mxu0 0.0
    %493 = vmatpush1.msra.mxu0 0.0
    %494 = vmatprep.subr.mxu0 0.0
    %495 = vmatpush1.msra.mxu0 0.0
    %496 = vmatprep.subr.mxu0 0.0
    %497 = vmatpush1.msra.mxu0 0.0
    %498 = vmatprep.subr.mxu0 0.0
    %499 = vmatpush1.msra.mxu0 0.0
    %500 = vmatprep.subr.mxu0 0.0
    %501 = vmatpush1.msra.mxu0 0.0
    %502 = vmatprep.subr.mxu0 0.0
    %503 = vmatpush1.msra.mxu0 0.0
    %504 = vmatprep.subr.mxu0 0.0
    %505 = vmatpush1.msra.mxu0 0.0
    %506 = vmatprep.subr.mxu0 0.0
    %507 = vmatpush1.msra.mxu0 0.0
    %508 = vmatprep.subr.mxu0 0.0
    %509 = vmatpush1.msra.mxu0 0.0
    %510 = vmatprep.subr.mxu0 0.0
    %511 = vmatpush1.msra.mxu0 0.0
    %512 = vmatprep.subr.mxu0 0.0
    %513 = vmatpush1.msra.mxu0 0.0
    %514 = vmatprep.subr.mxu0 0.0
    %515 = vmatpush1.msra.mxu0 0.0
    %516 = vmatprep.subr.mxu0 0.0
    %517 = vmatpush1.msra.mxu0 0.0
    %518 = vmatprep.subr.mxu0 0.0
    %519 = vmatpush1.msra.mxu0 0.0
    %520 = vmatprep.subr.mxu0 0.0
    %521 = vmatpush1.msra.mxu0 0.0
    %522 = vmatprep.subr.mxu0 0.0
    %523 = vmatpush1.msra.mxu0 0.0
    %524 = vmatprep.subr.mxu0 0.0
    %525 = vmatpush1.msra.mxu0 0.0
    %526 = vmatprep.subr.mxu0 0.0
    %527 = vmatpush1.msra.mxu0 0.0
    %528 = vmatprep.subr.mxu0 0.0
    %529 = vmatpush1.msra.mxu0 0.0
    %530 = vmatprep.subr.mxu0 0.0
    %531 = vmatpush1.msra.mxu0 0.0
    %532 = vmatprep.subr.mxu0 0.0
    %533 = vmatpush1.msra.mxu0 0.0
    %534 = vmatprep.subr.mxu0 0.0
    %535 = vmatpush1.msra.mxu0 0.0
    %536 = vmatprep.subr.mxu0 0.0
    %537 = vmatpush1.msra.mxu0 0.0
    %538 = vmatprep.subr.mxu0 0.0
    %539 = vmatpush1.msra.mxu0 0.0
    %540 = vmatprep.subr.mxu0 0.0
    %541 = vmatpush1.msra.mxu0 0.0
    %542 = vmatprep.subr.mxu0 0.0
    %543 = vmatpush1.msra.mxu0 0.0
    %544 = vmatprep.subr.mxu0 0.0
    %545 = vmatpush1.msra.mxu0 0.0
    %546 = vmatprep.mubr.f32.mxu0 0.0
    %547 = vmatmul.mubr.f32.gmra.mrb[0].mxu0 %v468
    %v548 = vpop.f32.mrb[0].mxu0
    %v549 = vadd.f32 0.0, %v548
    %v550 = vpop.f32.mrb[0].mxu0
    %v551 = vadd.f32 0.0, %v550
    %552 = vdwg.mxu0
    %553 = vmatprep.subr.mxu0 %v480
    %554 = vmatpush1.msra.mxu0 %v477
    %555 = vmatprep.subr.mxu0 0.0
    %556 = vmatpush1.msra.mxu0 0.0
    %557 = vmatprep.subr.mxu0 0.0
    %558 = vmatpush1.msra.mxu0 0.0
    %559 = vmatprep.subr.mxu0 0.0
    %560 = vmatpush1.msra.mxu0 0.0
    %561 = vmatprep.subr.mxu0 0.0
    %562 = vmatpush1.msra.mxu0 0.0
    %563 = vmatprep.subr.mxu0 0.0
    %564 = vmatpush1.msra.mxu0 0.0
    %565 = vmatprep.subr.mxu0 0.0
    %566 = vmatpush1.msra.mxu0 0.0
    %567 = vmatprep.subr.mxu0 0.0
    %568 = vmatpush1.msra.mxu0 0.0
    %569 = vmatprep.subr.mxu0 0.0
    %570 = vmatpush1.msra.mxu0 0.0
    %571 = vmatprep.subr.mxu0 0.0
    %572 = vmatpush1.msra.mxu0 0.0
    %573 = vmatprep.subr.mxu0 0.0
    %574 = vmatpush1.msra.mxu0 0.0
    %575 = vmatprep.subr.mxu0 0.0
    %576 = vmatpush1.msra.mxu0 0.0
    %577 = vmatprep.subr.mxu0 0.0
    %578 = vmatpush1.msra.mxu0 0.0
    %579 = vmatprep.subr.mxu0 0.0
    %580 = vmatpush1.msra.mxu0 0.0
    %581 = vmatprep.subr.mxu0 0.0
    %582 = vmatpush1.msra.mxu0 0.0
    %583 = vmatprep.subr.mxu0 0.0
    %584 = vmatpush1.msra.mxu0 0.0
    %585 = vmatprep.subr.mxu0 0.0
    %586 = vmatpush1.msra.mxu0 0.0
    %587 = vmatprep.subr.mxu0 0.0
    %588 = vmatpush1.msra.mxu0 0.0
    %589 = vmatprep.subr.mxu0 0.0
    %590 = vmatpush1.msra.mxu0 0.0
    %591 = vmatprep.subr.mxu0 0.0
    %592 = vmatpush1.msra.mxu0 0.0
    %593 = vmatprep.subr.mxu0 0.0
    %594 = vmatpush1.msra.mxu0 0.0
    %595 = vmatprep.subr.mxu0 0.0
    %596 = vmatpush1.msra.mxu0 0.0
    %597 = vmatprep.subr.mxu0 0.0
    %598 = vmatpush1.msra.mxu0 0.0
    %599 = vmatprep.subr.mxu0 0.0
    %600 = vmatpush1.msra.mxu0 0.0
    %601 = vmatprep.subr.mxu0 0.0
    %602 = vmatpush1.msra.mxu0 0.0
    %603 = vmatprep.subr.mxu0 0.0
    %604 = vmatpush1.msra.mxu0 0.0
    %605 = vmatprep.subr.mxu0 0.0
    %606 = vmatpush1.msra.mxu0 0.0
    %607 = vmatprep.subr.mxu0 0.0
    %608 = vmatpush1.msra.mxu0 0.0
    %609 = vmatprep.subr.mxu0 0.0
    %610 = vmatpush1.msra.mxu0 0.0
    %611 = vmatprep.subr.mxu0 0.0
    %612 = vmatpush1.msra.mxu0 0.0
    %613 = vmatprep.subr.mxu0 0.0
    %614 = vmatpush1.msra.mxu0 0.0
    %615 = vmatprep.subr.mxu0 0.0
    %616 = vmatpush1.msra.mxu0 0.0
    %617 = vmatprep.mubr.f32.mxu0 0.0
    %618 = vmatmul.mubr.f32.gmra.mrb[0].mxu0 %v468
    %v619 = vpop.f32.mrb[0].mxu0
    %v620 = vadd.f32 0.0, %v619
    %v621 = vpop.f32.mrb[0].mxu0
    %v622 = vadd.f32 0.0, %v621
    %623 = vdwg.mxu0
    %v624 = vadd.f32 %v352, %v549
    %v625 = vadd.f32 %v354, %v551
    %v626 = vadd.f32 %v423, %v620
    %v627 = vadd.f32 %v425, %v622
    %628 = vrot.lane.b32.xlu0 %v56, 15
    %v629 = vpop.permute.xlu0 %628
    %630 = vrot.lane.b32.xlu0 %v70, 15
    %v631 = vpop.permute.xlu0 %630
    %632 = vrot.lane.b32.xlu0 %v57, 15
    %v633 = vpop.permute.xlu0 %632
    %634 = vrot.lane.b32.xlu0 %v71, 15
    %v635 = vpop.permute.xlu0 %634
    %vm636 = vcmp.lt.s32.totalorder %v83, 15
    %v637 = vsel %vm636, %v633, %v635
    %v638 = vsel %vm636, %v631, %v633
    %v639 = vsel %vm636, %v629, %v631
    %v640 = vsel %vm636, %v635, %v629
    %v642 = vlaneseq
    %v643 = vshrl.u32 %v642, 7
    %v644 = vsub.s32 0, %v643
    %v645 = vrot.slane %v60, %v644
    %v646 = vlaneseq
    %v647 = vshrl.u32 %v646, 7
    %v648 = vsub.s32 1, %v647
    %v649 = vrot.slane %v60, %v648
    %v650 = vlaneseq
    %v651 = vshrl.u32 %v650, 7
    %v652 = vsub.s32 2, %v651
    %v653 = vrot.slane %v60, %v652
    %v654 = vlaneseq
    %v655 = vshrl.u32 %v654, 7
    %v656 = vsub.s32 3, %v655
    %v657 = vrot.slane %v60, %v656
    %v662 = vmul.f32 %v640, %v645
    %v663 = vmul.f32 %v639, %v649
    %v664 = vmul.f32 %v638, %v653
    %v665 = vmul.f32 %v637, %v657
    %s666 = scalar_lea.vmem %s1, 16
    %v667 = vld [vmem:[%s666] sm:$0xff]
    %v669 = vsel %vm115, %v667, 0
    %v672 = vsel %vm119, %v662, 0
    %v675 = vsel %vm119, %v663, 0
    %v678 = vsel %vm119, %v664, 0
    %v681 = vsel %vm119, %v665, 0
    %683 = vmatprep.subr.mxu0 %v675
    %684 = vmatpush1.msra.mxu0 %v672
    %685 = vmatprep.subr.mxu0 0.0
    %686 = vmatpush1.msra.mxu0 0.0
    %687 = vmatprep.subr.mxu0 0.0
    %688 = vmatpush1.msra.mxu0 0.0
    %689 = vmatprep.subr.mxu0 0.0
    %690 = vmatpush1.msra.mxu0 0.0
    %691 = vmatprep.subr.mxu0 0.0
    %692 = vmatpush1.msra.mxu0 0.0
    %693 = vmatprep.subr.mxu0 0.0
    %694 = vmatpush1.msra.mxu0 0.0
    %695 = vmatprep.subr.mxu0 0.0
    %696 = vmatpush1.msra.mxu0 0.0
    %697 = vmatprep.subr.mxu0 0.0
    %698 = vmatpush1.msra.mxu0 0.0
    %699 = vmatprep.subr.mxu0 0.0
    %700 = vmatpush1.msra.mxu0 0.0
    %701 = vmatprep.subr.mxu0 0.0
    %702 = vmatpush1.msra.mxu0 0.0
    %703 = vmatprep.subr.mxu0 0.0
    %704 = vmatpush1.msra.mxu0 0.0
    %705 = vmatprep.subr.mxu0 0.0
    %706 = vmatpush1.msra.mxu0 0.0
    %707 = vmatprep.subr.mxu0 0.0
    %708 = vmatpush1.msra.mxu0 0.0
    %709 = vmatprep.subr.mxu0 0.0
    %710 = vmatpush1.msra.mxu0 0.0
    %711 = vmatprep.subr.mxu0 0.0
    %712 = vmatpush1.msra.mxu0 0.0
    %713 = vmatprep.subr.mxu0 0.0
    %714 = vmatpush1.msra.mxu0 0.0
    %715 = vmatprep.subr.mxu0 0.0
    %716 = vmatpush1.msra.mxu0 0.0
    %717 = vmatprep.subr.mxu0 0.0
    %718 = vmatpush1.msra.mxu0 0.0
    %719 = vmatprep.subr.mxu0 0.0
    %720 = vmatpush1.msra.mxu0 0.0
    %721 = vmatprep.subr.mxu0 0.0
    %722 = vmatpush1.msra.mxu0 0.0
    %723 = vmatprep.subr.mxu0 0.0
    %724 = vmatpush1.msra.mxu0 0.0
    %725 = vmatprep.subr.mxu0 0.0
    %726 = vmatpush1.msra.mxu0 0.0
    %727 = vmatprep.subr.mxu0 0.0
    %728 = vmatpush1.msra.mxu0 0.0
    %729 = vmatprep.subr.mxu0 0.0
    %730 = vmatpush1.msra.mxu0 0.0
    %731 = vmatprep.subr.mxu0 0.0
    %732 = vmatpush1.msra.mxu0 0.0
    %733 = vmatprep.subr.mxu0 0.0
    %734 = vmatpush1.msra.mxu0 0.0
    %735 = vmatprep.subr.mxu0 0.0
    %736 = vmatpush1.msra.mxu0 0.0
    %737 = vmatprep.subr.mxu0 0.0
    %738 = vmatpush1.msra.mxu0 0.0
    %739 = vmatprep.subr.mxu0 0.0
    %740 = vmatpush1.msra.mxu0 0.0
    %741 = vmatprep.subr.mxu0 0.0
    %742 = vmatpush1.msra.mxu0 0.0
    %743 = vmatprep.subr.mxu0 0.0
    %744 = vmatpush1.msra.mxu0 0.0
    %745 = vmatprep.subr.mxu0 0.0
    %746 = vmatpush1.msra.mxu0 0.0
    %747 = vmatprep.mubr.f32.mxu0 0.0
    %748 = vmatmul.mubr.f32.gmra.mrb[0].mxu0 %v669
    %v749 = vpop.f32.mrb[0].mxu0
    %v750 = vadd.f32 0.0, %v749
    %v751 = vpop.f32.mrb[0].mxu0
    %v752 = vadd.f32 0.0, %v751
    %753 = vdwg.mxu0
    %754 = vmatprep.subr.mxu0 %v681
    %755 = vmatpush1.msra.mxu0 %v678
    %756 = vmatprep.subr.mxu0 0.0
    %757 = vmatpush1.msra.mxu0 0.0
    %758 = vmatprep.subr.mxu0 0.0
    %759 = vmatpush1.msra.mxu0 0.0
    %760 = vmatprep.subr.mxu0 0.0
    %761 = vmatpush1.msra.mxu0 0.0
    %762 = vmatprep.subr.mxu0 0.0
    %763 = vmatpush1.msra.mxu0 0.0
    %764 = vmatprep.subr.mxu0 0.0
    %765 = vmatpush1.msra.mxu0 0.0
    %766 = vmatprep.subr.mxu0 0.0
    %767 = vmatpush1.msra.mxu0 0.0
    %768 = vmatprep.subr.mxu0 0.0
    %769 = vmatpush1.msra.mxu0 0.0
    %770 = vmatprep.subr.mxu0 0.0
    %771 = vmatpush1.msra.mxu0 0.0
    %772 = vmatprep.subr.mxu0 0.0
    %773 = vmatpush1.msra.mxu0 0.0
    %774 = vmatprep.subr.mxu0 0.0
    %775 = vmatpush1.msra.mxu0 0.0
    %776 = vmatprep.subr.mxu0 0.0
    %777 = vmatpush1.msra.mxu0 0.0
    %778 = vmatprep.subr.mxu0 0.0
    %779 = vmatpush1.msra.mxu0 0.0
    %780 = vmatprep.subr.mxu0 0.0
    %781 = vmatpush1.msra.mxu0 0.0
    %782 = vmatprep.subr.mxu0 0.0
    %783 = vmatpush1.msra.mxu0 0.0
    %784 = vmatprep.subr.mxu0 0.0
    %785 = vmatpush1.msra.mxu0 0.0
    %786 = vmatprep.subr.mxu0 0.0
    %787 = vmatpush1.msra.mxu0 0.0
    %788 = vmatprep.subr.mxu0 0.0
    %789 = vmatpush1.msra.mxu0 0.0
    %790 = vmatprep.subr.mxu0 0.0
    %791 = vmatpush1.msra.mxu0 0.0
    %792 = vmatprep.subr.mxu0 0.0
    %793 = vmatpush1.msra.mxu0 0.0
    %794 = vmatprep.subr.mxu0 0.0
    %795 = vmatpush1.msra.mxu0 0.0
    %796 = vmatprep.subr.mxu0 0.0
    %797 = vmatpush1.msra.mxu0 0.0
    %798 = vmatprep.subr.mxu0 0.0
    %799 = vmatpush1.msra.mxu0 0.0
    %800 = vmatprep.subr.mxu0 0.0
    %801 = vmatpush1.msra.mxu0 0.0
    %802 = vmatprep.subr.mxu0 0.0
    %803 = vmatpush1.msra.mxu0 0.0
    %804 = vmatprep.subr.mxu0 0.0
    %805 = vmatpush1.msra.mxu0 0.0
    %806 = vmatprep.subr.mxu0 0.0
    %807 = vmatpush1.msra.mxu0 0.0
    %808 = vmatprep.subr.mxu0 0.0
    %809 = vmatpush1.msra.mxu0 0.0
    %810 = vmatprep.subr.mxu0 0.0
    %811 = vmatpush1.msra.mxu0 0.0
    %812 = vmatprep.subr.mxu0 0.0
    %813 = vmatpush1.msra.mxu0 0.0
    %814 = vmatprep.subr.mxu0 0.0
    %815 = vmatpush1.msra.mxu0 0.0
    %816 = vmatprep.subr.mxu0 0.0
    %817 = vmatpush1.msra.mxu0 0.0
    %818 = vmatprep.mubr.f32.mxu0 0.0
    %819 = vmatmul.mubr.f32.gmra.mrb[0].mxu0 %v669
    %v820 = vpop.f32.mrb[0].mxu0
    %v821 = vadd.f32 0.0, %v820
    %v822 = vpop.f32.mrb[0].mxu0
    %v823 = vadd.f32 0.0, %v822
    %824 = vdwg.mxu0
    %v825 = vadd.f32 %v624, %v750
    %v826 = vadd.f32 %v625, %v752
    %v827 = vadd.f32 %v626, %v821
    %v828 = vadd.f32 %v627, %v823
    %829 = vrot.lane.b32.xlu0 %v56, 1
    %v830 = vpop.permute.xlu0 %829
    %831 = vrot.lane.b32.xlu0 %v70, 1
    %v832 = vpop.permute.xlu0 %831
    %833 = vrot.lane.b32.xlu0 %v57, 1
    %v834 = vpop.permute.xlu0 %833
    %835 = vrot.lane.b32.xlu0 %v71, 1
    %v836 = vpop.permute.xlu0 %835
    %vm837 = vcmp.lt.s32.totalorder %v83, 1
    %v838 = vsel %vm837, %v834, %v836
    %v839 = vsel %vm837, %v832, %v834
    %v840 = vsel %vm837, %v830, %v832
    %v841 = vsel %vm837, %v836, %v830
    %v843 = vlaneseq
    %v844 = vshrl.u32 %v843, 7
    %v845 = vsub.s32 0, %v844
    %v846 = vrot.slane %v61, %v845
    %v847 = vlaneseq
    %v848 = vshrl.u32 %v847, 7
    %v849 = vsub.s32 1, %v848
    %v850 = vrot.slane %v61, %v849
    %v851 = vlaneseq
    %v852 = vshrl.u32 %v851, 7
    %v853 = vsub.s32 2, %v852
    %v854 = vrot.slane %v61, %v853
    %v855 = vlaneseq
    %v856 = vshrl.u32 %v855, 7
    %v857 = vsub.s32 3, %v856
    %v858 = vrot.slane %v61, %v857
    %v863 = vmul.f32 %v841, %v846
    %v864 = vmul.f32 %v840, %v850
    %v865 = vmul.f32 %v839, %v854
    %v866 = vmul.f32 %v838, %v858
    %s867 = scalar_lea.vmem %s1, 24
    %v868 = vld [vmem:[%s867] sm:$0xff]
    %v870 = vsel %vm115, %v868, 0
    %v873 = vsel %vm119, %v863, 0
    %v876 = vsel %vm119, %v864, 0
    %v879 = vsel %vm119, %v865, 0
    %v882 = vsel %vm119, %v866, 0
    %884 = vmatprep.subr.mxu0 %v876
    %885 = vmatpush1.msra.mxu0 %v873
    %886 = vmatprep.subr.mxu0 0.0
    %887 = vmatpush1.msra.mxu0 0.0
    %888 = vmatprep.subr.mxu0 0.0
    %889 = vmatpush1.msra.mxu0 0.0
    %890 = vmatprep.subr.mxu0 0.0
    %891 = vmatpush1.msra.mxu0 0.0
    %892 = vmatprep.subr.mxu0 0.0
    %893 = vmatpush1.msra.mxu0 0.0
    %894 = vmatprep.subr.mxu0 0.0
    %895 = vmatpush1.msra.mxu0 0.0
    %896 = vmatprep.subr.mxu0 0.0
    %897 = vmatpush1.msra.mxu0 0.0
    %898 = vmatprep.subr.mxu0 0.0
    %899 = vmatpush1.msra.mxu0 0.0
    %900 = vmatprep.subr.mxu0 0.0
    %901 = vmatpush1.msra.mxu0 0.0
    %902 = vmatprep.subr.mxu0 0.0
    %903 = vmatpush1.msra.mxu0 0.0
    %904 = vmatprep.subr.mxu0 0.0
    %905 = vmatpush1.msra.mxu0 0.0
    %906 = vmatprep.subr.mxu0 0.0
    %907 = vmatpush1.msra.mxu0 0.0
    %908 = vmatprep.subr.mxu0 0.0
    %909 = vmatpush1.msra.mxu0 0.0
    %910 = vmatprep.subr.mxu0 0.0
    %911 = vmatpush1.msra.mxu0 0.0
    %912 = vmatprep.subr.mxu0 0.0
    %913 = vmatpush1.msra.mxu0 0.0
    %914 = vmatprep.subr.mxu0 0.0
    %915 = vmatpush1.msra.mxu0 0.0
    %916 = vmatprep.subr.mxu0 0.0
    %917 = vmatpush1.msra.mxu0 0.0
    %918 = vmatprep.subr.mxu0 0.0
    %919 = vmatpush1.msra.mxu0 0.0
    %920 = vmatprep.subr.mxu0 0.0
    %921 = vmatpush1.msra.mxu0 0.0
    %922 = vmatprep.subr.mxu0 0.0
    %923 = vmatpush1.msra.mxu0 0.0
    %924 = vmatprep.subr.mxu0 0.0
    %925 = vmatpush1.msra.mxu0 0.0
    %926 = vmatprep.subr.mxu0 0.0
    %927 = vmatpush1.msra.mxu0 0.0
    %928 = vmatprep.subr.mxu0 0.0
    %929 = vmatpush1.msra.mxu0 0.0
    %930 = vmatprep.subr.mxu0 0.0
    %931 = vmatpush1.msra.mxu0 0.0
    %932 = vmatprep.subr.mxu0 0.0
    %933 = vmatpush1.msra.mxu0 0.0
    %934 = vmatprep.subr.mxu0 0.0
    %935 = vmatpush1.msra.mxu0 0.0
    %936 = vmatprep.subr.mxu0 0.0
    %937 = vmatpush1.msra.mxu0 0.0
    %938 = vmatprep.subr.mxu0 0.0
    %939 = vmatpush1.msra.mxu0 0.0
    %940 = vmatprep.subr.mxu0 0.0
    %941 = vmatpush1.msra.mxu0 0.0
    %942 = vmatprep.subr.mxu0 0.0
    %943 = vmatpush1.msra.mxu0 0.0
    %944 = vmatprep.subr.mxu0 0.0
    %945 = vmatpush1.msra.mxu0 0.0
    %946 = vmatprep.subr.mxu0 0.0
    %947 = vmatpush1.msra.mxu0 0.0
    %948 = vmatprep.mubr.f32.mxu0 0.0
    %949 = vmatmul.mubr.f32.gmra.mrb[0].mxu0 %v870
    %v950 = vpop.f32.mrb[0].mxu0
    %v951 = vadd.f32 0.0, %v950
    %v952 = vpop.f32.mrb[0].mxu0
    %v953 = vadd.f32 0.0, %v952
    %954 = vdwg.mxu0
    %955 = vmatprep.subr.mxu0 %v882
    %956 = vmatpush1.msra.mxu0 %v879
    %957 = vmatprep.subr.mxu0 0.0
    %958 = vmatpush1.msra.mxu0 0.0
    %959 = vmatprep.subr.mxu0 0.0
    %960 = vmatpush1.msra.mxu0 0.0
    %961 = vmatprep.subr.mxu0 0.0
    %962 = vmatpush1.msra.mxu0 0.0
    %963 = vmatprep.subr.mxu0 0.0
    %964 = vmatpush1.msra.mxu0 0.0
    %965 = vmatprep.subr.mxu0 0.0
    %966 = vmatpush1.msra.mxu0 0.0
    %967 = vmatprep.subr.mxu0 0.0
    %968 = vmatpush1.msra.mxu0 0.0
    %969 = vmatprep.subr.mxu0 0.0
    %970 = vmatpush1.msra.mxu0 0.0
    %971 = vmatprep.subr.mxu0 0.0
    %972 = vmatpush1.msra.mxu0 0.0
    %973 = vmatprep.subr.mxu0 0.0
    %974 = vmatpush1.msra.mxu0 0.0
    %975 = vmatprep.subr.mxu0 0.0
    %976 = vmatpush1.msra.mxu0 0.0
    %977 = vmatprep.subr.mxu0 0.0
    %978 = vmatpush1.msra.mxu0 0.0
    %979 = vmatprep.subr.mxu0 0.0
    %980 = vmatpush1.msra.mxu0 0.0
    %981 = vmatprep.subr.mxu0 0.0
    %982 = vmatpush1.msra.mxu0 0.0
    %983 = vmatprep.subr.mxu0 0.0
    %984 = vmatpush1.msra.mxu0 0.0
    %985 = vmatprep.subr.mxu0 0.0
    %986 = vmatpush1.msra.mxu0 0.0
    %987 = vmatprep.subr.mxu0 0.0
    %988 = vmatpush1.msra.mxu0 0.0
    %989 = vmatprep.subr.mxu0 0.0
    %990 = vmatpush1.msra.mxu0 0.0
    %991 = vmatprep.subr.mxu0 0.0
    %992 = vmatpush1.msra.mxu0 0.0
    %993 = vmatprep.subr.mxu0 0.0
    %994 = vmatpush1.msra.mxu0 0.0
    %995 = vmatprep.subr.mxu0 0.0
    %996 = vmatpush1.msra.mxu0 0.0
    %997 = vmatprep.subr.mxu0 0.0
    %998 = vmatpush1.msra.mxu0 0.0
    %999 = vmatprep.subr.mxu0 0.0
    %1000 = vmatpush1.msra.mxu0 0.0
    %1001 = vmatprep.subr.mxu0 0.0
    %1002 = vmatpush1.msra.mxu0 0.0
    %1003 = vmatprep.subr.mxu0 0.0
    %1004 = vmatpush1.msra.mxu0 0.0
    %1005 = vmatprep.subr.mxu0 0.0
    %1006 = vmatpush1.msra.mxu0 0.0
    %1007 = vmatprep.subr.mxu0 0.0
    %1008 = vmatpush1.msra.mxu0 0.0
    %1009 = vmatprep.subr.mxu0 0.0
    %1010 = vmatpush1.msra.mxu0 0.0
    %1011 = vmatprep.subr.mxu0 0.0
    %1012 = vmatpush1.msra.mxu0 0.0
    %1013 = vmatprep.subr.mxu0 0.0
    %1014 = vmatpush1.msra.mxu0 0.0
    %1015 = vmatprep.subr.mxu0 0.0
    %1016 = vmatpush1.msra.mxu0 0.0
    %1017 = vmatprep.subr.mxu0 0.0
    %1018 = vmatpush1.msra.mxu0 0.0
    %1019 = vmatprep.mubr.f32.mxu0 0.0
    %1020 = vmatmul.mubr.f32.gmra.mrb[0].mxu0 %v870
    %v1021 = vpop.f32.mrb[0].mxu0
    %v1022 = vadd.f32 0.0, %v1021
    %v1023 = vpop.f32.mrb[0].mxu0
    %v1024 = vadd.f32 0.0, %v1023
    %1025 = vdwg.mxu0
    %v1026 = vadd.f32 %v825, %v951
    %v1027 = vadd.f32 %v826, %v953
    %v1028 = vadd.f32 %v827, %v1022
    %v1029 = vadd.f32 %v828, %v1024
    %1030 = vrot.lane.b32.xlu0 %v56, 127
    %v1031 = vpop.permute.xlu0 %1030
    %1032 = vrot.lane.b32.xlu0 %v70, 127
    %v1033 = vpop.permute.xlu0 %1032
    %1034 = vrot.lane.b32.xlu0 %v57, 127
    %v1035 = vpop.permute.xlu0 %1034
    %1036 = vrot.lane.b32.xlu0 %v71, 127
    %v1037 = vpop.permute.xlu0 %1036
    %vm1038 = vcmp.lt.s32.totalorder %v83, 127
    %v1039 = vsel %vm1038, %v1035, %v1037
    %v1040 = vsel %vm1038, %v1033, %v1035
    %v1041 = vsel %vm1038, %v1031, %v1033
    %v1042 = vsel %vm1038, %v1037, %v1031
    %v1044 = vlaneseq
    %v1045 = vshrl.u32 %v1044, 7
    %v1046 = vsub.s32 0, %v1045
    %v1047 = vrot.slane %v62, %v1046
    %v1048 = vlaneseq
    %v1049 = vshrl.u32 %v1048, 7
    %v1050 = vsub.s32 1, %v1049
    %v1051 = vrot.slane %v62, %v1050
    %v1052 = vlaneseq
    %v1053 = vshrl.u32 %v1052, 7
    %v1054 = vsub.s32 2, %v1053
    %v1055 = vrot.slane %v62, %v1054
    %v1056 = vlaneseq
    %v1057 = vshrl.u32 %v1056, 7
    %v1058 = vsub.s32 3, %v1057
    %v1059 = vrot.slane %v62, %v1058
    %v1064 = vmul.f32 %v1041, %v1047
    %v1065 = vmul.f32 %v1040, %v1051
    %v1066 = vmul.f32 %v1039, %v1055
    %v1067 = vmul.f32 %v1042, %v1059
    %s1068 = scalar_lea.vmem %s1, 40
    %v1069 = vld [vmem:[%s1068] sm:$0xff]
    %v1071 = vsel %vm115, %v1069, 0
    %v1074 = vsel %vm119, %v1064, 0
    %v1077 = vsel %vm119, %v1065, 0
    %v1080 = vsel %vm119, %v1066, 0
    %v1083 = vsel %vm119, %v1067, 0
    %1085 = vmatprep.subr.mxu0 %v1077
    %1086 = vmatpush1.msra.mxu0 %v1074
    %1087 = vmatprep.subr.mxu0 0.0
    %1088 = vmatpush1.msra.mxu0 0.0
    %1089 = vmatprep.subr.mxu0 0.0
    %1090 = vmatpush1.msra.mxu0 0.0
    %1091 = vmatprep.subr.mxu0 0.0
    %1092 = vmatpush1.msra.mxu0 0.0
    %1093 = vmatprep.subr.mxu0 0.0
    %1094 = vmatpush1.msra.mxu0 0.0
    %1095 = vmatprep.subr.mxu0 0.0
    %1096 = vmatpush1.msra.mxu0 0.0
    %1097 = vmatprep.subr.mxu0 0.0
    %1098 = vmatpush1.msra.mxu0 0.0
    %1099 = vmatprep.subr.mxu0 0.0
    %1100 = vmatpush1.msra.mxu0 0.0
    %1101 = vmatprep.subr.mxu0 0.0
    %1102 = vmatpush1.msra.mxu0 0.0
    %1103 = vmatprep.subr.mxu0 0.0
    %1104 = vmatpush1.msra.mxu0 0.0
    %1105 = vmatprep.subr.mxu0 0.0
    %1106 = vmatpush1.msra.mxu0 0.0
    %1107 = vmatprep.subr.mxu0 0.0
    %1108 = vmatpush1.msra.mxu0 0.0
    %1109 = vmatprep.subr.mxu0 0.0
    %1110 = vmatpush1.msra.mxu0 0.0
    %1111 = vmatprep.subr.mxu0 0.0
    %1112 = vmatpush1.msra.mxu0 0.0
    %1113 = vmatprep.subr.mxu0 0.0
    %1114 = vmatpush1.msra.mxu0 0.0
    %1115 = vmatprep.subr.mxu0 0.0
    %1116 = vmatpush1.msra.mxu0 0.0
    %1117 = vmatprep.subr.mxu0 0.0
    %1118 = vmatpush1.msra.mxu0 0.0
    %1119 = vmatprep.subr.mxu0 0.0
    %1120 = vmatpush1.msra.mxu0 0.0
    %1121 = vmatprep.subr.mxu0 0.0
    %1122 = vmatpush1.msra.mxu0 0.0
    %1123 = vmatprep.subr.mxu0 0.0
    %1124 = vmatpush1.msra.mxu0 0.0
    %1125 = vmatprep.subr.mxu0 0.0
    %1126 = vmatpush1.msra.mxu0 0.0
    %1127 = vmatprep.subr.mxu0 0.0
    %1128 = vmatpush1.msra.mxu0 0.0
    %1129 = vmatprep.subr.mxu0 0.0
    %1130 = vmatpush1.msra.mxu0 0.0
    %1131 = vmatprep.subr.mxu0 0.0
    %1132 = vmatpush1.msra.mxu0 0.0
    %1133 = vmatprep.subr.mxu0 0.0
    %1134 = vmatpush1.msra.mxu0 0.0
    %1135 = vmatprep.subr.mxu0 0.0
    %1136 = vmatpush1.msra.mxu0 0.0
    %1137 = vmatprep.subr.mxu0 0.0
    %1138 = vmatpush1.msra.mxu0 0.0
    %1139 = vmatprep.subr.mxu0 0.0
    %1140 = vmatpush1.msra.mxu0 0.0
    %1141 = vmatprep.subr.mxu0 0.0
    %1142 = vmatpush1.msra.mxu0 0.0
    %1143 = vmatprep.subr.mxu0 0.0
    %1144 = vmatpush1.msra.mxu0 0.0
    %1145 = vmatprep.subr.mxu0 0.0
    %1146 = vmatpush1.msra.mxu0 0.0
    %1147 = vmatprep.subr.mxu0 0.0
    %1148 = vmatpush1.msra.mxu0 0.0
    %1149 = vmatprep.mubr.f32.mxu0 0.0
    %1150 = vmatmul.mubr.f32.gmra.mrb[0].mxu0 %v1071
    %v1151 = vpop.f32.mrb[0].mxu0
    %v1152 = vadd.f32 0.0, %v1151
    %v1153 = vpop.f32.mrb[0].mxu0
    %v1154 = vadd.f32 0.0, %v1153
    %1155 = vdwg.mxu0
    %1156 = vmatprep.subr.mxu0 %v1083
    %1157 = vmatpush1.msra.mxu0 %v1080
    %1158 = vmatprep.subr.mxu0 0.0
    %1159 = vmatpush1.msra.mxu0 0.0
    %1160 = vmatprep.subr.mxu0 0.0
    %1161 = vmatpush1.msra.mxu0 0.0
    %1162 = vmatprep.subr.mxu0 0.0
    %1163 = vmatpush1.msra.mxu0 0.0
    %1164 = vmatprep.subr.mxu0 0.0
    %1165 = vmatpush1.msra.mxu0 0.0
    %1166 = vmatprep.subr.mxu0 0.0
    %1167 = vmatpush1.msra.mxu0 0.0
    %1168 = vmatprep.subr.mxu0 0.0
    %1169 = vmatpush1.msra.mxu0 0.0
    %1170 = vmatprep.subr.mxu0 0.0
    %1171 = vmatpush1.msra.mxu0 0.0
    %1172 = vmatprep.subr.mxu0 0.0
    %1173 = vmatpush1.msra.mxu0 0.0
    %1174 = vmatprep.subr.mxu0 0.0
    %1175 = vmatpush1.msra.mxu0 0.0
    %1176 = vmatprep.subr.mxu0 0.0
    %1177 = vmatpush1.msra.mxu0 0.0
    %1178 = vmatprep.subr.mxu0 0.0
    %1179 = vmatpush1.msra.mxu0 0.0
    %1180 = vmatprep.subr.mxu0 0.0
    %1181 = vmatpush1.msra.mxu0 0.0
    %1182 = vmatprep.subr.mxu0 0.0
    %1183 = vmatpush1.msra.mxu0 0.0
    %1184 = vmatprep.subr.mxu0 0.0
    %1185 = vmatpush1.msra.mxu0 0.0
    %1186 = vmatprep.subr.mxu0 0.0
    %1187 = vmatpush1.msra.mxu0 0.0
    %1188 = vmatprep.subr.mxu0 0.0
    %1189 = vmatpush1.msra.mxu0 0.0
    %1190 = vmatprep.subr.mxu0 0.0
    %1191 = vmatpush1.msra.mxu0 0.0
    %1192 = vmatprep.subr.mxu0 0.0
    %1193 = vmatpush1.msra.mxu0 0.0
    %1194 = vmatprep.subr.mxu0 0.0
    %1195 = vmatpush1.msra.mxu0 0.0
    %1196 = vmatprep.subr.mxu0 0.0
    %1197 = vmatpush1.msra.mxu0 0.0
    %1198 = vmatprep.subr.mxu0 0.0
    %1199 = vmatpush1.msra.mxu0 0.0
    %1200 = vmatprep.subr.mxu0 0.0
    %1201 = vmatpush1.msra.mxu0 0.0
    %1202 = vmatprep.subr.mxu0 0.0
    %1203 = vmatpush1.msra.mxu0 0.0
    %1204 = vmatprep.subr.mxu0 0.0
    %1205 = vmatpush1.msra.mxu0 0.0
    %1206 = vmatprep.subr.mxu0 0.0
    %1207 = vmatpush1.msra.mxu0 0.0
    %1208 = vmatprep.subr.mxu0 0.0
    %1209 = vmatpush1.msra.mxu0 0.0
    %1210 = vmatprep.subr.mxu0 0.0
    %1211 = vmatpush1.msra.mxu0 0.0
    %1212 = vmatprep.subr.mxu0 0.0
    %1213 = vmatpush1.msra.mxu0 0.0
    %1214 = vmatprep.subr.mxu0 0.0
    %1215 = vmatpush1.msra.mxu0 0.0
    %1216 = vmatprep.subr.mxu0 0.0
    %1217 = vmatpush1.msra.mxu0 0.0
    %1218 = vmatprep.subr.mxu0 0.0
    %1219 = vmatpush1.msra.mxu0 0.0
    %1220 = vmatprep.mubr.f32.mxu0 0.0
    %1221 = vmatmul.mubr.f32.gmra.mrb[0].mxu0 %v1071
    %v1222 = vpop.f32.mrb[0].mxu0
    %v1223 = vadd.f32 0.0, %v1222
    %v1224 = vpop.f32.mrb[0].mxu0
    %v1225 = vadd.f32 0.0, %v1224
    %1226 = vdwg.mxu0
    %v1227 = vadd.f32 %v1026, %v1152
    %v1228 = vadd.f32 %v1027, %v1154
    %v1229 = vadd.f32 %v1028, %v1223
    %v1230 = vadd.f32 %v1029, %v1225
    %1231 = vrot.lane.b32.xlu0 %v56, 113
    %v1232 = vpop.permute.xlu0 %1231
    %1233 = vrot.lane.b32.xlu0 %v70, 113
    %v1234 = vpop.permute.xlu0 %1233
    %1235 = vrot.lane.b32.xlu0 %v57, 113
    %v1236 = vpop.permute.xlu0 %1235
    %1237 = vrot.lane.b32.xlu0 %v71, 113
    %v1238 = vpop.permute.xlu0 %1237
    %vm1239 = vcmp.lt.s32.totalorder %v83, 113
    %v1240 = vsel %vm1239, %v1236, %v1238
    %v1241 = vsel %vm1239, %v1234, %v1236
    %v1242 = vsel %vm1239, %v1232, %v1234
    %v1243 = vsel %vm1239, %v1238, %v1232
    %v1245 = vlaneseq
    %v1246 = vshrl.u32 %v1245, 7
    %v1247 = vsub.s32 0, %v1246
    %v1248 = vrot.slane %v63, %v1247
    %v1249 = vlaneseq
    %v1250 = vshrl.u32 %v1249, 7
    %v1251 = vsub.s32 1, %v1250
    %v1252 = vrot.slane %v63, %v1251
    %v1253 = vlaneseq
    %v1254 = vshrl.u32 %v1253, 7
    %v1255 = vsub.s32 2, %v1254
    %v1256 = vrot.slane %v63, %v1255
    %v1257 = vlaneseq
    %v1258 = vshrl.u32 %v1257, 7
    %v1259 = vsub.s32 3, %v1258
    %v1260 = vrot.slane %v63, %v1259
    %v1265 = vmul.f32 %v1242, %v1248
    %v1266 = vmul.f32 %v1241, %v1252
    %v1267 = vmul.f32 %v1240, %v1256
    %v1268 = vmul.f32 %v1243, %v1260
    %s1269 = scalar_lea.vmem %s1, 48
    %v1270 = vld [vmem:[%s1269] sm:$0xff]
    %v1272 = vsel %vm115, %v1270, 0
    %v1275 = vsel %vm119, %v1265, 0
    %v1278 = vsel %vm119, %v1266, 0
    %v1281 = vsel %vm119, %v1267, 0
    %v1284 = vsel %vm119, %v1268, 0
    %1286 = vmatprep.subr.mxu0 %v1278
    %1287 = vmatpush1.msra.mxu0 %v1275
    %1288 = vmatprep.subr.mxu0 0.0
    %1289 = vmatpush1.msra.mxu0 0.0
    %1290 = vmatprep.subr.mxu0 0.0
    %1291 = vmatpush1.msra.mxu0 0.0
    %1292 = vmatprep.subr.mxu0 0.0
    %1293 = vmatpush1.msra.mxu0 0.0
    %1294 = vmatprep.subr.mxu0 0.0
    %1295 = vmatpush1.msra.mxu0 0.0
    %1296 = vmatprep.subr.mxu0 0.0
    %1297 = vmatpush1.msra.mxu0 0.0
    %1298 = vmatprep.subr.mxu0 0.0
    %1299 = vmatpush1.msra.mxu0 0.0
    %1300 = vmatprep.subr.mxu0 0.0
    %1301 = vmatpush1.msra.mxu0 0.0
    %1302 = vmatprep.subr.mxu0 0.0
    %1303 = vmatpush1.msra.mxu0 0.0
    %1304 = vmatprep.subr.mxu0 0.0
    %1305 = vmatpush1.msra.mxu0 0.0
    %1306 = vmatprep.subr.mxu0 0.0
    %1307 = vmatpush1.msra.mxu0 0.0
    %1308 = vmatprep.subr.mxu0 0.0
    %1309 = vmatpush1.msra.mxu0 0.0
    %1310 = vmatprep.subr.mxu0 0.0
    %1311 = vmatpush1.msra.mxu0 0.0
    %1312 = vmatprep.subr.mxu0 0.0
    %1313 = vmatpush1.msra.mxu0 0.0
    %1314 = vmatprep.subr.mxu0 0.0
    %1315 = vmatpush1.msra.mxu0 0.0
    %1316 = vmatprep.subr.mxu0 0.0
    %1317 = vmatpush1.msra.mxu0 0.0
    %1318 = vmatprep.subr.mxu0 0.0
    %1319 = vmatpush1.msra.mxu0 0.0
    %1320 = vmatprep.subr.mxu0 0.0
    %1321 = vmatpush1.msra.mxu0 0.0
    %1322 = vmatprep.subr.mxu0 0.0
    %1323 = vmatpush1.msra.mxu0 0.0
    %1324 = vmatprep.subr.mxu0 0.0
    %1325 = vmatpush1.msra.mxu0 0.0
    %1326 = vmatprep.subr.mxu0 0.0
    %1327 = vmatpush1.msra.mxu0 0.0
    %1328 = vmatprep.subr.mxu0 0.0
    %1329 = vmatpush1.msra.mxu0 0.0
    %1330 = vmatprep.subr.mxu0 0.0
    %1331 = vmatpush1.msra.mxu0 0.0
    %1332 = vmatprep.subr.mxu0 0.0
    %1333 = vmatpush1.msra.mxu0 0.0
    %1334 = vmatprep.subr.mxu0 0.0
    %1335 = vmatpush1.msra.mxu0 0.0
    %1336 = vmatprep.subr.mxu0 0.0
    %1337 = vmatpush1.msra.mxu0 0.0
    %1338 = vmatprep.subr.mxu0 0.0
    %1339 = vmatpush1.msra.mxu0 0.0
    %1340 = vmatprep.subr.mxu0 0.0
    %1341 = vmatpush1.msra.mxu0 0.0
    %1342 = vmatprep.subr.mxu0 0.0
    %1343 = vmatpush1.msra.mxu0 0.0
    %1344 = vmatprep.subr.mxu0 0.0
    %1345 = vmatpush1.msra.mxu0 0.0
    %1346 = vmatprep.subr.mxu0 0.0
    %1347 = vmatpush1.msra.mxu0 0.0
    %1348 = vmatprep.subr.mxu0 0.0
    %1349 = vmatpush1.msra.mxu0 0.0
    %1350 = vmatprep.mubr.f32.mxu0 0.0
    %1351 = vmatmul.mubr.f32.gmra.mrb[0].mxu0 %v1272
    %v1352 = vpop.f32.mrb[0].mxu0
    %v1353 = vadd.f32 0.0, %v1352
    %v1354 = vpop.f32.mrb[0].mxu0
    %v1355 = vadd.f32 0.0, %v1354
    %1356 = vdwg.mxu0
    %1357 = vmatprep.subr.mxu0 %v1284
    %1358 = vmatpush1.msra.mxu0 %v1281
    %1359 = vmatprep.subr.mxu0 0.0
    %1360 = vmatpush1.msra.mxu0 0.0
    %1361 = vmatprep.subr.mxu0 0.0
    %1362 = vmatpush1.msra.mxu0 0.0
    %1363 = vmatprep.subr.mxu0 0.0
    %1364 = vmatpush1.msra.mxu0 0.0
    %1365 = vmatprep.subr.mxu0 0.0
    %1366 = vmatpush1.msra.mxu0 0.0
    %1367 = vmatprep.subr.mxu0 0.0
    %1368 = vmatpush1.msra.mxu0 0.0
    %1369 = vmatprep.subr.mxu0 0.0
    %1370 = vmatpush1.msra.mxu0 0.0
    %1371 = vmatprep.subr.mxu0 0.0
    %1372 = vmatpush1.msra.mxu0 0.0
    %1373 = vmatprep.subr.mxu0 0.0
    %1374 = vmatpush1.msra.mxu0 0.0
    %1375 = vmatprep.subr.mxu0 0.0
    %1376 = vmatpush1.msra.mxu0 0.0
    %1377 = vmatprep.subr.mxu0 0.0
    %1378 = vmatpush1.msra.mxu0 0.0
    %1379 = vmatprep.subr.mxu0 0.0
    %1380 = vmatpush1.msra.mxu0 0.0
    %1381 = vmatprep.subr.mxu0 0.0
    %1382 = vmatpush1.msra.mxu0 0.0
    %1383 = vmatprep.subr.mxu0 0.0
    %1384 = vmatpush1.msra.mxu0 0.0
    %1385 = vmatprep.subr.mxu0 0.0
    %1386 = vmatpush1.msra.mxu0 0.0
    %1387 = vmatprep.subr.mxu0 0.0
    %1388 = vmatpush1.msra.mxu0 0.0
    %1389 = vmatprep.subr.mxu0 0.0
    %1390 = vmatpush1.msra.mxu0 0.0
    %1391 = vmatprep.subr.mxu0 0.0
    %1392 = vmatpush1.msra.mxu0 0.0
    %1393 = vmatprep.subr.mxu0 0.0
    %1394 = vmatpush1.msra.mxu0 0.0
    %1395 = vmatprep.subr.mxu0 0.0
    %1396 = vmatpush1.msra.mxu0 0.0
    %1397 = vmatprep.subr.mxu0 0.0
    %1398 = vmatpush1.msra.mxu0 0.0
    %1399 = vmatprep.subr.mxu0 0.0
    %1400 = vmatpush1.msra.mxu0 0.0
    %1401 = vmatprep.subr.mxu0 0.0
    %1402 = vmatpush1.msra.mxu0 0.0
    %1403 = vmatprep.subr.mxu0 0.0
    %1404 = vmatpush1.msra.mxu0 0.0
    %1405 = vmatprep.subr.mxu0 0.0
    %1406 = vmatpush1.msra.mxu0 0.0
    %1407 = vmatprep.subr.mxu0 0.0
    %1408 = vmatpush1.msra.mxu0 0.0
    %1409 = vmatprep.subr.mxu0 0.0
    %1410 = vmatpush1.msra.mxu0 0.0
    %1411 = vmatprep.subr.mxu0 0.0
    %1412 = vmatpush1.msra.mxu0 0.0
    %1413 = vmatprep.subr.mxu0 0.0
    %1414 = vmatpush1.msra.mxu0 0.0
    %1415 = vmatprep.subr.mxu0 0.0
    %1416 = vmatpush1.msra.mxu0 0.0
    %1417 = vmatprep.subr.mxu0 0.0
    %1418 = vmatpush1.msra.mxu0 0.0
    %1419 = vmatprep.subr.mxu0 0.0
    %1420 = vmatpush1.msra.mxu0 0.0
    %1421 = vmatprep.mubr.f32.mxu0 0.0
    %1422 = vmatmul.mubr.f32.gmra.mrb[0].mxu0 %v1272
    %v1423 = vpop.f32.mrb[0].mxu0
    %v1424 = vadd.f32 0.0, %v1423
    %v1425 = vpop.f32.mrb[0].mxu0
    %v1426 = vadd.f32 0.0, %v1425
    %1427 = vdwg.mxu0
    %v1428 = vadd.f32 %v1227, %v1353
    %v1429 = vadd.f32 %v1228, %v1355
    %v1430 = vadd.f32 %v1229, %v1424
    %v1431 = vadd.f32 %v1230, %v1426
    %1432 = vrot.lane.b32.xlu0 %v56, 112
    %v1433 = vpop.permute.xlu0 %1432
    %1434 = vrot.lane.b32.xlu0 %v70, 112
    %v1435 = vpop.permute.xlu0 %1434
    %1436 = vrot.lane.b32.xlu0 %v57, 112
    %v1437 = vpop.permute.xlu0 %1436
    %1438 = vrot.lane.b32.xlu0 %v71, 112
    %v1439 = vpop.permute.xlu0 %1438
    %vm1440 = vcmp.lt.s32.totalorder %v83, 112
    %v1441 = vsel %vm1440, %v1437, %v1439
    %v1442 = vsel %vm1440, %v1435, %v1437
    %v1443 = vsel %vm1440, %v1433, %v1435
    %v1444 = vsel %vm1440, %v1439, %v1433
    %v1446 = vlaneseq
    %v1447 = vshrl.u32 %v1446, 7
    %v1448 = vsub.s32 0, %v1447
    %v1449 = vrot.slane %v64, %v1448
    %v1450 = vlaneseq
    %v1451 = vshrl.u32 %v1450, 7
    %v1452 = vsub.s32 1, %v1451
    %v1453 = vrot.slane %v64, %v1452
    %v1454 = vlaneseq
    %v1455 = vshrl.u32 %v1454, 7
    %v1456 = vsub.s32 2, %v1455
    %v1457 = vrot.slane %v64, %v1456
    %v1458 = vlaneseq
    %v1459 = vshrl.u32 %v1458, 7
    %v1460 = vsub.s32 3, %v1459
    %v1461 = vrot.slane %v64, %v1460
    %v1466 = vmul.f32 %v1443, %v1449
    %v1467 = vmul.f32 %v1442, %v1453
    %v1468 = vmul.f32 %v1441, %v1457
    %v1469 = vmul.f32 %v1444, %v1461
    %s1470 = scalar_lea.vmem %s1, 56
    %v1471 = vld [vmem:[%s1470] sm:$0xff]
    %v1473 = vsel %vm115, %v1471, 0
    %v1476 = vsel %vm119, %v1466, 0
    %v1479 = vsel %vm119, %v1467, 0
    %v1482 = vsel %vm119, %v1468, 0
    %v1485 = vsel %vm119, %v1469, 0
    %1487 = vmatprep.subr.mxu0 %v1479
    %1488 = vmatpush1.msra.mxu0 %v1476
    %1489 = vmatprep.subr.mxu0 0.0
    %1490 = vmatpush1.msra.mxu0 0.0
    %1491 = vmatprep.subr.mxu0 0.0
    %1492 = vmatpush1.msra.mxu0 0.0
    %1493 = vmatprep.subr.mxu0 0.0
    %1494 = vmatpush1.msra.mxu0 0.0
    %1495 = vmatprep.subr.mxu0 0.0
    %1496 = vmatpush1.msra.mxu0 0.0
    %1497 = vmatprep.subr.mxu0 0.0
    %1498 = vmatpush1.msra.mxu0 0.0
    %1499 = vmatprep.subr.mxu0 0.0
    %1500 = vmatpush1.msra.mxu0 0.0
    %1501 = vmatprep.subr.mxu0 0.0
    %1502 = vmatpush1.msra.mxu0 0.0
    %1503 = vmatprep.subr.mxu0 0.0
    %1504 = vmatpush1.msra.mxu0 0.0
    %1505 = vmatprep.subr.mxu0 0.0
    %1506 = vmatpush1.msra.mxu0 0.0
    %1507 = vmatprep.subr.mxu0 0.0
    %1508 = vmatpush1.msra.mxu0 0.0
    %1509 = vmatprep.subr.mxu0 0.0
    %1510 = vmatpush1.msra.mxu0 0.0
    %1511 = vmatprep.subr.mxu0 0.0
    %1512 = vmatpush1.msra.mxu0 0.0
    %1513 = vmatprep.subr.mxu0 0.0
    %1514 = vmatpush1.msra.mxu0 0.0
    %1515 = vmatprep.subr.mxu0 0.0
    %1516 = vmatpush1.msra.mxu0 0.0
    %1517 = vmatprep.subr.mxu0 0.0
    %1518 = vmatpush1.msra.mxu0 0.0
    %1519 = vmatprep.subr.mxu0 0.0
    %1520 = vmatpush1.msra.mxu0 0.0
    %1521 = vmatprep.subr.mxu0 0.0
    %1522 = vmatpush1.msra.mxu0 0.0
    %1523 = vmatprep.subr.mxu0 0.0
    %1524 = vmatpush1.msra.mxu0 0.0
    %1525 = vmatprep.subr.mxu0 0.0
    %1526 = vmatpush1.msra.mxu0 0.0
    %1527 = vmatprep.subr.mxu0 0.0
    %1528 = vmatpush1.msra.mxu0 0.0
    %1529 = vmatprep.subr.mxu0 0.0
    %1530 = vmatpush1.msra.mxu0 0.0
    %1531 = vmatprep.subr.mxu0 0.0
    %1532 = vmatpush1.msra.mxu0 0.0
    %1533 = vmatprep.subr.mxu0 0.0
    %1534 = vmatpush1.msra.mxu0 0.0
    %1535 = vmatprep.subr.mxu0 0.0
    %1536 = vmatpush1.msra.mxu0 0.0
    %1537 = vmatprep.subr.mxu0 0.0
    %1538 = vmatpush1.msra.mxu0 0.0
    %1539 = vmatprep.subr.mxu0 0.0
    %1540 = vmatpush1.msra.mxu0 0.0
    %1541 = vmatprep.subr.mxu0 0.0
    %1542 = vmatpush1.msra.mxu0 0.0
    %1543 = vmatprep.subr.mxu0 0.0
    %1544 = vmatpush1.msra.mxu0 0.0
    %1545 = vmatprep.subr.mxu0 0.0
    %1546 = vmatpush1.msra.mxu0 0.0
    %1547 = vmatprep.subr.mxu0 0.0
    %1548 = vmatpush1.msra.mxu0 0.0
    %1549 = vmatprep.subr.mxu0 0.0
    %1550 = vmatpush1.msra.mxu0 0.0
    %1551 = vmatprep.mubr.f32.mxu0 0.0
    %1552 = vmatmul.mubr.f32.gmra.mrb[0].mxu0 %v1473
    %v1553 = vpop.f32.mrb[0].mxu0
    %v1554 = vadd.f32 0.0, %v1553
    %v1555 = vpop.f32.mrb[0].mxu0
    %v1556 = vadd.f32 0.0, %v1555
    %1557 = vdwg.mxu0
    %1558 = vmatprep.subr.mxu0 %v1485
    %1559 = vmatpush1.msra.mxu0 %v1482
    %1560 = vmatprep.subr.mxu0 0.0
    %1561 = vmatpush1.msra.mxu0 0.0
    %1562 = vmatprep.subr.mxu0 0.0
    %1563 = vmatpush1.msra.mxu0 0.0
    %1564 = vmatprep.subr.mxu0 0.0
    %1565 = vmatpush1.msra.mxu0 0.0
    %1566 = vmatprep.subr.mxu0 0.0
    %1567 = vmatpush1.msra.mxu0 0.0
    %1568 = vmatprep.subr.mxu0 0.0
    %1569 = vmatpush1.msra.mxu0 0.0
    %1570 = vmatprep.subr.mxu0 0.0
    %1571 = vmatpush1.msra.mxu0 0.0
    %1572 = vmatprep.subr.mxu0 0.0
    %1573 = vmatpush1.msra.mxu0 0.0
    %1574 = vmatprep.subr.mxu0 0.0
    %1575 = vmatpush1.msra.mxu0 0.0
    %1576 = vmatprep.subr.mxu0 0.0
    %1577 = vmatpush1.msra.mxu0 0.0
    %1578 = vmatprep.subr.mxu0 0.0
    %1579 = vmatpush1.msra.mxu0 0.0
    %1580 = vmatprep.subr.mxu0 0.0
    %1581 = vmatpush1.msra.mxu0 0.0
    %1582 = vmatprep.subr.mxu0 0.0
    %1583 = vmatpush1.msra.mxu0 0.0
    %1584 = vmatprep.subr.mxu0 0.0
    %1585 = vmatpush1.msra.mxu0 0.0
    %1586 = vmatprep.subr.mxu0 0.0
    %1587 = vmatpush1.msra.mxu0 0.0
    %1588 = vmatprep.subr.mxu0 0.0
    %1589 = vmatpush1.msra.mxu0 0.0
    %1590 = vmatprep.subr.mxu0 0.0
    %1591 = vmatpush1.msra.mxu0 0.0
    %1592 = vmatprep.subr.mxu0 0.0
    %1593 = vmatpush1.msra.mxu0 0.0
    %1594 = vmatprep.subr.mxu0 0.0
    %1595 = vmatpush1.msra.mxu0 0.0
    %1596 = vmatprep.subr.mxu0 0.0
    %1597 = vmatpush1.msra.mxu0 0.0
    %1598 = vmatprep.subr.mxu0 0.0
    %1599 = vmatpush1.msra.mxu0 0.0
    %1600 = vmatprep.subr.mxu0 0.0
    %1601 = vmatpush1.msra.mxu0 0.0
    %1602 = vmatprep.subr.mxu0 0.0
    %1603 = vmatpush1.msra.mxu0 0.0
    %1604 = vmatprep.subr.mxu0 0.0
    %1605 = vmatpush1.msra.mxu0 0.0
    %1606 = vmatprep.subr.mxu0 0.0
    %1607 = vmatpush1.msra.mxu0 0.0
    %1608 = vmatprep.subr.mxu0 0.0
    %1609 = vmatpush1.msra.mxu0 0.0
    %1610 = vmatprep.subr.mxu0 0.0
    %1611 = vmatpush1.msra.mxu0 0.0
    %1612 = vmatprep.subr.mxu0 0.0
    %1613 = vmatpush1.msra.mxu0 0.0
    %1614 = vmatprep.subr.mxu0 0.0
    %1615 = vmatpush1.msra.mxu0 0.0
    %1616 = vmatprep.subr.mxu0 0.0
    %1617 = vmatpush1.msra.mxu0 0.0
    %1618 = vmatprep.subr.mxu0 0.0
    %1619 = vmatpush1.msra.mxu0 0.0
    %1620 = vmatprep.subr.mxu0 0.0
    %1621 = vmatpush1.msra.mxu0 0.0
    %1622 = vmatprep.mubr.f32.mxu0 0.0
    %1623 = vmatmul.mubr.f32.gmra.mrb[0].mxu0 %v1473
    %v1624 = vpop.f32.mrb[0].mxu0
    %v1625 = vadd.f32 0.0, %v1624
    %v1626 = vpop.f32.mrb[0].mxu0
    %v1627 = vadd.f32 0.0, %v1626
    %1628 = vdwg.mxu0
    %v1629 = vadd.f32 %v1428, %v1554
    %v1630 = vadd.f32 %v1429, %v1556
    %v1631 = vadd.f32 %v1430, %v1625
    %v1632 = vadd.f32 %v1431, %v1627
    %1633 = vrot.lane.b32.xlu0 %v56, 111
    %v1634 = vpop.permute.xlu0 %1633
    %1635 = vrot.lane.b32.xlu0 %v70, 111
    %v1636 = vpop.permute.xlu0 %1635
    %1637 = vrot.lane.b32.xlu0 %v57, 111
    %v1638 = vpop.permute.xlu0 %1637
    %1639 = vrot.lane.b32.xlu0 %v71, 111
    %v1640 = vpop.permute.xlu0 %1639
    %vm1641 = vcmp.lt.s32.totalorder %v83, 111
    %v1642 = vsel %vm1641, %v1638, %v1640
    %v1643 = vsel %vm1641, %v1636, %v1638
    %v1644 = vsel %vm1641, %v1634, %v1636
    %v1645 = vsel %vm1641, %v1640, %v1634
    %v1647 = vlaneseq
    %v1648 = vshrl.u32 %v1647, 7
    %v1649 = vsub.s32 0, %v1648
    %v1650 = vrot.slane %v65, %v1649
    %v1651 = vlaneseq
    %v1652 = vshrl.u32 %v1651, 7
    %v1653 = vsub.s32 1, %v1652
    %v1654 = vrot.slane %v65, %v1653
    %v1655 = vlaneseq
    %v1656 = vshrl.u32 %v1655, 7
    %v1657 = vsub.s32 2, %v1656
    %v1658 = vrot.slane %v65, %v1657
    %v1659 = vlaneseq
    %v1660 = vshrl.u32 %v1659, 7
    %v1661 = vsub.s32 3, %v1660
    %v1662 = vrot.slane %v65, %v1661
    %v1667 = vmul.f32 %v1644, %v1650
    %v1668 = vmul.f32 %v1643, %v1654
    %v1669 = vmul.f32 %v1642, %v1658
    %v1670 = vmul.f32 %v1645, %v1662
    %s1671 = scalar_lea.vmem %s1, 64
    %v1672 = vld [vmem:[%s1671] sm:$0xff]
    %v1674 = vsel %vm115, %v1672, 0
    %v1677 = vsel %vm119, %v1667, 0
    %v1680 = vsel %vm119, %v1668, 0
    %v1683 = vsel %vm119, %v1669, 0
    %v1686 = vsel %vm119, %v1670, 0
    %1688 = vmatprep.subr.mxu0 %v1680
    %1689 = vmatpush1.msra.mxu0 %v1677
    %1690 = vmatprep.subr.mxu0 0.0
    %1691 = vmatpush1.msra.mxu0 0.0
    %1692 = vmatprep.subr.mxu0 0.0
    %1693 = vmatpush1.msra.mxu0 0.0
    %1694 = vmatprep.subr.mxu0 0.0
    %1695 = vmatpush1.msra.mxu0 0.0
    %1696 = vmatprep.subr.mxu0 0.0
    %1697 = vmatpush1.msra.mxu0 0.0
    %1698 = vmatprep.subr.mxu0 0.0
    %1699 = vmatpush1.msra.mxu0 0.0
    %1700 = vmatprep.subr.mxu0 0.0
    %1701 = vmatpush1.msra.mxu0 0.0
    %1702 = vmatprep.subr.mxu0 0.0
    %1703 = vmatpush1.msra.mxu0 0.0
    %1704 = vmatprep.subr.mxu0 0.0
    %1705 = vmatpush1.msra.mxu0 0.0
    %1706 = vmatprep.subr.mxu0 0.0
    %1707 = vmatpush1.msra.mxu0 0.0
    %1708 = vmatprep.subr.mxu0 0.0
    %1709 = vmatpush1.msra.mxu0 0.0
    %1710 = vmatprep.subr.mxu0 0.0
    %1711 = vmatpush1.msra.mxu0 0.0
    %1712 = vmatprep.subr.mxu0 0.0
    %1713 = vmatpush1.msra.mxu0 0.0
    %1714 = vmatprep.subr.mxu0 0.0
    %1715 = vmatpush1.msra.mxu0 0.0
    %1716 = vmatprep.subr.mxu0 0.0
    %1717 = vmatpush1.msra.mxu0 0.0
    %1718 = vmatprep.subr.mxu0 0.0
    %1719 = vmatpush1.msra.mxu0 0.0
    %1720 = vmatprep.subr.mxu0 0.0
    %1721 = vmatpush1.msra.mxu0 0.0
    %1722 = vmatprep.subr.mxu0 0.0
    %1723 = vmatpush1.msra.mxu0 0.0
    %1724 = vmatprep.subr.mxu0 0.0
    %1725 = vmatpush1.msra.mxu0 0.0
    %1726 = vmatprep.subr.mxu0 0.0
    %1727 = vmatpush1.msra.mxu0 0.0
    %1728 = vmatprep.subr.mxu0 0.0
    %1729 = vmatpush1.msra.mxu0 0.0
    %1730 = vmatprep.subr.mxu0 0.0
    %1731 = vmatpush1.msra.mxu0 0.0
    %1732 = vmatprep.subr.mxu0 0.0
    %1733 = vmatpush1.msra.mxu0 0.0
    %1734 = vmatprep.subr.mxu0 0.0
    %1735 = vmatpush1.msra.mxu0 0.0
    %1736 = vmatprep.subr.mxu0 0.0
    %1737 = vmatpush1.msra.mxu0 0.0
    %1738 = vmatprep.subr.mxu0 0.0
    %1739 = vmatpush1.msra.mxu0 0.0
    %1740 = vmatprep.subr.mxu0 0.0
    %1741 = vmatpush1.msra.mxu0 0.0
    %1742 = vmatprep.subr.mxu0 0.0
    %1743 = vmatpush1.msra.mxu0 0.0
    %1744 = vmatprep.subr.mxu0 0.0
    %1745 = vmatpush1.msra.mxu0 0.0
    %1746 = vmatprep.subr.mxu0 0.0
    %1747 = vmatpush1.msra.mxu0 0.0
    %1748 = vmatprep.subr.mxu0 0.0
    %1749 = vmatpush1.msra.mxu0 0.0
    %1750 = vmatprep.subr.mxu0 0.0
    %1751 = vmatpush1.msra.mxu0 0.0
    %1752 = vmatprep.mubr.f32.mxu0 0.0
    %1753 = vmatmul.mubr.f32.gmra.mrb[0].mxu0 %v1674
    %v1754 = vpop.f32.mrb[0].mxu0
    %v1755 = vadd.f32 0.0, %v1754
    %v1756 = vpop.f32.mrb[0].mxu0
    %v1757 = vadd.f32 0.0, %v1756
    %1758 = vdwg.mxu0
    %1759 = vmatprep.subr.mxu0 %v1686
    %1760 = vmatpush1.msra.mxu0 %v1683
    %1761 = vmatprep.subr.mxu0 0.0
    %1762 = vmatpush1.msra.mxu0 0.0
    %1763 = vmatprep.subr.mxu0 0.0
    %1764 = vmatpush1.msra.mxu0 0.0
    %1765 = vmatprep.subr.mxu0 0.0
    %1766 = vmatpush1.msra.mxu0 0.0
    %1767 = vmatprep.subr.mxu0 0.0
    %1768 = vmatpush1.msra.mxu0 0.0
    %1769 = vmatprep.subr.mxu0 0.0
    %1770 = vmatpush1.msra.mxu0 0.0
    %1771 = vmatprep.subr.mxu0 0.0
    %1772 = vmatpush1.msra.mxu0 0.0
    %1773 = vmatprep.subr.mxu0 0.0
    %1774 = vmatpush1.msra.mxu0 0.0
    %1775 = vmatprep.subr.mxu0 0.0
    %1776 = vmatpush1.msra.mxu0 0.0
    %1777 = vmatprep.subr.mxu0 0.0
    %1778 = vmatpush1.msra.mxu0 0.0
    %1779 = vmatprep.subr.mxu0 0.0
    %1780 = vmatpush1.msra.mxu0 0.0
    %1781 = vmatprep.subr.mxu0 0.0
    %1782 = vmatpush1.msra.mxu0 0.0
    %1783 = vmatprep.subr.mxu0 0.0
    %1784 = vmatpush1.msra.mxu0 0.0
    %1785 = vmatprep.subr.mxu0 0.0
    %1786 = vmatpush1.msra.mxu0 0.0
    %1787 = vmatprep.subr.mxu0 0.0
    %1788 = vmatpush1.msra.mxu0 0.0
    %1789 = vmatprep.subr.mxu0 0.0
    %1790 = vmatpush1.msra.mxu0 0.0
    %1791 = vmatprep.subr.mxu0 0.0
    %1792 = vmatpush1.msra.mxu0 0.0
    %1793 = vmatprep.subr.mxu0 0.0
    %1794 = vmatpush1.msra.mxu0 0.0
    %1795 = vmatprep.subr.mxu0 0.0
    %1796 = vmatpush1.msra.mxu0 0.0
    %1797 = vmatprep.subr.mxu0 0.0
    %1798 = vmatpush1.msra.mxu0 0.0
    %1799 = vmatprep.subr.mxu0 0.0
    %1800 = vmatpush1.msra.mxu0 0.0
    %1801 = vmatprep.subr.mxu0 0.0
    %1802 = vmatpush1.msra.mxu0 0.0
    %1803 = vmatprep.subr.mxu0 0.0
    %1804 = vmatpush1.msra.mxu0 0.0
    %1805 = vmatprep.subr.mxu0 0.0
    %1806 = vmatpush1.msra.mxu0 0.0
    %1807 = vmatprep.subr.mxu0 0.0
    %1808 = vmatpush1.msra.mxu0 0.0
    %1809 = vmatprep.subr.mxu0 0.0
    %1810 = vmatpush1.msra.mxu0 0.0
    %1811 = vmatprep.subr.mxu0 0.0
    %1812 = vmatpush1.msra.mxu0 0.0
    %1813 = vmatprep.subr.mxu0 0.0
    %1814 = vmatpush1.msra.mxu0 0.0
    %1815 = vmatprep.subr.mxu0 0.0
    %1816 = vmatpush1.msra.mxu0 0.0
    %1817 = vmatprep.subr.mxu0 0.0
    %1818 = vmatpush1.msra.mxu0 0.0
    %1819 = vmatprep.subr.mxu0 0.0
    %1820 = vmatpush1.msra.mxu0 0.0
    %1821 = vmatprep.subr.mxu0 0.0
    %1822 = vmatpush1.msra.mxu0 0.0
    %1823 = vmatprep.mubr.f32.mxu0 0.0
    %1824 = vmatmul.mubr.f32.gmra.mrb[0].mxu0 %v1674
    %v1825 = vpop.f32.mrb[0].mxu0
    %v1826 = vadd.f32 0.0, %v1825
    %v1827 = vpop.f32.mrb[0].mxu0
    %v1828 = vadd.f32 0.0, %v1827
    %1829 = vdwg.mxu0
    %v1830 = vadd.f32 %v1629, %v1755
    %v1831 = vadd.f32 %v1630, %v1757
    %v1832 = vadd.f32 %v1631, %v1826
    %v1833 = vadd.f32 %v1632, %v1828
    %v1834 = vld [vmem:[%s2] sm:$0xff]
    %1836 = vset.pattern.permute.xlu0 0
    %1837 = vperm.xlu0 %1836, %v1834
    %v1838 = vpop.permute.xlu0 %1837
    %v1840 = vadd.f32 %v1830, %v1838
    %v1841 = vadd.f32 %v1831, %v1838
    %v1842 = vadd.f32 %v1832, %v1838
    %v1843 = vadd.f32 %v1833, %v1838
    %s1844 = scalar_lea.vmem %s2, 8
    %v1845 = vld [vmem:[%s1844] sm:$0xff]
    %s1846 = scalar_lea.vmem %s2, 16
    %v1847 = vld [vmem:[%s1846] sm:$0xff]
    %v1848 = vadd.f32 %v1840, %v1841
    %v1849 = vadd.f32 %v1848, %v1842
    %v1850 = vadd.f32 %v1849, %v1843
    %1851 = vadd.xlane.f32.xlu0 %v1850
    %v1852 = vpop.xlane.xlu0 %1851
    %v1853 = vmul.f32 %v1852, 0.001953125
    %v1854 = vmul.f32 %v1840, %v1840
    %v1855 = vmul.f32 %v1841, %v1841
    %v1856 = vmul.f32 %v1842, %v1842
    %v1857 = vmul.f32 %v1843, %v1843
    %v1858 = vadd.f32 %v1854, %v1855
    %v1859 = vadd.f32 %v1858, %v1856
    %v1860 = vadd.f32 %v1859, %v1857
    %1861 = vadd.xlane.f32.xlu0 %v1860
    %v1862 = vpop.xlane.xlu0 %1861
    %v1863 = vmul.f32 %v1862, 0.001953125
    %v1864 = vmul.f32 %v1853, %v1853
    %v1865 = vsub.f32 %v1863, %v1864
    %v1866 = vmax.f32 %v1865, 0.0
    %v1867 = vadd.f32 %v1866, 1e-05
    %v1868 = vrsqrt.pop %v1867
    %v1869 = vmul.f32 %v1868, %v1845
    %v1870 = vsub.f32 %v1840, %v1853
    %v1871 = vsub.f32 %v1841, %v1853
    %v1872 = vsub.f32 %v1842, %v1853
    %v1873 = vsub.f32 %v1843, %v1853
    %1875 = vset.pattern.permute.xlu0 0
    %1876 = vperm.xlu0 %1875, %v1869
    %v1877 = vpop.permute.xlu0 %1876
    %v1879 = vmul.f32 %v1870, %v1877
    %v1880 = vmul.f32 %v1871, %v1877
    %v1881 = vmul.f32 %v1872, %v1877
    %v1882 = vmul.f32 %v1873, %v1877
    %1884 = vset.pattern.permute.xlu0 0
    %1885 = vperm.xlu0 %1884, %v1847
    %v1886 = vpop.permute.xlu0 %1885
    %v1888 = vadd.f32 %v1879, %v1886
    %v1889 = vadd.f32 %v1880, %v1886
    %v1890 = vadd.f32 %v1881, %v1886
    %v1891 = vadd.f32 %v1882, %v1886
    %v1892 = vmax.f32 %v1888, 0.0
    %v1893 = vmax.f32 %v1889, 0.0
    %v1894 = vmax.f32 %v1890, 0.0
    %v1895 = vmax.f32 %v1891, 0.0
    %v1896 = vld [vmem:[%s3] sm:$0xff]
    %v1897 = vld [vmem:[%s4] sm:$0xff]
    %1899 = vset.pattern.permute.xlu0 0
    %1900 = vperm.xlu0 %1899, %v1897
    %v1901 = vpop.permute.xlu0 %1900
    %vm1903 = vcmask 64512
    %v1905 = vsel %vm1903, %v1896, 0
    %1907 = vmatprep.subr.mxu0 %v1893
    %1908 = vmatpush1.msra.mxu0 %v1892
    %1909 = vmatprep.subr.mxu0 0.0
    %1910 = vmatpush1.msra.mxu0 0.0
    %1911 = vmatprep.subr.mxu0 0.0
    %1912 = vmatpush1.msra.mxu0 0.0
    %1913 = vmatprep.subr.mxu0 0.0
    %1914 = vmatpush1.msra.mxu0 0.0
    %1915 = vmatprep.subr.mxu0 0.0
    %1916 = vmatpush1.msra.mxu0 0.0
    %1917 = vmatprep.subr.mxu0 0.0
    %1918 = vmatpush1.msra.mxu0 0.0
    %1919 = vmatprep.subr.mxu0 0.0
    %1920 = vmatpush1.msra.mxu0 0.0
    %1921 = vmatprep.subr.mxu0 0.0
    %1922 = vmatpush1.msra.mxu0 0.0
    %1923 = vmatprep.subr.mxu0 0.0
    %1924 = vmatpush1.msra.mxu0 0.0
    %1925 = vmatprep.subr.mxu0 0.0
    %1926 = vmatpush1.msra.mxu0 0.0
    %1927 = vmatprep.subr.mxu0 0.0
    %1928 = vmatpush1.msra.mxu0 0.0
    %1929 = vmatprep.subr.mxu0 0.0
    %1930 = vmatpush1.msra.mxu0 0.0
    %1931 = vmatprep.subr.mxu0 0.0
    %1932 = vmatpush1.msra.mxu0 0.0
    %1933 = vmatprep.subr.mxu0 0.0
    %1934 = vmatpush1.msra.mxu0 0.0
    %1935 = vmatprep.subr.mxu0 0.0
    %1936 = vmatpush1.msra.mxu0 0.0
    %1937 = vmatprep.subr.mxu0 0.0
    %1938 = vmatpush1.msra.mxu0 0.0
    %1939 = vmatprep.subr.mxu0 0.0
    %1940 = vmatpush1.msra.mxu0 0.0
    %1941 = vmatprep.subr.mxu0 0.0
    %1942 = vmatpush1.msra.mxu0 0.0
    %1943 = vmatprep.subr.mxu0 0.0
    %1944 = vmatpush1.msra.mxu0 0.0
    %1945 = vmatprep.subr.mxu0 0.0
    %1946 = vmatpush1.msra.mxu0 0.0
    %1947 = vmatprep.subr.mxu0 0.0
    %1948 = vmatpush1.msra.mxu0 0.0
    %1949 = vmatprep.subr.mxu0 0.0
    %1950 = vmatpush1.msra.mxu0 0.0
    %1951 = vmatprep.subr.mxu0 0.0
    %1952 = vmatpush1.msra.mxu0 0.0
    %1953 = vmatprep.subr.mxu0 0.0
    %1954 = vmatpush1.msra.mxu0 0.0
    %1955 = vmatprep.subr.mxu0 0.0
    %1956 = vmatpush1.msra.mxu0 0.0
    %1957 = vmatprep.subr.mxu0 0.0
    %1958 = vmatpush1.msra.mxu0 0.0
    %1959 = vmatprep.subr.mxu0 0.0
    %1960 = vmatpush1.msra.mxu0 0.0
    %1961 = vmatprep.subr.mxu0 0.0
    %1962 = vmatpush1.msra.mxu0 0.0
    %1963 = vmatprep.subr.mxu0 0.0
    %1964 = vmatpush1.msra.mxu0 0.0
    %1965 = vmatprep.subr.mxu0 0.0
    %1966 = vmatpush1.msra.mxu0 0.0
    %1967 = vmatprep.subr.mxu0 0.0
    %1968 = vmatpush1.msra.mxu0 0.0
    %1969 = vmatprep.subr.mxu0 0.0
    %1970 = vmatpush1.msra.mxu0 0.0
    %1971 = vmatprep.mubr.f32.mxu0 0.0
    %1972 = vmatmul.mubr.f32.gmra.mrb[0].mxu0 %v1905
    %v1973 = vpop.f32.mrb[0].mxu0
    %v1974 = vadd.f32 %v1901, %v1973
    %v1975 = vpop.f32.mrb[0].mxu0
    %v1976 = vadd.f32 %v1901, %v1975
    %1977 = vdwg.mxu0
    %1978 = vmatprep.subr.mxu0 %v1895
    %1979 = vmatpush1.msra.mxu0 %v1894
    %1980 = vmatprep.subr.mxu0 0.0
    %1981 = vmatpush1.msra.mxu0 0.0
    %1982 = vmatprep.subr.mxu0 0.0
    %1983 = vmatpush1.msra.mxu0 0.0
    %1984 = vmatprep.subr.mxu0 0.0
    %1985 = vmatpush1.msra.mxu0 0.0
    %1986 = vmatprep.subr.mxu0 0.0
    %1987 = vmatpush1.msra.mxu0 0.0
    %1988 = vmatprep.subr.mxu0 0.0
    %1989 = vmatpush1.msra.mxu0 0.0
    %1990 = vmatprep.subr.mxu0 0.0
    %1991 = vmatpush1.msra.mxu0 0.0
    %1992 = vmatprep.subr.mxu0 0.0
    %1993 = vmatpush1.msra.mxu0 0.0
    %1994 = vmatprep.subr.mxu0 0.0
    %1995 = vmatpush1.msra.mxu0 0.0
    %1996 = vmatprep.subr.mxu0 0.0
    %1997 = vmatpush1.msra.mxu0 0.0
    %1998 = vmatprep.subr.mxu0 0.0
    %1999 = vmatpush1.msra.mxu0 0.0
    %2000 = vmatprep.subr.mxu0 0.0
    %2001 = vmatpush1.msra.mxu0 0.0
    %2002 = vmatprep.subr.mxu0 0.0
    %2003 = vmatpush1.msra.mxu0 0.0
    %2004 = vmatprep.subr.mxu0 0.0
    %2005 = vmatpush1.msra.mxu0 0.0
    %2006 = vmatprep.subr.mxu0 0.0
    %2007 = vmatpush1.msra.mxu0 0.0
    %2008 = vmatprep.subr.mxu0 0.0
    %2009 = vmatpush1.msra.mxu0 0.0
    %2010 = vmatprep.subr.mxu0 0.0
    %2011 = vmatpush1.msra.mxu0 0.0
    %2012 = vmatprep.subr.mxu0 0.0
    %2013 = vmatpush1.msra.mxu0 0.0
    %2014 = vmatprep.subr.mxu0 0.0
    %2015 = vmatpush1.msra.mxu0 0.0
    %2016 = vmatprep.subr.mxu0 0.0
    %2017 = vmatpush1.msra.mxu0 0.0
    %2018 = vmatprep.subr.mxu0 0.0
    %2019 = vmatpush1.msra.mxu0 0.0
    %2020 = vmatprep.subr.mxu0 0.0
    %2021 = vmatpush1.msra.mxu0 0.0
    %2022 = vmatprep.subr.mxu0 0.0
    %2023 = vmatpush1.msra.mxu0 0.0
    %2024 = vmatprep.subr.mxu0 0.0
    %2025 = vmatpush1.msra.mxu0 0.0
    %2026 = vmatprep.subr.mxu0 0.0
    %2027 = vmatpush1.msra.mxu0 0.0
    %2028 = vmatprep.subr.mxu0 0.0
    %2029 = vmatpush1.msra.mxu0 0.0
    %2030 = vmatprep.subr.mxu0 0.0
    %2031 = vmatpush1.msra.mxu0 0.0
    %2032 = vmatprep.subr.mxu0 0.0
    %2033 = vmatpush1.msra.mxu0 0.0
    %2034 = vmatprep.subr.mxu0 0.0
    %2035 = vmatpush1.msra.mxu0 0.0
    %2036 = vmatprep.subr.mxu0 0.0
    %2037 = vmatpush1.msra.mxu0 0.0
    %2038 = vmatprep.subr.mxu0 0.0
    %2039 = vmatpush1.msra.mxu0 0.0
    %2040 = vmatprep.subr.mxu0 0.0
    %2041 = vmatpush1.msra.mxu0 0.0
    %2042 = vmatprep.mubr.f32.mxu0 0.0
    %2043 = vmatmul.mubr.f32.gmra.mrb[0].mxu0 %v1905
    %v2044 = vpop.f32.mrb[0].mxu0
    %v2045 = vadd.f32 %v1901, %v2044
    %v2046 = vpop.f32.mrb[0].mxu0
    %v2047 = vadd.f32 %v1901, %v2046
    %2048 = vdwg.mxu0
    %s2049 = scalar_lea.vmem %s4, 8
    %v2050 = vld [vmem:[%s2049] sm:$0xff]
    %s2051 = scalar_lea.vmem %s4, 16
    %v2052 = vld [vmem:[%s2051] sm:$0xff]
    %v2053 = vadd.f32 %v1974, %v1976
    %v2054 = vadd.f32 %v2053, %v2045
    %v2055 = vadd.f32 %v2054, %v2047
    %2056 = vadd.xlane.f32.xlu0 %v2055
    %v2057 = vpop.xlane.xlu0 %2056
    %v2058 = vmul.f32 %v2057, 0.001953125
    %v2059 = vmul.f32 %v1974, %v1974
    %v2060 = vmul.f32 %v1976, %v1976
    %v2061 = vmul.f32 %v2045, %v2045
    %v2062 = vmul.f32 %v2047, %v2047
    %v2063 = vadd.f32 %v2059, %v2060
    %v2064 = vadd.f32 %v2063, %v2061
    %v2065 = vadd.f32 %v2064, %v2062
    %2066 = vadd.xlane.f32.xlu0 %v2065
    %v2067 = vpop.xlane.xlu0 %2066
    %v2068 = vmul.f32 %v2067, 0.001953125
    %v2069 = vmul.f32 %v2058, %v2058
    %v2070 = vsub.f32 %v2068, %v2069
    %v2071 = vmax.f32 %v2070, 0.0
    %v2072 = vadd.f32 %v2071, 1e-05
    %v2073 = vrsqrt.pop %v2072
    %v2074 = vmul.f32 %v2073, %v2050
    %v2075 = vsub.f32 %v1974, %v2058
    %v2076 = vsub.f32 %v1976, %v2058
    %v2077 = vsub.f32 %v2045, %v2058
    %v2078 = vsub.f32 %v2047, %v2058
    %2080 = vset.pattern.permute.xlu0 0
    %2081 = vperm.xlu0 %2080, %v2074
    %v2082 = vpop.permute.xlu0 %2081
    %v2084 = vmul.f32 %v2075, %v2082
    %v2085 = vmul.f32 %v2076, %v2082
    %v2086 = vmul.f32 %v2077, %v2082
    %v2087 = vmul.f32 %v2078, %v2082
    %2089 = vset.pattern.permute.xlu0 0
    %2090 = vperm.xlu0 %2089, %v2052
    %v2091 = vpop.permute.xlu0 %2090
    %v2093 = vadd.f32 %v2084, %v2091
    %v2094 = vadd.f32 %v2085, %v2091
    %v2095 = vadd.f32 %v2086, %v2091
    %v2096 = vadd.f32 %v2087, %v2091
    %v2097 = vmax.f32 %v2093, 0.0
    %v2098 = vmax.f32 %v2094, 0.0
    %v2099 = vmax.f32 %v2095, 0.0
    %v2100 = vmax.f32 %v2096, 0.0
    %s2101 = scalar_lea.vmem %s5, 32
    %v2102 = vld [vmem:[%s2101] sm:$0xff]
    %2103 = vrot.lane.b32.xlu0 %v2097, 17
    %v2104 = vpop.permute.xlu0 %2103
    %2105 = vrot.lane.b32.xlu0 %v2098, 17
    %v2106 = vpop.permute.xlu0 %2105
    %2107 = vrot.lane.b32.xlu0 %v2099, 17
    %v2108 = vpop.permute.xlu0 %2107
    %2109 = vrot.lane.b32.xlu0 %v2100, 17
    %v2110 = vpop.permute.xlu0 %2109
    %v2111 = vsel %vm84, %v2108, %v2110
    %v2112 = vsel %vm84, %v2106, %v2108
    %v2113 = vsel %vm84, %v2104, %v2106
    %v2114 = vsel %vm84, %v2110, %v2104
    %v2115 = vmul.f32 %v2114, %v93
    %v2116 = vmul.f32 %v2113, %v97
    %v2117 = vmul.f32 %v2112, %v101
    %v2118 = vmul.f32 %v2111, %v105
    %v2119 = vld [vmem:[%s5] sm:$0xff]
    %v2121 = vsel %vm1903, %v2119, 0
    %2123 = vmatprep.subr.mxu0 %v2116
    %2124 = vmatpush1.msra.mxu0 %v2115
    %2125 = vmatprep.subr.mxu0 0.0
    %2126 = vmatpush1.msra.mxu0 0.0
    %2127 = vmatprep.subr.mxu0 0.0
    %2128 = vmatpush1.msra.mxu0 0.0
    %2129 = vmatprep.subr.mxu0 0.0
    %2130 = vmatpush1.msra.mxu0 0.0
    %2131 = vmatprep.subr.mxu0 0.0
    %2132 = vmatpush1.msra.mxu0 0.0
    %2133 = vmatprep.subr.mxu0 0.0
    %2134 = vmatpush1.msra.mxu0 0.0
    %2135 = vmatprep.subr.mxu0 0.0
    %2136 = vmatpush1.msra.mxu0 0.0
    %2137 = vmatprep.subr.mxu0 0.0
    %2138 = vmatpush1.msra.mxu0 0.0
    %2139 = vmatprep.subr.mxu0 0.0
    %2140 = vmatpush1.msra.mxu0 0.0
    %2141 = vmatprep.subr.mxu0 0.0
    %2142 = vmatpush1.msra.mxu0 0.0
    %2143 = vmatprep.subr.mxu0 0.0
    %2144 = vmatpush1.msra.mxu0 0.0
    %2145 = vmatprep.subr.mxu0 0.0
    %2146 = vmatpush1.msra.mxu0 0.0
    %2147 = vmatprep.subr.mxu0 0.0
    %2148 = vmatpush1.msra.mxu0 0.0
    %2149 = vmatprep.subr.mxu0 0.0
    %2150 = vmatpush1.msra.mxu0 0.0
    %2151 = vmatprep.subr.mxu0 0.0
    %2152 = vmatpush1.msra.mxu0 0.0
    %2153 = vmatprep.subr.mxu0 0.0
    %2154 = vmatpush1.msra.mxu0 0.0
    %2155 = vmatprep.subr.mxu0 0.0
    %2156 = vmatpush1.msra.mxu0 0.0
    %2157 = vmatprep.subr.mxu0 0.0
    %2158 = vmatpush1.msra.mxu0 0.0
    %2159 = vmatprep.subr.mxu0 0.0
    %2160 = vmatpush1.msra.mxu0 0.0
    %2161 = vmatprep.subr.mxu0 0.0
    %2162 = vmatpush1.msra.mxu0 0.0
    %2163 = vmatprep.subr.mxu0 0.0
    %2164 = vmatpush1.msra.mxu0 0.0
    %2165 = vmatprep.subr.mxu0 0.0
    %2166 = vmatpush1.msra.mxu0 0.0
    %2167 = vmatprep.subr.mxu0 0.0
    %2168 = vmatpush1.msra.mxu0 0.0
    %2169 = vmatprep.subr.mxu0 0.0
    %2170 = vmatpush1.msra.mxu0 0.0
    %2171 = vmatprep.subr.mxu0 0.0
    %2172 = vmatpush1.msra.mxu0 0.0
    %2173 = vmatprep.subr.mxu0 0.0
    %2174 = vmatpush1.msra.mxu0 0.0
    %2175 = vmatprep.subr.mxu0 0.0
    %2176 = vmatpush1.msra.mxu0 0.0
    %2177 = vmatprep.subr.mxu0 0.0
    %2178 = vmatpush1.msra.mxu0 0.0
    %2179 = vmatprep.subr.mxu0 0.0
    %2180 = vmatpush1.msra.mxu0 0.0
    %2181 = vmatprep.subr.mxu0 0.0
    %2182 = vmatpush1.msra.mxu0 0.0
    %2183 = vmatprep.subr.mxu0 0.0
    %2184 = vmatpush1.msra.mxu0 0.0
    %2185 = vmatprep.subr.mxu0 0.0
    %2186 = vmatpush1.msra.mxu0 0.0
    %2187 = vmatprep.mubr.f32.mxu0 0.0
    %2188 = vmatmul.mubr.f32.gmra.mrb[0].mxu0 %v2121
    %v2189 = vpop.f32.mrb[0].mxu0
    %v2190 = vadd.f32 0.0, %v2189
    %v2191 = vpop.f32.mrb[0].mxu0
    %v2192 = vadd.f32 0.0, %v2191
    %2193 = vdwg.mxu0
    %2194 = vmatprep.subr.mxu0 %v2118
    %2195 = vmatpush1.msra.mxu0 %v2117
    %2196 = vmatprep.subr.mxu0 0.0
    %2197 = vmatpush1.msra.mxu0 0.0
    %2198 = vmatprep.subr.mxu0 0.0
    %2199 = vmatpush1.msra.mxu0 0.0
    %2200 = vmatprep.subr.mxu0 0.0
    %2201 = vmatpush1.msra.mxu0 0.0
    %2202 = vmatprep.subr.mxu0 0.0
    %2203 = vmatpush1.msra.mxu0 0.0
    %2204 = vmatprep.subr.mxu0 0.0
    %2205 = vmatpush1.msra.mxu0 0.0
    %2206 = vmatprep.subr.mxu0 0.0
    %2207 = vmatpush1.msra.mxu0 0.0
    %2208 = vmatprep.subr.mxu0 0.0
    %2209 = vmatpush1.msra.mxu0 0.0
    %2210 = vmatprep.subr.mxu0 0.0
    %2211 = vmatpush1.msra.mxu0 0.0
    %2212 = vmatprep.subr.mxu0 0.0
    %2213 = vmatpush1.msra.mxu0 0.0
    %2214 = vmatprep.subr.mxu0 0.0
    %2215 = vmatpush1.msra.mxu0 0.0
    %2216 = vmatprep.subr.mxu0 0.0
    %2217 = vmatpush1.msra.mxu0 0.0
    %2218 = vmatprep.subr.mxu0 0.0
    %2219 = vmatpush1.msra.mxu0 0.0
    %2220 = vmatprep.subr.mxu0 0.0
    %2221 = vmatpush1.msra.mxu0 0.0
    %2222 = vmatprep.subr.mxu0 0.0
    %2223 = vmatpush1.msra.mxu0 0.0
    %2224 = vmatprep.subr.mxu0 0.0
    %2225 = vmatpush1.msra.mxu0 0.0
    %2226 = vmatprep.subr.mxu0 0.0
    %2227 = vmatpush1.msra.mxu0 0.0
    %2228 = vmatprep.subr.mxu0 0.0
    %2229 = vmatpush1.msra.mxu0 0.0
    %2230 = vmatprep.subr.mxu0 0.0
    %2231 = vmatpush1.msra.mxu0 0.0
    %2232 = vmatprep.subr.mxu0 0.0
    %2233 = vmatpush1.msra.mxu0 0.0
    %2234 = vmatprep.subr.mxu0 0.0
    %2235 = vmatpush1.msra.mxu0 0.0
    %2236 = vmatprep.subr.mxu0 0.0
    %2237 = vmatpush1.msra.mxu0 0.0
    %2238 = vmatprep.subr.mxu0 0.0
    %2239 = vmatpush1.msra.mxu0 0.0
    %2240 = vmatprep.subr.mxu0 0.0
    %2241 = vmatpush1.msra.mxu0 0.0
    %2242 = vmatprep.subr.mxu0 0.0
    %2243 = vmatpush1.msra.mxu0 0.0
    %2244 = vmatprep.subr.mxu0 0.0
    %2245 = vmatpush1.msra.mxu0 0.0
    %2246 = vmatprep.subr.mxu0 0.0
    %2247 = vmatpush1.msra.mxu0 0.0
    %2248 = vmatprep.subr.mxu0 0.0
    %2249 = vmatpush1.msra.mxu0 0.0
    %2250 = vmatprep.subr.mxu0 0.0
    %2251 = vmatpush1.msra.mxu0 0.0
    %2252 = vmatprep.subr.mxu0 0.0
    %2253 = vmatpush1.msra.mxu0 0.0
    %2254 = vmatprep.subr.mxu0 0.0
    %2255 = vmatpush1.msra.mxu0 0.0
    %2256 = vmatprep.subr.mxu0 0.0
    %2257 = vmatpush1.msra.mxu0 0.0
    %2258 = vmatprep.mubr.f32.mxu0 0.0
    %2259 = vmatmul.mubr.f32.gmra.mrb[0].mxu0 %v2121
    %v2260 = vpop.f32.mrb[0].mxu0
    %v2261 = vadd.f32 0.0, %v2260
    %v2262 = vpop.f32.mrb[0].mxu0
    %v2263 = vadd.f32 0.0, %v2262
    %2264 = vdwg.mxu0
    %v2266 = vsel %vm1903, %v2102, 0
    %2268 = vmatprep.subr.mxu0 %v2098
    %2269 = vmatpush1.msra.mxu0 %v2097
    %2270 = vmatprep.subr.mxu0 0.0
    %2271 = vmatpush1.msra.mxu0 0.0
    %2272 = vmatprep.subr.mxu0 0.0
    %2273 = vmatpush1.msra.mxu0 0.0
    %2274 = vmatprep.subr.mxu0 0.0
    %2275 = vmatpush1.msra.mxu0 0.0
    %2276 = vmatprep.subr.mxu0 0.0
    %2277 = vmatpush1.msra.mxu0 0.0
    %2278 = vmatprep.subr.mxu0 0.0
    %2279 = vmatpush1.msra.mxu0 0.0
    %2280 = vmatprep.subr.mxu0 0.0
    %2281 = vmatpush1.msra.mxu0 0.0
    %2282 = vmatprep.subr.mxu0 0.0
    %2283 = vmatpush1.msra.mxu0 0.0
    %2284 = vmatprep.subr.mxu0 0.0
    %2285 = vmatpush1.msra.mxu0 0.0
    %2286 = vmatprep.subr.mxu0 0.0
    %2287 = vmatpush1.msra.mxu0 0.0
    %2288 = vmatprep.subr.mxu0 0.0
    %2289 = vmatpush1.msra.mxu0 0.0
    %2290 = vmatprep.subr.mxu0 0.0
    %2291 = vmatpush1.msra.mxu0 0.0
    %2292 = vmatprep.subr.mxu0 0.0
    %2293 = vmatpush1.msra.mxu0 0.0
    %2294 = vmatprep.subr.mxu0 0.0
    %2295 = vmatpush1.msra.mxu0 0.0
    %2296 = vmatprep.subr.mxu0 0.0
    %2297 = vmatpush1.msra.mxu0 0.0
    %2298 = vmatprep.subr.mxu0 0.0
    %2299 = vmatpush1.msra.mxu0 0.0
    %2300 = vmatprep.subr.mxu0 0.0
    %2301 = vmatpush1.msra.mxu0 0.0
    %2302 = vmatprep.subr.mxu0 0.0
    %2303 = vmatpush1.msra.mxu0 0.0
    %2304 = vmatprep.subr.mxu0 0.0
    %2305 = vmatpush1.msra.mxu0 0.0
    %2306 = vmatprep.subr.mxu0 0.0
    %2307 = vmatpush1.msra.mxu0 0.0
    %2308 = vmatprep.subr.mxu0 0.0
    %2309 = vmatpush1.msra.mxu0 0.0
    %2310 = vmatprep.subr.mxu0 0.0
    %2311 = vmatpush1.msra.mxu0 0.0
    %2312 = vmatprep.subr.mxu0 0.0
    %2313 = vmatpush1.msra.mxu0 0.0
    %2314 = vmatprep.subr.mxu0 0.0
    %2315 = vmatpush1.msra.mxu0 0.0
    %2316 = vmatprep.subr.mxu0 0.0
    %2317 = vmatpush1.msra.mxu0 0.0
    %2318 = vmatprep.subr.mxu0 0.0
    %2319 = vmatpush1.msra.mxu0 0.0
    %2320 = vmatprep.subr.mxu0 0.0
    %2321 = vmatpush1.msra.mxu0 0.0
    %2322 = vmatprep.subr.mxu0 0.0
    %2323 = vmatpush1.msra.mxu0 0.0
    %2324 = vmatprep.subr.mxu0 0.0
    %2325 = vmatpush1.msra.mxu0 0.0
    %2326 = vmatprep.subr.mxu0 0.0
    %2327 = vmatpush1.msra.mxu0 0.0
    %2328 = vmatprep.subr.mxu0 0.0
    %2329 = vmatpush1.msra.mxu0 0.0
    %2330 = vmatprep.subr.mxu0 0.0
    %2331 = vmatpush1.msra.mxu0 0.0
    %2332 = vmatprep.mubr.f32.mxu0 0.0
    %2333 = vmatmul.mubr.f32.gmra.mrb[0].mxu0 %v2266
    %v2334 = vpop.f32.mrb[0].mxu0
    %v2335 = vadd.f32 %v2190, %v2334
    %v2336 = vpop.f32.mrb[0].mxu0
    %v2337 = vadd.f32 %v2192, %v2336
    %2338 = vdwg.mxu0
    %2339 = vmatprep.subr.mxu0 %v2100
    %2340 = vmatpush1.msra.mxu0 %v2099
    %2341 = vmatprep.subr.mxu0 0.0
    %2342 = vmatpush1.msra.mxu0 0.0
    %2343 = vmatprep.subr.mxu0 0.0
    %2344 = vmatpush1.msra.mxu0 0.0
    %2345 = vmatprep.subr.mxu0 0.0
    %2346 = vmatpush1.msra.mxu0 0.0
    %2347 = vmatprep.subr.mxu0 0.0
    %2348 = vmatpush1.msra.mxu0 0.0
    %2349 = vmatprep.subr.mxu0 0.0
    %2350 = vmatpush1.msra.mxu0 0.0
    %2351 = vmatprep.subr.mxu0 0.0
    %2352 = vmatpush1.msra.mxu0 0.0
    %2353 = vmatprep.subr.mxu0 0.0
    %2354 = vmatpush1.msra.mxu0 0.0
    %2355 = vmatprep.subr.mxu0 0.0
    %2356 = vmatpush1.msra.mxu0 0.0
    %2357 = vmatprep.subr.mxu0 0.0
    %2358 = vmatpush1.msra.mxu0 0.0
    %2359 = vmatprep.subr.mxu0 0.0
    %2360 = vmatpush1.msra.mxu0 0.0
    %2361 = vmatprep.subr.mxu0 0.0
    %2362 = vmatpush1.msra.mxu0 0.0
    %2363 = vmatprep.subr.mxu0 0.0
    %2364 = vmatpush1.msra.mxu0 0.0
    %2365 = vmatprep.subr.mxu0 0.0
    %2366 = vmatpush1.msra.mxu0 0.0
    %2367 = vmatprep.subr.mxu0 0.0
    %2368 = vmatpush1.msra.mxu0 0.0
    %2369 = vmatprep.subr.mxu0 0.0
    %2370 = vmatpush1.msra.mxu0 0.0
    %2371 = vmatprep.subr.mxu0 0.0
    %2372 = vmatpush1.msra.mxu0 0.0
    %2373 = vmatprep.subr.mxu0 0.0
    %2374 = vmatpush1.msra.mxu0 0.0
    %2375 = vmatprep.subr.mxu0 0.0
    %2376 = vmatpush1.msra.mxu0 0.0
    %2377 = vmatprep.subr.mxu0 0.0
    %2378 = vmatpush1.msra.mxu0 0.0
    %2379 = vmatprep.subr.mxu0 0.0
    %2380 = vmatpush1.msra.mxu0 0.0
    %2381 = vmatprep.subr.mxu0 0.0
    %2382 = vmatpush1.msra.mxu0 0.0
    %2383 = vmatprep.subr.mxu0 0.0
    %2384 = vmatpush1.msra.mxu0 0.0
    %2385 = vmatprep.subr.mxu0 0.0
    %2386 = vmatpush1.msra.mxu0 0.0
    %2387 = vmatprep.subr.mxu0 0.0
    %2388 = vmatpush1.msra.mxu0 0.0
    %2389 = vmatprep.subr.mxu0 0.0
    %2390 = vmatpush1.msra.mxu0 0.0
    %2391 = vmatprep.subr.mxu0 0.0
    %2392 = vmatpush1.msra.mxu0 0.0
    %2393 = vmatprep.subr.mxu0 0.0
    %2394 = vmatpush1.msra.mxu0 0.0
    %2395 = vmatprep.subr.mxu0 0.0
    %2396 = vmatpush1.msra.mxu0 0.0
    %2397 = vmatprep.subr.mxu0 0.0
    %2398 = vmatpush1.msra.mxu0 0.0
    %2399 = vmatprep.subr.mxu0 0.0
    %2400 = vmatpush1.msra.mxu0 0.0
    %2401 = vmatprep.subr.mxu0 0.0
    %2402 = vmatpush1.msra.mxu0 0.0
    %2403 = vmatprep.mubr.f32.mxu0 0.0
    %2404 = vmatmul.mubr.f32.gmra.mrb[0].mxu0 %v2266
    %v2405 = vpop.f32.mrb[0].mxu0
    %v2406 = vadd.f32 %v2261, %v2405
    %v2407 = vpop.f32.mrb[0].mxu0
    %v2408 = vadd.f32 %v2263, %v2407
    %2409 = vdwg.mxu0
    %2410 = vrot.lane.b32.xlu0 %v2097, 16
    %v2411 = vpop.permute.xlu0 %2410
    %2412 = vrot.lane.b32.xlu0 %v2098, 16
    %v2413 = vpop.permute.xlu0 %2412
    %2414 = vrot.lane.b32.xlu0 %v2099, 16
    %v2415 = vpop.permute.xlu0 %2414
    %2416 = vrot.lane.b32.xlu0 %v2100, 16
    %v2417 = vpop.permute.xlu0 %2416
    %v2418 = vsel %vm435, %v2415, %v2417
    %v2419 = vsel %vm435, %v2413, %v2415
    %v2420 = vsel %vm435, %v2411, %v2413
    %v2421 = vsel %vm435, %v2417, %v2411
    %v2422 = vmul.f32 %v2421, %v444
    %v2423 = vmul.f32 %v2420, %v448
    %v2424 = vmul.f32 %v2419, %v452
    %v2425 = vmul.f32 %v2418, %v456
    %s2426 = scalar_lea.vmem %s5, 8
    %v2427 = vld [vmem:[%s2426] sm:$0xff]
    %v2429 = vsel %vm1903, %v2427, 0
    %2431 = vmatprep.subr.mxu0 %v2423
    %2432 = vmatpush1.msra.mxu0 %v2422
    %2433 = vmatprep.subr.mxu0 0.0
    %2434 = vmatpush1.msra.mxu0 0.0
    %2435 = vmatprep.subr.mxu0 0.0
    %2436 = vmatpush1.msra.mxu0 0.0
    %2437 = vmatprep.subr.mxu0 0.0
    %2438 = vmatpush1.msra.mxu0 0.0
    %2439 = vmatprep.subr.mxu0 0.0
    %2440 = vmatpush1.msra.mxu0 0.0
    %2441 = vmatprep.subr.mxu0 0.0
    %2442 = vmatpush1.msra.mxu0 0.0
    %2443 = vmatprep.subr.mxu0 0.0
    %2444 = vmatpush1.msra.mxu0 0.0
    %2445 = vmatprep.subr.mxu0 0.0
    %2446 = vmatpush1.msra.mxu0 0.0
    %2447 = vmatprep.subr.mxu0 0.0
    %2448 = vmatpush1.msra.mxu0 0.0
    %2449 = vmatprep.subr.mxu0 0.0
    %2450 = vmatpush1.msra.mxu0 0.0
    %2451 = vmatprep.subr.mxu0 0.0
    %2452 = vmatpush1.msra.mxu0 0.0
    %2453 = vmatprep.subr.mxu0 0.0
    %2454 = vmatpush1.msra.mxu0 0.0
    %2455 = vmatprep.subr.mxu0 0.0
    %2456 = vmatpush1.msra.mxu0 0.0
    %2457 = vmatprep.subr.mxu0 0.0
    %2458 = vmatpush1.msra.mxu0 0.0
    %2459 = vmatprep.subr.mxu0 0.0
    %2460 = vmatpush1.msra.mxu0 0.0
    %2461 = vmatprep.subr.mxu0 0.0
    %2462 = vmatpush1.msra.mxu0 0.0
    %2463 = vmatprep.subr.mxu0 0.0
    %2464 = vmatpush1.msra.mxu0 0.0
    %2465 = vmatprep.subr.mxu0 0.0
    %2466 = vmatpush1.msra.mxu0 0.0
    %2467 = vmatprep.subr.mxu0 0.0
    %2468 = vmatpush1.msra.mxu0 0.0
    %2469 = vmatprep.subr.mxu0 0.0
    %2470 = vmatpush1.msra.mxu0 0.0
    %2471 = vmatprep.subr.mxu0 0.0
    %2472 = vmatpush1.msra.mxu0 0.0
    %2473 = vmatprep.subr.mxu0 0.0
    %2474 = vmatpush1.msra.mxu0 0.0
    %2475 = vmatprep.subr.mxu0 0.0
    %2476 = vmatpush1.msra.mxu0 0.0
    %2477 = vmatprep.subr.mxu0 0.0
    %2478 = vmatpush1.msra.mxu0 0.0
    %2479 = vmatprep.subr.mxu0 0.0
    %2480 = vmatpush1.msra.mxu0 0.0
    %2481 = vmatprep.subr.mxu0 0.0
    %2482 = vmatpush1.msra.mxu0 0.0
    %2483 = vmatprep.subr.mxu0 0.0
    %2484 = vmatpush1.msra.mxu0 0.0
    %2485 = vmatprep.subr.mxu0 0.0
    %2486 = vmatpush1.msra.mxu0 0.0
    %2487 = vmatprep.subr.mxu0 0.0
    %2488 = vmatpush1.msra.mxu0 0.0
    %2489 = vmatprep.subr.mxu0 0.0
    %2490 = vmatpush1.msra.mxu0 0.0
    %2491 = vmatprep.subr.mxu0 0.0
    %2492 = vmatpush1.msra.mxu0 0.0
    %2493 = vmatprep.subr.mxu0 0.0
    %2494 = vmatpush1.msra.mxu0 0.0
    %2495 = vmatprep.mubr.f32.mxu0 0.0
    %2496 = vmatmul.mubr.f32.gmra.mrb[0].mxu0 %v2429
    %v2497 = vpop.f32.mrb[0].mxu0
    %v2498 = vadd.f32 0.0, %v2497
    %v2499 = vpop.f32.mrb[0].mxu0
    %v2500 = vadd.f32 0.0, %v2499
    %2501 = vdwg.mxu0
    %2502 = vmatprep.subr.mxu0 %v2425
    %2503 = vmatpush1.msra.mxu0 %v2424
    %2504 = vmatprep.subr.mxu0 0.0
    %2505 = vmatpush1.msra.mxu0 0.0
    %2506 = vmatprep.subr.mxu0 0.0
    %2507 = vmatpush1.msra.mxu0 0.0
    %2508 = vmatprep.subr.mxu0 0.0
    %2509 = vmatpush1.msra.mxu0 0.0
    %2510 = vmatprep.subr.mxu0 0.0
    %2511 = vmatpush1.msra.mxu0 0.0
    %2512 = vmatprep.subr.mxu0 0.0
    %2513 = vmatpush1.msra.mxu0 0.0
    %2514 = vmatprep.subr.mxu0 0.0
    %2515 = vmatpush1.msra.mxu0 0.0
    %2516 = vmatprep.subr.mxu0 0.0
    %2517 = vmatpush1.msra.mxu0 0.0
    %2518 = vmatprep.subr.mxu0 0.0
    %2519 = vmatpush1.msra.mxu0 0.0
    %2520 = vmatprep.subr.mxu0 0.0
    %2521 = vmatpush1.msra.mxu0 0.0
    %2522 = vmatprep.subr.mxu0 0.0
    %2523 = vmatpush1.msra.mxu0 0.0
    %2524 = vmatprep.subr.mxu0 0.0
    %2525 = vmatpush1.msra.mxu0 0.0
    %2526 = vmatprep.subr.mxu0 0.0
    %2527 = vmatpush1.msra.mxu0 0.0
    %2528 = vmatprep.subr.mxu0 0.0
    %2529 = vmatpush1.msra.mxu0 0.0
    %2530 = vmatprep.subr.mxu0 0.0
    %2531 = vmatpush1.msra.mxu0 0.0
    %2532 = vmatprep.subr.mxu0 0.0
    %2533 = vmatpush1.msra.mxu0 0.0
    %2534 = vmatprep.subr.mxu0 0.0
    %2535 = vmatpush1.msra.mxu0 0.0
    %2536 = vmatprep.subr.mxu0 0.0
    %2537 = vmatpush1.msra.mxu0 0.0
    %2538 = vmatprep.subr.mxu0 0.0
    %2539 = vmatpush1.msra.mxu0 0.0
    %2540 = vmatprep.subr.mxu0 0.0
    %2541 = vmatpush1.msra.mxu0 0.0
    %2542 = vmatprep.subr.mxu0 0.0
    %2543 = vmatpush1.msra.mxu0 0.0
    %2544 = vmatprep.subr.mxu0 0.0
    %2545 = vmatpush1.msra.mxu0 0.0
    %2546 = vmatprep.subr.mxu0 0.0
    %2547 = vmatpush1.msra.mxu0 0.0
    %2548 = vmatprep.subr.mxu0 0.0
    %2549 = vmatpush1.msra.mxu0 0.0
    %2550 = vmatprep.subr.mxu0 0.0
    %2551 = vmatpush1.msra.mxu0 0.0
    %2552 = vmatprep.subr.mxu0 0.0
    %2553 = vmatpush1.msra.mxu0 0.0
    %2554 = vmatprep.subr.mxu0 0.0
    %2555 = vmatpush1.msra.mxu0 0.0
    %2556 = vmatprep.subr.mxu0 0.0
    %2557 = vmatpush1.msra.mxu0 0.0
    %2558 = vmatprep.subr.mxu0 0.0
    %2559 = vmatpush1.msra.mxu0 0.0
    %2560 = vmatprep.subr.mxu0 0.0
    %2561 = vmatpush1.msra.mxu0 0.0
    %2562 = vmatprep.subr.mxu0 0.0
    %2563 = vmatpush1.msra.mxu0 0.0
    %2564 = vmatprep.subr.mxu0 0.0
    %2565 = vmatpush1.msra.mxu0 0.0
    %2566 = vmatprep.mubr.f32.mxu0 0.0
    %2567 = vmatmul.mubr.f32.gmra.mrb[0].mxu0 %v2429
    %v2568 = vpop.f32.mrb[0].mxu0
    %v2569 = vadd.f32 0.0, %v2568
    %v2570 = vpop.f32.mrb[0].mxu0
    %v2571 = vadd.f32 0.0, %v2570
    %2572 = vdwg.mxu0
    %v2573 = vadd.f32 %v2335, %v2498
    %v2574 = vadd.f32 %v2337, %v2500
    %v2575 = vadd.f32 %v2406, %v2569
    %v2576 = vadd.f32 %v2408, %v2571
    %2577 = vrot.lane.b32.xlu0 %v2097, 15
    %v2578 = vpop.permute.xlu0 %2577
    %2579 = vrot.lane.b32.xlu0 %v2098, 15
    %v2580 = vpop.permute.xlu0 %2579
    %2581 = vrot.lane.b32.xlu0 %v2099, 15
    %v2582 = vpop.permute.xlu0 %2581
    %2583 = vrot.lane.b32.xlu0 %v2100, 15
    %v2584 = vpop.permute.xlu0 %2583
    %v2585 = vsel %vm636, %v2582, %v2584
    %v2586 = vsel %vm636, %v2580, %v2582
    %v2587 = vsel %vm636, %v2578, %v2580
    %v2588 = vsel %vm636, %v2584, %v2578
    %v2589 = vmul.f32 %v2588, %v645
    %v2590 = vmul.f32 %v2587, %v649
    %v2591 = vmul.f32 %v2586, %v653
    %v2592 = vmul.f32 %v2585, %v657
    %s2593 = scalar_lea.vmem %s5, 16
    %v2594 = vld [vmem:[%s2593] sm:$0xff]
    %v2596 = vsel %vm1903, %v2594, 0
    %2598 = vmatprep.subr.mxu0 %v2590
    %2599 = vmatpush1.msra.mxu0 %v2589
    %2600 = vmatprep.subr.mxu0 0.0
    %2601 = vmatpush1.msra.mxu0 0.0
    %2602 = vmatprep.subr.mxu0 0.0
    %2603 = vmatpush1.msra.mxu0 0.0
    %2604 = vmatprep.subr.mxu0 0.0
    %2605 = vmatpush1.msra.mxu0 0.0
    %2606 = vmatprep.subr.mxu0 0.0
    %2607 = vmatpush1.msra.mxu0 0.0
    %2608 = vmatprep.subr.mxu0 0.0
    %2609 = vmatpush1.msra.mxu0 0.0
    %2610 = vmatprep.subr.mxu0 0.0
    %2611 = vmatpush1.msra.mxu0 0.0
    %2612 = vmatprep.subr.mxu0 0.0
    %2613 = vmatpush1.msra.mxu0 0.0
    %2614 = vmatprep.subr.mxu0 0.0
    %2615 = vmatpush1.msra.mxu0 0.0
    %2616 = vmatprep.subr.mxu0 0.0
    %2617 = vmatpush1.msra.mxu0 0.0
    %2618 = vmatprep.subr.mxu0 0.0
    %2619 = vmatpush1.msra.mxu0 0.0
    %2620 = vmatprep.subr.mxu0 0.0
    %2621 = vmatpush1.msra.mxu0 0.0
    %2622 = vmatprep.subr.mxu0 0.0
    %2623 = vmatpush1.msra.mxu0 0.0
    %2624 = vmatprep.subr.mxu0 0.0
    %2625 = vmatpush1.msra.mxu0 0.0
    %2626 = vmatprep.subr.mxu0 0.0
    %2627 = vmatpush1.msra.mxu0 0.0
    %2628 = vmatprep.subr.mxu0 0.0
    %2629 = vmatpush1.msra.mxu0 0.0
    %2630 = vmatprep.subr.mxu0 0.0
    %2631 = vmatpush1.msra.mxu0 0.0
    %2632 = vmatprep.subr.mxu0 0.0
    %2633 = vmatpush1.msra.mxu0 0.0
    %2634 = vmatprep.subr.mxu0 0.0
    %2635 = vmatpush1.msra.mxu0 0.0
    %2636 = vmatprep.subr.mxu0 0.0
    %2637 = vmatpush1.msra.mxu0 0.0
    %2638 = vmatprep.subr.mxu0 0.0
    %2639 = vmatpush1.msra.mxu0 0.0
    %2640 = vmatprep.subr.mxu0 0.0
    %2641 = vmatpush1.msra.mxu0 0.0
    %2642 = vmatprep.subr.mxu0 0.0
    %2643 = vmatpush1.msra.mxu0 0.0
    %2644 = vmatprep.subr.mxu0 0.0
    %2645 = vmatpush1.msra.mxu0 0.0
    %2646 = vmatprep.subr.mxu0 0.0
    %2647 = vmatpush1.msra.mxu0 0.0
    %2648 = vmatprep.subr.mxu0 0.0
    %2649 = vmatpush1.msra.mxu0 0.0
    %2650 = vmatprep.subr.mxu0 0.0
    %2651 = vmatpush1.msra.mxu0 0.0
    %2652 = vmatprep.subr.mxu0 0.0
    %2653 = vmatpush1.msra.mxu0 0.0
    %2654 = vmatprep.subr.mxu0 0.0
    %2655 = vmatpush1.msra.mxu0 0.0
    %2656 = vmatprep.subr.mxu0 0.0
    %2657 = vmatpush1.msra.mxu0 0.0
    %2658 = vmatprep.subr.mxu0 0.0
    %2659 = vmatpush1.msra.mxu0 0.0
    %2660 = vmatprep.subr.mxu0 0.0
    %2661 = vmatpush1.msra.mxu0 0.0
    %2662 = vmatprep.mubr.f32.mxu0 0.0
    %2663 = vmatmul.mubr.f32.gmra.mrb[0].mxu0 %v2596
    %v2664 = vpop.f32.mrb[0].mxu0
    %v2665 = vadd.f32 0.0, %v2664
    %v2666 = vpop.f32.mrb[0].mxu0
    %v2667 = vadd.f32 0.0, %v2666
    %2668 = vdwg.mxu0
    %2669 = vmatprep.subr.mxu0 %v2592
    %2670 = vmatpush1.msra.mxu0 %v2591
    %2671 = vmatprep.subr.mxu0 0.0
    %2672 = vmatpush1.msra.mxu0 0.0
    %2673 = vmatprep.subr.mxu0 0.0
    %2674 = vmatpush1.msra.mxu0 0.0
    %2675 = vmatprep.subr.mxu0 0.0
    %2676 = vmatpush1.msra.mxu0 0.0
    %2677 = vmatprep.subr.mxu0 0.0
    %2678 = vmatpush1.msra.mxu0 0.0
    %2679 = vmatprep.subr.mxu0 0.0
    %2680 = vmatpush1.msra.mxu0 0.0
    %2681 = vmatprep.subr.mxu0 0.0
    %2682 = vmatpush1.msra.mxu0 0.0
    %2683 = vmatprep.subr.mxu0 0.0
    %2684 = vmatpush1.msra.mxu0 0.0
    %2685 = vmatprep.subr.mxu0 0.0
    %2686 = vmatpush1.msra.mxu0 0.0
    %2687 = vmatprep.subr.mxu0 0.0
    %2688 = vmatpush1.msra.mxu0 0.0
    %2689 = vmatprep.subr.mxu0 0.0
    %2690 = vmatpush1.msra.mxu0 0.0
    %2691 = vmatprep.subr.mxu0 0.0
    %2692 = vmatpush1.msra.mxu0 0.0
    %2693 = vmatprep.subr.mxu0 0.0
    %2694 = vmatpush1.msra.mxu0 0.0
    %2695 = vmatprep.subr.mxu0 0.0
    %2696 = vmatpush1.msra.mxu0 0.0
    %2697 = vmatprep.subr.mxu0 0.0
    %2698 = vmatpush1.msra.mxu0 0.0
    %2699 = vmatprep.subr.mxu0 0.0
    %2700 = vmatpush1.msra.mxu0 0.0
    %2701 = vmatprep.subr.mxu0 0.0
    %2702 = vmatpush1.msra.mxu0 0.0
    %2703 = vmatprep.subr.mxu0 0.0
    %2704 = vmatpush1.msra.mxu0 0.0
    %2705 = vmatprep.subr.mxu0 0.0
    %2706 = vmatpush1.msra.mxu0 0.0
    %2707 = vmatprep.subr.mxu0 0.0
    %2708 = vmatpush1.msra.mxu0 0.0
    %2709 = vmatprep.subr.mxu0 0.0
    %2710 = vmatpush1.msra.mxu0 0.0
    %2711 = vmatprep.subr.mxu0 0.0
    %2712 = vmatpush1.msra.mxu0 0.0
    %2713 = vmatprep.subr.mxu0 0.0
    %2714 = vmatpush1.msra.mxu0 0.0
    %2715 = vmatprep.subr.mxu0 0.0
    %2716 = vmatpush1.msra.mxu0 0.0
    %2717 = vmatprep.subr.mxu0 0.0
    %2718 = vmatpush1.msra.mxu0 0.0
    %2719 = vmatprep.subr.mxu0 0.0
    %2720 = vmatpush1.msra.mxu0 0.0
    %2721 = vmatprep.subr.mxu0 0.0
    %2722 = vmatpush1.msra.mxu0 0.0
    %2723 = vmatprep.subr.mxu0 0.0
    %2724 = vmatpush1.msra.mxu0 0.0
    %2725 = vmatprep.subr.mxu0 0.0
    %2726 = vmatpush1.msra.mxu0 0.0
    %2727 = vmatprep.subr.mxu0 0.0
    %2728 = vmatpush1.msra.mxu0 0.0
    %2729 = vmatprep.subr.mxu0 0.0
    %2730 = vmatpush1.msra.mxu0 0.0
    %2731 = vmatprep.subr.mxu0 0.0
    %2732 = vmatpush1.msra.mxu0 0.0
    %2733 = vmatprep.mubr.f32.mxu0 0.0
    %2734 = vmatmul.mubr.f32.gmra.mrb[0].mxu0 %v2596
    %v2735 = vpop.f32.mrb[0].mxu0
    %v2736 = vadd.f32 0.0, %v2735
    %v2737 = vpop.f32.mrb[0].mxu0
    %v2738 = vadd.f32 0.0, %v2737
    %2739 = vdwg.mxu0
    %v2740 = vadd.f32 %v2573, %v2665
    %v2741 = vadd.f32 %v2574, %v2667
    %v2742 = vadd.f32 %v2575, %v2736
    %v2743 = vadd.f32 %v2576, %v2738
    %2744 = vrot.lane.b32.xlu0 %v2097, 1
    %v2745 = vpop.permute.xlu0 %2744
    %2746 = vrot.lane.b32.xlu0 %v2098, 1
    %v2747 = vpop.permute.xlu0 %2746
    %2748 = vrot.lane.b32.xlu0 %v2099, 1
    %v2749 = vpop.permute.xlu0 %2748
    %2750 = vrot.lane.b32.xlu0 %v2100, 1
    %v2751 = vpop.permute.xlu0 %2750
    %v2752 = vsel %vm837, %v2749, %v2751
    %v2753 = vsel %vm837, %v2747, %v2749
    %v2754 = vsel %vm837, %v2745, %v2747
    %v2755 = vsel %vm837, %v2751, %v2745
    %v2756 = vmul.f32 %v2755, %v846
    %v2757 = vmul.f32 %v2754, %v850
    %v2758 = vmul.f32 %v2753, %v854
    %v2759 = vmul.f32 %v2752, %v858
    %s2760 = scalar_lea.vmem %s5, 24
    %v2761 = vld [vmem:[%s2760] sm:$0xff]
    %v2763 = vsel %vm1903, %v2761, 0
    %2765 = vmatprep.subr.mxu0 %v2757
    %2766 = vmatpush1.msra.mxu0 %v2756
    %2767 = vmatprep.subr.mxu0 0.0
    %2768 = vmatpush1.msra.mxu0 0.0
    %2769 = vmatprep.subr.mxu0 0.0
    %2770 = vmatpush1.msra.mxu0 0.0
    %2771 = vmatprep.subr.mxu0 0.0
    %2772 = vmatpush1.msra.mxu0 0.0
    %2773 = vmatprep.subr.mxu0 0.0
    %2774 = vmatpush1.msra.mxu0 0.0
    %2775 = vmatprep.subr.mxu0 0.0
    %2776 = vmatpush1.msra.mxu0 0.0
    %2777 = vmatprep.subr.mxu0 0.0
    %2778 = vmatpush1.msra.mxu0 0.0
    %2779 = vmatprep.subr.mxu0 0.0
    %2780 = vmatpush1.msra.mxu0 0.0
    %2781 = vmatprep.subr.mxu0 0.0
    %2782 = vmatpush1.msra.mxu0 0.0
    %2783 = vmatprep.subr.mxu0 0.0
    %2784 = vmatpush1.msra.mxu0 0.0
    %2785 = vmatprep.subr.mxu0 0.0
    %2786 = vmatpush1.msra.mxu0 0.0
    %2787 = vmatprep.subr.mxu0 0.0
    %2788 = vmatpush1.msra.mxu0 0.0
    %2789 = vmatprep.subr.mxu0 0.0
    %2790 = vmatpush1.msra.mxu0 0.0
    %2791 = vmatprep.subr.mxu0 0.0
    %2792 = vmatpush1.msra.mxu0 0.0
    %2793 = vmatprep.subr.mxu0 0.0
    %2794 = vmatpush1.msra.mxu0 0.0
    %2795 = vmatprep.subr.mxu0 0.0
    %2796 = vmatpush1.msra.mxu0 0.0
    %2797 = vmatprep.subr.mxu0 0.0
    %2798 = vmatpush1.msra.mxu0 0.0
    %2799 = vmatprep.subr.mxu0 0.0
    %2800 = vmatpush1.msra.mxu0 0.0
    %2801 = vmatprep.subr.mxu0 0.0
    %2802 = vmatpush1.msra.mxu0 0.0
    %2803 = vmatprep.subr.mxu0 0.0
    %2804 = vmatpush1.msra.mxu0 0.0
    %2805 = vmatprep.subr.mxu0 0.0
    %2806 = vmatpush1.msra.mxu0 0.0
    %2807 = vmatprep.subr.mxu0 0.0
    %2808 = vmatpush1.msra.mxu0 0.0
    %2809 = vmatprep.subr.mxu0 0.0
    %2810 = vmatpush1.msra.mxu0 0.0
    %2811 = vmatprep.subr.mxu0 0.0
    %2812 = vmatpush1.msra.mxu0 0.0
    %2813 = vmatprep.subr.mxu0 0.0
    %2814 = vmatpush1.msra.mxu0 0.0
    %2815 = vmatprep.subr.mxu0 0.0
    %2816 = vmatpush1.msra.mxu0 0.0
    %2817 = vmatprep.subr.mxu0 0.0
    %2818 = vmatpush1.msra.mxu0 0.0
    %2819 = vmatprep.subr.mxu0 0.0
    %2820 = vmatpush1.msra.mxu0 0.0
    %2821 = vmatprep.subr.mxu0 0.0
    %2822 = vmatpush1.msra.mxu0 0.0
    %2823 = vmatprep.subr.mxu0 0.0
    %2824 = vmatpush1.msra.mxu0 0.0
    %2825 = vmatprep.subr.mxu0 0.0
    %2826 = vmatpush1.msra.mxu0 0.0
    %2827 = vmatprep.subr.mxu0 0.0
    %2828 = vmatpush1.msra.mxu0 0.0
    %2829 = vmatprep.mubr.f32.mxu0 0.0
    %2830 = vmatmul.mubr.f32.gmra.mrb[0].mxu0 %v2763
    %v2831 = vpop.f32.mrb[0].mxu0
    %v2832 = vadd.f32 0.0, %v2831
    %v2833 = vpop.f32.mrb[0].mxu0
    %v2834 = vadd.f32 0.0, %v2833
    %2835 = vdwg.mxu0
    %2836 = vmatprep.subr.mxu0 %v2759
    %2837 = vmatpush1.msra.mxu0 %v2758
    %2838 = vmatprep.subr.mxu0 0.0
    %2839 = vmatpush1.msra.mxu0 0.0
    %2840 = vmatprep.subr.mxu0 0.0
    %2841 = vmatpush1.msra.mxu0 0.0
    %2842 = vmatprep.subr.mxu0 0.0
    %2843 = vmatpush1.msra.mxu0 0.0
    %2844 = vmatprep.subr.mxu0 0.0
    %2845 = vmatpush1.msra.mxu0 0.0
    %2846 = vmatprep.subr.mxu0 0.0
    %2847 = vmatpush1.msra.mxu0 0.0
    %2848 = vmatprep.subr.mxu0 0.0
    %2849 = vmatpush1.msra.mxu0 0.0
    %2850 = vmatprep.subr.mxu0 0.0
    %2851 = vmatpush1.msra.mxu0 0.0
    %2852 = vmatprep.subr.mxu0 0.0
    %2853 = vmatpush1.msra.mxu0 0.0
    %2854 = vmatprep.subr.mxu0 0.0
    %2855 = vmatpush1.msra.mxu0 0.0
    %2856 = vmatprep.subr.mxu0 0.0
    %2857 = vmatpush1.msra.mxu0 0.0
    %2858 = vmatprep.subr.mxu0 0.0
    %2859 = vmatpush1.msra.mxu0 0.0
    %2860 = vmatprep.subr.mxu0 0.0
    %2861 = vmatpush1.msra.mxu0 0.0
    %2862 = vmatprep.subr.mxu0 0.0
    %2863 = vmatpush1.msra.mxu0 0.0
    %2864 = vmatprep.subr.mxu0 0.0
    %2865 = vmatpush1.msra.mxu0 0.0
    %2866 = vmatprep.subr.mxu0 0.0
    %2867 = vmatpush1.msra.mxu0 0.0
    %2868 = vmatprep.subr.mxu0 0.0
    %2869 = vmatpush1.msra.mxu0 0.0
    %2870 = vmatprep.subr.mxu0 0.0
    %2871 = vmatpush1.msra.mxu0 0.0
    %2872 = vmatprep.subr.mxu0 0.0
    %2873 = vmatpush1.msra.mxu0 0.0
    %2874 = vmatprep.subr.mxu0 0.0
    %2875 = vmatpush1.msra.mxu0 0.0
    %2876 = vmatprep.subr.mxu0 0.0
    %2877 = vmatpush1.msra.mxu0 0.0
    %2878 = vmatprep.subr.mxu0 0.0
    %2879 = vmatpush1.msra.mxu0 0.0
    %2880 = vmatprep.subr.mxu0 0.0
    %2881 = vmatpush1.msra.mxu0 0.0
    %2882 = vmatprep.subr.mxu0 0.0
    %2883 = vmatpush1.msra.mxu0 0.0
    %2884 = vmatprep.subr.mxu0 0.0
    %2885 = vmatpush1.msra.mxu0 0.0
    %2886 = vmatprep.subr.mxu0 0.0
    %2887 = vmatpush1.msra.mxu0 0.0
    %2888 = vmatprep.subr.mxu0 0.0
    %2889 = vmatpush1.msra.mxu0 0.0
    %2890 = vmatprep.subr.mxu0 0.0
    %2891 = vmatpush1.msra.mxu0 0.0
    %2892 = vmatprep.subr.mxu0 0.0
    %2893 = vmatpush1.msra.mxu0 0.0
    %2894 = vmatprep.subr.mxu0 0.0
    %2895 = vmatpush1.msra.mxu0 0.0
    %2896 = vmatprep.subr.mxu0 0.0
    %2897 = vmatpush1.msra.mxu0 0.0
    %2898 = vmatprep.subr.mxu0 0.0
    %2899 = vmatpush1.msra.mxu0 0.0
    %2900 = vmatprep.mubr.f32.mxu0 0.0
    %2901 = vmatmul.mubr.f32.gmra.mrb[0].mxu0 %v2763
    %v2902 = vpop.f32.mrb[0].mxu0
    %v2903 = vadd.f32 0.0, %v2902
    %v2904 = vpop.f32.mrb[0].mxu0
    %v2905 = vadd.f32 0.0, %v2904
    %2906 = vdwg.mxu0
    %v2907 = vadd.f32 %v2740, %v2832
    %v2908 = vadd.f32 %v2741, %v2834
    %v2909 = vadd.f32 %v2742, %v2903
    %v2910 = vadd.f32 %v2743, %v2905
    %2911 = vrot.lane.b32.xlu0 %v2097, 127
    %v2912 = vpop.permute.xlu0 %2911
    %2913 = vrot.lane.b32.xlu0 %v2098, 127
    %v2914 = vpop.permute.xlu0 %2913
    %2915 = vrot.lane.b32.xlu0 %v2099, 127
    %v2916 = vpop.permute.xlu0 %2915
    %2917 = vrot.lane.b32.xlu0 %v2100, 127
    %v2918 = vpop.permute.xlu0 %2917
    %v2919 = vsel %vm1038, %v2916, %v2918
    %v2920 = vsel %vm1038, %v2914, %v2916
    %v2921 = vsel %vm1038, %v2912, %v2914
    %v2922 = vsel %vm1038, %v2918, %v2912
    %v2923 = vmul.f32 %v2921, %v1047
    %v2924 = vmul.f32 %v2920, %v1051
    %v2925 = vmul.f32 %v2919, %v1055
    %v2926 = vmul.f32 %v2922, %v1059
    %s2927 = scalar_lea.vmem %s5, 40
    %v2928 = vld [vmem:[%s2927] sm:$0xff]
    %v2930 = vsel %vm1903, %v2928, 0
    %2932 = vmatprep.subr.mxu0 %v2924
    %2933 = vmatpush1.msra.mxu0 %v2923
    %2934 = vmatprep.subr.mxu0 0.0
    %2935 = vmatpush1.msra.mxu0 0.0
    %2936 = vmatprep.subr.mxu0 0.0
    %2937 = vmatpush1.msra.mxu0 0.0
    %2938 = vmatprep.subr.mxu0 0.0
    %2939 = vmatpush1.msra.mxu0 0.0
    %2940 = vmatprep.subr.mxu0 0.0
    %2941 = vmatpush1.msra.mxu0 0.0
    %2942 = vmatprep.subr.mxu0 0.0
    %2943 = vmatpush1.msra.mxu0 0.0
    %2944 = vmatprep.subr.mxu0 0.0
    %2945 = vmatpush1.msra.mxu0 0.0
    %2946 = vmatprep.subr.mxu0 0.0
    %2947 = vmatpush1.msra.mxu0 0.0
    %2948 = vmatprep.subr.mxu0 0.0
    %2949 = vmatpush1.msra.mxu0 0.0
    %2950 = vmatprep.subr.mxu0 0.0
    %2951 = vmatpush1.msra.mxu0 0.0
    %2952 = vmatprep.subr.mxu0 0.0
    %2953 = vmatpush1.msra.mxu0 0.0
    %2954 = vmatprep.subr.mxu0 0.0
    %2955 = vmatpush1.msra.mxu0 0.0
    %2956 = vmatprep.subr.mxu0 0.0
    %2957 = vmatpush1.msra.mxu0 0.0
    %2958 = vmatprep.subr.mxu0 0.0
    %2959 = vmatpush1.msra.mxu0 0.0
    %2960 = vmatprep.subr.mxu0 0.0
    %2961 = vmatpush1.msra.mxu0 0.0
    %2962 = vmatprep.subr.mxu0 0.0
    %2963 = vmatpush1.msra.mxu0 0.0
    %2964 = vmatprep.subr.mxu0 0.0
    %2965 = vmatpush1.msra.mxu0 0.0
    %2966 = vmatprep.subr.mxu0 0.0
    %2967 = vmatpush1.msra.mxu0 0.0
    %2968 = vmatprep.subr.mxu0 0.0
    %2969 = vmatpush1.msra.mxu0 0.0
    %2970 = vmatprep.subr.mxu0 0.0
    %2971 = vmatpush1.msra.mxu0 0.0
    %2972 = vmatprep.subr.mxu0 0.0
    %2973 = vmatpush1.msra.mxu0 0.0
    %2974 = vmatprep.subr.mxu0 0.0
    %2975 = vmatpush1.msra.mxu0 0.0
    %2976 = vmatprep.subr.mxu0 0.0
    %2977 = vmatpush1.msra.mxu0 0.0
    %2978 = vmatprep.subr.mxu0 0.0
    %2979 = vmatpush1.msra.mxu0 0.0
    %2980 = vmatprep.subr.mxu0 0.0
    %2981 = vmatpush1.msra.mxu0 0.0
    %2982 = vmatprep.subr.mxu0 0.0
    %2983 = vmatpush1.msra.mxu0 0.0
    %2984 = vmatprep.subr.mxu0 0.0
    %2985 = vmatpush1.msra.mxu0 0.0
    %2986 = vmatprep.subr.mxu0 0.0
    %2987 = vmatpush1.msra.mxu0 0.0
    %2988 = vmatprep.subr.mxu0 0.0
    %2989 = vmatpush1.msra.mxu0 0.0
    %2990 = vmatprep.subr.mxu0 0.0
    %2991 = vmatpush1.msra.mxu0 0.0
    %2992 = vmatprep.subr.mxu0 0.0
    %2993 = vmatpush1.msra.mxu0 0.0
    %2994 = vmatprep.subr.mxu0 0.0
    %2995 = vmatpush1.msra.mxu0 0.0
    %2996 = vmatprep.mubr.f32.mxu0 0.0
    %2997 = vmatmul.mubr.f32.gmra.mrb[0].mxu0 %v2930
    %v2998 = vpop.f32.mrb[0].mxu0
    %v2999 = vadd.f32 0.0, %v2998
    %v3000 = vpop.f32.mrb[0].mxu0
    %v3001 = vadd.f32 0.0, %v3000
    %3002 = vdwg.mxu0
    %3003 = vmatprep.subr.mxu0 %v2926
    %3004 = vmatpush1.msra.mxu0 %v2925
    %3005 = vmatprep.subr.mxu0 0.0
    %3006 = vmatpush1.msra.mxu0 0.0
    %3007 = vmatprep.subr.mxu0 0.0
    %3008 = vmatpush1.msra.mxu0 0.0
    %3009 = vmatprep.subr.mxu0 0.0
    %3010 = vmatpush1.msra.mxu0 0.0
    %3011 = vmatprep.subr.mxu0 0.0
    %3012 = vmatpush1.msra.mxu0 0.0
    %3013 = vmatprep.subr.mxu0 0.0
    %3014 = vmatpush1.msra.mxu0 0.0
    %3015 = vmatprep.subr.mxu0 0.0
    %3016 = vmatpush1.msra.mxu0 0.0
    %3017 = vmatprep.subr.mxu0 0.0
    %3018 = vmatpush1.msra.mxu0 0.0
    %3019 = vmatprep.subr.mxu0 0.0
    %3020 = vmatpush1.msra.mxu0 0.0
    %3021 = vmatprep.subr.mxu0 0.0
    %3022 = vmatpush1.msra.mxu0 0.0
    %3023 = vmatprep.subr.mxu0 0.0
    %3024 = vmatpush1.msra.mxu0 0.0
    %3025 = vmatprep.subr.mxu0 0.0
    %3026 = vmatpush1.msra.mxu0 0.0
    %3027 = vmatprep.subr.mxu0 0.0
    %3028 = vmatpush1.msra.mxu0 0.0
    %3029 = vmatprep.subr.mxu0 0.0
    %3030 = vmatpush1.msra.mxu0 0.0
    %3031 = vmatprep.subr.mxu0 0.0
    %3032 = vmatpush1.msra.mxu0 0.0
    %3033 = vmatprep.subr.mxu0 0.0
    %3034 = vmatpush1.msra.mxu0 0.0
    %3035 = vmatprep.subr.mxu0 0.0
    %3036 = vmatpush1.msra.mxu0 0.0
    %3037 = vmatprep.subr.mxu0 0.0
    %3038 = vmatpush1.msra.mxu0 0.0
    %3039 = vmatprep.subr.mxu0 0.0
    %3040 = vmatpush1.msra.mxu0 0.0
    %3041 = vmatprep.subr.mxu0 0.0
    %3042 = vmatpush1.msra.mxu0 0.0
    %3043 = vmatprep.subr.mxu0 0.0
    %3044 = vmatpush1.msra.mxu0 0.0
    %3045 = vmatprep.subr.mxu0 0.0
    %3046 = vmatpush1.msra.mxu0 0.0
    %3047 = vmatprep.subr.mxu0 0.0
    %3048 = vmatpush1.msra.mxu0 0.0
    %3049 = vmatprep.subr.mxu0 0.0
    %3050 = vmatpush1.msra.mxu0 0.0
    %3051 = vmatprep.subr.mxu0 0.0
    %3052 = vmatpush1.msra.mxu0 0.0
    %3053 = vmatprep.subr.mxu0 0.0
    %3054 = vmatpush1.msra.mxu0 0.0
    %3055 = vmatprep.subr.mxu0 0.0
    %3056 = vmatpush1.msra.mxu0 0.0
    %3057 = vmatprep.subr.mxu0 0.0
    %3058 = vmatpush1.msra.mxu0 0.0
    %3059 = vmatprep.subr.mxu0 0.0
    %3060 = vmatpush1.msra.mxu0 0.0
    %3061 = vmatprep.subr.mxu0 0.0
    %3062 = vmatpush1.msra.mxu0 0.0
    %3063 = vmatprep.subr.mxu0 0.0
    %3064 = vmatpush1.msra.mxu0 0.0
    %3065 = vmatprep.subr.mxu0 0.0
    %3066 = vmatpush1.msra.mxu0 0.0
    %3067 = vmatprep.mubr.f32.mxu0 0.0
    %3068 = vmatmul.mubr.f32.gmra.mrb[0].mxu0 %v2930
    %v3069 = vpop.f32.mrb[0].mxu0
    %v3070 = vadd.f32 0.0, %v3069
    %v3071 = vpop.f32.mrb[0].mxu0
    %v3072 = vadd.f32 0.0, %v3071
    %3073 = vdwg.mxu0
    %v3074 = vadd.f32 %v2907, %v2999
    %v3075 = vadd.f32 %v2908, %v3001
    %v3076 = vadd.f32 %v2909, %v3070
    %v3077 = vadd.f32 %v2910, %v3072
    %3078 = vrot.lane.b32.xlu0 %v2097, 113
    %v3079 = vpop.permute.xlu0 %3078
    %3080 = vrot.lane.b32.xlu0 %v2098, 113
    %v3081 = vpop.permute.xlu0 %3080
    %3082 = vrot.lane.b32.xlu0 %v2099, 113
    %v3083 = vpop.permute.xlu0 %3082
    %3084 = vrot.lane.b32.xlu0 %v2100, 113
    %v3085 = vpop.permute.xlu0 %3084
    %v3086 = vsel %vm1239, %v3083, %v3085
    %v3087 = vsel %vm1239, %v3081, %v3083
    %v3088 = vsel %vm1239, %v3079, %v3081
    %v3089 = vsel %vm1239, %v3085, %v3079
    %v3090 = vmul.f32 %v3088, %v1248
    %v3091 = vmul.f32 %v3087, %v1252
    %v3092 = vmul.f32 %v3086, %v1256
    %v3093 = vmul.f32 %v3089, %v1260
    %s3094 = scalar_lea.vmem %s5, 48
    %v3095 = vld [vmem:[%s3094] sm:$0xff]
    %v3097 = vsel %vm1903, %v3095, 0
    %3099 = vmatprep.subr.mxu0 %v3091
    %3100 = vmatpush1.msra.mxu0 %v3090
    %3101 = vmatprep.subr.mxu0 0.0
    %3102 = vmatpush1.msra.mxu0 0.0
    %3103 = vmatprep.subr.mxu0 0.0
    %3104 = vmatpush1.msra.mxu0 0.0
    %3105 = vmatprep.subr.mxu0 0.0
    %3106 = vmatpush1.msra.mxu0 0.0
    %3107 = vmatprep.subr.mxu0 0.0
    %3108 = vmatpush1.msra.mxu0 0.0
    %3109 = vmatprep.subr.mxu0 0.0
    %3110 = vmatpush1.msra.mxu0 0.0
    %3111 = vmatprep.subr.mxu0 0.0
    %3112 = vmatpush1.msra.mxu0 0.0
    %3113 = vmatprep.subr.mxu0 0.0
    %3114 = vmatpush1.msra.mxu0 0.0
    %3115 = vmatprep.subr.mxu0 0.0
    %3116 = vmatpush1.msra.mxu0 0.0
    %3117 = vmatprep.subr.mxu0 0.0
    %3118 = vmatpush1.msra.mxu0 0.0
    %3119 = vmatprep.subr.mxu0 0.0
    %3120 = vmatpush1.msra.mxu0 0.0
    %3121 = vmatprep.subr.mxu0 0.0
    %3122 = vmatpush1.msra.mxu0 0.0
    %3123 = vmatprep.subr.mxu0 0.0
    %3124 = vmatpush1.msra.mxu0 0.0
    %3125 = vmatprep.subr.mxu0 0.0
    %3126 = vmatpush1.msra.mxu0 0.0
    %3127 = vmatprep.subr.mxu0 0.0
    %3128 = vmatpush1.msra.mxu0 0.0
    %3129 = vmatprep.subr.mxu0 0.0
    %3130 = vmatpush1.msra.mxu0 0.0
    %3131 = vmatprep.subr.mxu0 0.0
    %3132 = vmatpush1.msra.mxu0 0.0
    %3133 = vmatprep.subr.mxu0 0.0
    %3134 = vmatpush1.msra.mxu0 0.0
    %3135 = vmatprep.subr.mxu0 0.0
    %3136 = vmatpush1.msra.mxu0 0.0
    %3137 = vmatprep.subr.mxu0 0.0
    %3138 = vmatpush1.msra.mxu0 0.0
    %3139 = vmatprep.subr.mxu0 0.0
    %3140 = vmatpush1.msra.mxu0 0.0
    %3141 = vmatprep.subr.mxu0 0.0
    %3142 = vmatpush1.msra.mxu0 0.0
    %3143 = vmatprep.subr.mxu0 0.0
    %3144 = vmatpush1.msra.mxu0 0.0
    %3145 = vmatprep.subr.mxu0 0.0
    %3146 = vmatpush1.msra.mxu0 0.0
    %3147 = vmatprep.subr.mxu0 0.0
    %3148 = vmatpush1.msra.mxu0 0.0
    %3149 = vmatprep.subr.mxu0 0.0
    %3150 = vmatpush1.msra.mxu0 0.0
    %3151 = vmatprep.subr.mxu0 0.0
    %3152 = vmatpush1.msra.mxu0 0.0
    %3153 = vmatprep.subr.mxu0 0.0
    %3154 = vmatpush1.msra.mxu0 0.0
    %3155 = vmatprep.subr.mxu0 0.0
    %3156 = vmatpush1.msra.mxu0 0.0
    %3157 = vmatprep.subr.mxu0 0.0
    %3158 = vmatpush1.msra.mxu0 0.0
    %3159 = vmatprep.subr.mxu0 0.0
    %3160 = vmatpush1.msra.mxu0 0.0
    %3161 = vmatprep.subr.mxu0 0.0
    %3162 = vmatpush1.msra.mxu0 0.0
    %3163 = vmatprep.mubr.f32.mxu0 0.0
    %3164 = vmatmul.mubr.f32.gmra.mrb[0].mxu0 %v3097
    %v3165 = vpop.f32.mrb[0].mxu0
    %v3166 = vadd.f32 0.0, %v3165
    %v3167 = vpop.f32.mrb[0].mxu0
    %v3168 = vadd.f32 0.0, %v3167
    %3169 = vdwg.mxu0
    %3170 = vmatprep.subr.mxu0 %v3093
    %3171 = vmatpush1.msra.mxu0 %v3092
    %3172 = vmatprep.subr.mxu0 0.0
    %3173 = vmatpush1.msra.mxu0 0.0
    %3174 = vmatprep.subr.mxu0 0.0
    %3175 = vmatpush1.msra.mxu0 0.0
    %3176 = vmatprep.subr.mxu0 0.0
    %3177 = vmatpush1.msra.mxu0 0.0
    %3178 = vmatprep.subr.mxu0 0.0
    %3179 = vmatpush1.msra.mxu0 0.0
    %3180 = vmatprep.subr.mxu0 0.0
    %3181 = vmatpush1.msra.mxu0 0.0
    %3182 = vmatprep.subr.mxu0 0.0
    %3183 = vmatpush1.msra.mxu0 0.0
    %3184 = vmatprep.subr.mxu0 0.0
    %3185 = vmatpush1.msra.mxu0 0.0
    %3186 = vmatprep.subr.mxu0 0.0
    %3187 = vmatpush1.msra.mxu0 0.0
    %3188 = vmatprep.subr.mxu0 0.0
    %3189 = vmatpush1.msra.mxu0 0.0
    %3190 = vmatprep.subr.mxu0 0.0
    %3191 = vmatpush1.msra.mxu0 0.0
    %3192 = vmatprep.subr.mxu0 0.0
    %3193 = vmatpush1.msra.mxu0 0.0
    %3194 = vmatprep.subr.mxu0 0.0
    %3195 = vmatpush1.msra.mxu0 0.0
    %3196 = vmatprep.subr.mxu0 0.0
    %3197 = vmatpush1.msra.mxu0 0.0
    %3198 = vmatprep.subr.mxu0 0.0
    %3199 = vmatpush1.msra.mxu0 0.0
    %3200 = vmatprep.subr.mxu0 0.0
    %3201 = vmatpush1.msra.mxu0 0.0
    %3202 = vmatprep.subr.mxu0 0.0
    %3203 = vmatpush1.msra.mxu0 0.0
    %3204 = vmatprep.subr.mxu0 0.0
    %3205 = vmatpush1.msra.mxu0 0.0
    %3206 = vmatprep.subr.mxu0 0.0
    %3207 = vmatpush1.msra.mxu0 0.0
    %3208 = vmatprep.subr.mxu0 0.0
    %3209 = vmatpush1.msra.mxu0 0.0
    %3210 = vmatprep.subr.mxu0 0.0
    %3211 = vmatpush1.msra.mxu0 0.0
    %3212 = vmatprep.subr.mxu0 0.0
    %3213 = vmatpush1.msra.mxu0 0.0
    %3214 = vmatprep.subr.mxu0 0.0
    %3215 = vmatpush1.msra.mxu0 0.0
    %3216 = vmatprep.subr.mxu0 0.0
    %3217 = vmatpush1.msra.mxu0 0.0
    %3218 = vmatprep.subr.mxu0 0.0
    %3219 = vmatpush1.msra.mxu0 0.0
    %3220 = vmatprep.subr.mxu0 0.0
    %3221 = vmatpush1.msra.mxu0 0.0
    %3222 = vmatprep.subr.mxu0 0.0
    %3223 = vmatpush1.msra.mxu0 0.0
    %3224 = vmatprep.subr.mxu0 0.0
    %3225 = vmatpush1.msra.mxu0 0.0
    %3226 = vmatprep.subr.mxu0 0.0
    %3227 = vmatpush1.msra.mxu0 0.0
    %3228 = vmatprep.subr.mxu0 0.0
    %3229 = vmatpush1.msra.mxu0 0.0
    %3230 = vmatprep.subr.mxu0 0.0
    %3231 = vmatpush1.msra.mxu0 0.0
    %3232 = vmatprep.subr.mxu0 0.0
    %3233 = vmatpush1.msra.mxu0 0.0
    %3234 = vmatprep.mubr.f32.mxu0 0.0
    %3235 = vmatmul.mubr.f32.gmra.mrb[0].mxu0 %v3097
    %v3236 = vpop.f32.mrb[0].mxu0
    %v3237 = vadd.f32 0.0, %v3236
    %v3238 = vpop.f32.mrb[0].mxu0
    %v3239 = vadd.f32 0.0, %v3238
    %3240 = vdwg.mxu0
    %v3241 = vadd.f32 %v3074, %v3166
    %v3242 = vadd.f32 %v3075, %v3168
    %v3243 = vadd.f32 %v3076, %v3237
    %v3244 = vadd.f32 %v3077, %v3239
    %3245 = vrot.lane.b32.xlu0 %v2097, 112
    %v3246 = vpop.permute.xlu0 %3245
    %3247 = vrot.lane.b32.xlu0 %v2098, 112
    %v3248 = vpop.permute.xlu0 %3247
    %3249 = vrot.lane.b32.xlu0 %v2099, 112
    %v3250 = vpop.permute.xlu0 %3249
    %3251 = vrot.lane.b32.xlu0 %v2100, 112
    %v3252 = vpop.permute.xlu0 %3251
    %v3253 = vsel %vm1440, %v3250, %v3252
    %v3254 = vsel %vm1440, %v3248, %v3250
    %v3255 = vsel %vm1440, %v3246, %v3248
    %v3256 = vsel %vm1440, %v3252, %v3246
    %v3257 = vmul.f32 %v3255, %v1449
    %v3258 = vmul.f32 %v3254, %v1453
    %v3259 = vmul.f32 %v3253, %v1457
    %v3260 = vmul.f32 %v3256, %v1461
    %s3261 = scalar_lea.vmem %s5, 56
    %v3262 = vld [vmem:[%s3261] sm:$0xff]
    %v3264 = vsel %vm1903, %v3262, 0
    %3266 = vmatprep.subr.mxu0 %v3258
    %3267 = vmatpush1.msra.mxu0 %v3257
    %3268 = vmatprep.subr.mxu0 0.0
    %3269 = vmatpush1.msra.mxu0 0.0
    %3270 = vmatprep.subr.mxu0 0.0
    %3271 = vmatpush1.msra.mxu0 0.0
    %3272 = vmatprep.subr.mxu0 0.0
    %3273 = vmatpush1.msra.mxu0 0.0
    %3274 = vmatprep.subr.mxu0 0.0
    %3275 = vmatpush1.msra.mxu0 0.0
    %3276 = vmatprep.subr.mxu0 0.0
    %3277 = vmatpush1.msra.mxu0 0.0
    %3278 = vmatprep.subr.mxu0 0.0
    %3279 = vmatpush1.msra.mxu0 0.0
    %3280 = vmatprep.subr.mxu0 0.0
    %3281 = vmatpush1.msra.mxu0 0.0
    %3282 = vmatprep.subr.mxu0 0.0
    %3283 = vmatpush1.msra.mxu0 0.0
    %3284 = vmatprep.subr.mxu0 0.0
    %3285 = vmatpush1.msra.mxu0 0.0
    %3286 = vmatprep.subr.mxu0 0.0
    %3287 = vmatpush1.msra.mxu0 0.0
    %3288 = vmatprep.subr.mxu0 0.0
    %3289 = vmatpush1.msra.mxu0 0.0
    %3290 = vmatprep.subr.mxu0 0.0
    %3291 = vmatpush1.msra.mxu0 0.0
    %3292 = vmatprep.subr.mxu0 0.0
    %3293 = vmatpush1.msra.mxu0 0.0
    %3294 = vmatprep.subr.mxu0 0.0
    %3295 = vmatpush1.msra.mxu0 0.0
    %3296 = vmatprep.subr.mxu0 0.0
    %3297 = vmatpush1.msra.mxu0 0.0
    %3298 = vmatprep.subr.mxu0 0.0
    %3299 = vmatpush1.msra.mxu0 0.0
    %3300 = vmatprep.subr.mxu0 0.0
    %3301 = vmatpush1.msra.mxu0 0.0
    %3302 = vmatprep.subr.mxu0 0.0
    %3303 = vmatpush1.msra.mxu0 0.0
    %3304 = vmatprep.subr.mxu0 0.0
    %3305 = vmatpush1.msra.mxu0 0.0
    %3306 = vmatprep.subr.mxu0 0.0
    %3307 = vmatpush1.msra.mxu0 0.0
    %3308 = vmatprep.subr.mxu0 0.0
    %3309 = vmatpush1.msra.mxu0 0.0
    %3310 = vmatprep.subr.mxu0 0.0
    %3311 = vmatpush1.msra.mxu0 0.0
    %3312 = vmatprep.subr.mxu0 0.0
    %3313 = vmatpush1.msra.mxu0 0.0
    %3314 = vmatprep.subr.mxu0 0.0
    %3315 = vmatpush1.msra.mxu0 0.0
    %3316 = vmatprep.subr.mxu0 0.0
    %3317 = vmatpush1.msra.mxu0 0.0
    %3318 = vmatprep.subr.mxu0 0.0
    %3319 = vmatpush1.msra.mxu0 0.0
    %3320 = vmatprep.subr.mxu0 0.0
    %3321 = vmatpush1.msra.mxu0 0.0
    %3322 = vmatprep.subr.mxu0 0.0
    %3323 = vmatpush1.msra.mxu0 0.0
    %3324 = vmatprep.subr.mxu0 0.0
    %3325 = vmatpush1.msra.mxu0 0.0
    %3326 = vmatprep.subr.mxu0 0.0
    %3327 = vmatpush1.msra.mxu0 0.0
    %3328 = vmatprep.subr.mxu0 0.0
    %3329 = vmatpush1.msra.mxu0 0.0
    %3330 = vmatprep.mubr.f32.mxu0 0.0
    %3331 = vmatmul.mubr.f32.gmra.mrb[0].mxu0 %v3264
    %v3332 = vpop.f32.mrb[0].mxu0
    %v3333 = vadd.f32 0.0, %v3332
    %v3334 = vpop.f32.mrb[0].mxu0
    %v3335 = vadd.f32 0.0, %v3334
    %3336 = vdwg.mxu0
    %3337 = vmatprep.subr.mxu0 %v3260
    %3338 = vmatpush1.msra.mxu0 %v3259
    %3339 = vmatprep.subr.mxu0 0.0
    %3340 = vmatpush1.msra.mxu0 0.0
    %3341 = vmatprep.subr.mxu0 0.0
    %3342 = vmatpush1.msra.mxu0 0.0
    %3343 = vmatprep.subr.mxu0 0.0
    %3344 = vmatpush1.msra.mxu0 0.0
    %3345 = vmatprep.subr.mxu0 0.0
    %3346 = vmatpush1.msra.mxu0 0.0
    %3347 = vmatprep.subr.mxu0 0.0
    %3348 = vmatpush1.msra.mxu0 0.0
    %3349 = vmatprep.subr.mxu0 0.0
    %3350 = vmatpush1.msra.mxu0 0.0
    %3351 = vmatprep.subr.mxu0 0.0
    %3352 = vmatpush1.msra.mxu0 0.0
    %3353 = vmatprep.subr.mxu0 0.0
    %3354 = vmatpush1.msra.mxu0 0.0
    %3355 = vmatprep.subr.mxu0 0.0
    %3356 = vmatpush1.msra.mxu0 0.0
    %3357 = vmatprep.subr.mxu0 0.0
    %3358 = vmatpush1.msra.mxu0 0.0
    %3359 = vmatprep.subr.mxu0 0.0
    %3360 = vmatpush1.msra.mxu0 0.0
    %3361 = vmatprep.subr.mxu0 0.0
    %3362 = vmatpush1.msra.mxu0 0.0
    %3363 = vmatprep.subr.mxu0 0.0
    %3364 = vmatpush1.msra.mxu0 0.0
    %3365 = vmatprep.subr.mxu0 0.0
    %3366 = vmatpush1.msra.mxu0 0.0
    %3367 = vmatprep.subr.mxu0 0.0
    %3368 = vmatpush1.msra.mxu0 0.0
    %3369 = vmatprep.subr.mxu0 0.0
    %3370 = vmatpush1.msra.mxu0 0.0
    %3371 = vmatprep.subr.mxu0 0.0
    %3372 = vmatpush1.msra.mxu0 0.0
    %3373 = vmatprep.subr.mxu0 0.0
    %3374 = vmatpush1.msra.mxu0 0.0
    %3375 = vmatprep.subr.mxu0 0.0
    %3376 = vmatpush1.msra.mxu0 0.0
    %3377 = vmatprep.subr.mxu0 0.0
    %3378 = vmatpush1.msra.mxu0 0.0
    %3379 = vmatprep.subr.mxu0 0.0
    %3380 = vmatpush1.msra.mxu0 0.0
    %3381 = vmatprep.subr.mxu0 0.0
    %3382 = vmatpush1.msra.mxu0 0.0
    %3383 = vmatprep.subr.mxu0 0.0
    %3384 = vmatpush1.msra.mxu0 0.0
    %3385 = vmatprep.subr.mxu0 0.0
    %3386 = vmatpush1.msra.mxu0 0.0
    %3387 = vmatprep.subr.mxu0 0.0
    %3388 = vmatpush1.msra.mxu0 0.0
    %3389 = vmatprep.subr.mxu0 0.0
    %3390 = vmatpush1.msra.mxu0 0.0
    %3391 = vmatprep.subr.mxu0 0.0
    %3392 = vmatpush1.msra.mxu0 0.0
    %3393 = vmatprep.subr.mxu0 0.0
    %3394 = vmatpush1.msra.mxu0 0.0
    %3395 = vmatprep.subr.mxu0 0.0
    %3396 = vmatpush1.msra.mxu0 0.0
    %3397 = vmatprep.subr.mxu0 0.0
    %3398 = vmatpush1.msra.mxu0 0.0
    %3399 = vmatprep.subr.mxu0 0.0
    %3400 = vmatpush1.msra.mxu0 0.0
    %3401 = vmatprep.mubr.f32.mxu0 0.0
    %3402 = vmatmul.mubr.f32.gmra.mrb[0].mxu0 %v3264
    %v3403 = vpop.f32.mrb[0].mxu0
    %v3404 = vadd.f32 0.0, %v3403
    %v3405 = vpop.f32.mrb[0].mxu0
    %v3406 = vadd.f32 0.0, %v3405
    %3407 = vdwg.mxu0
    %v3408 = vadd.f32 %v3241, %v3333
    %v3409 = vadd.f32 %v3242, %v3335
    %v3410 = vadd.f32 %v3243, %v3404
    %v3411 = vadd.f32 %v3244, %v3406
    %3412 = vrot.lane.b32.xlu0 %v2097, 111
    %v3413 = vpop.permute.xlu0 %3412
    %3414 = vrot.lane.b32.xlu0 %v2098, 111
    %v3415 = vpop.permute.xlu0 %3414
    %3416 = vrot.lane.b32.xlu0 %v2099, 111
    %v3417 = vpop.permute.xlu0 %3416
    %3418 = vrot.lane.b32.xlu0 %v2100, 111
    %v3419 = vpop.permute.xlu0 %3418
    %v3420 = vsel %vm1641, %v3417, %v3419
    %v3421 = vsel %vm1641, %v3415, %v3417
    %v3422 = vsel %vm1641, %v3413, %v3415
    %v3423 = vsel %vm1641, %v3419, %v3413
    %v3424 = vmul.f32 %v3422, %v1650
    %v3425 = vmul.f32 %v3421, %v1654
    %v3426 = vmul.f32 %v3420, %v1658
    %v3427 = vmul.f32 %v3423, %v1662
    %s3428 = scalar_lea.vmem %s5, 64
    %v3429 = vld [vmem:[%s3428] sm:$0xff]
    %v3431 = vsel %vm1903, %v3429, 0
    %3433 = vmatprep.subr.mxu0 %v3425
    %3434 = vmatpush1.msra.mxu0 %v3424
    %3435 = vmatprep.subr.mxu0 0.0
    %3436 = vmatpush1.msra.mxu0 0.0
    %3437 = vmatprep.subr.mxu0 0.0
    %3438 = vmatpush1.msra.mxu0 0.0
    %3439 = vmatprep.subr.mxu0 0.0
    %3440 = vmatpush1.msra.mxu0 0.0
    %3441 = vmatprep.subr.mxu0 0.0
    %3442 = vmatpush1.msra.mxu0 0.0
    %3443 = vmatprep.subr.mxu0 0.0
    %3444 = vmatpush1.msra.mxu0 0.0
    %3445 = vmatprep.subr.mxu0 0.0
    %3446 = vmatpush1.msra.mxu0 0.0
    %3447 = vmatprep.subr.mxu0 0.0
    %3448 = vmatpush1.msra.mxu0 0.0
    %3449 = vmatprep.subr.mxu0 0.0
    %3450 = vmatpush1.msra.mxu0 0.0
    %3451 = vmatprep.subr.mxu0 0.0
    %3452 = vmatpush1.msra.mxu0 0.0
    %3453 = vmatprep.subr.mxu0 0.0
    %3454 = vmatpush1.msra.mxu0 0.0
    %3455 = vmatprep.subr.mxu0 0.0
    %3456 = vmatpush1.msra.mxu0 0.0
    %3457 = vmatprep.subr.mxu0 0.0
    %3458 = vmatpush1.msra.mxu0 0.0
    %3459 = vmatprep.subr.mxu0 0.0
    %3460 = vmatpush1.msra.mxu0 0.0
    %3461 = vmatprep.subr.mxu0 0.0
    %3462 = vmatpush1.msra.mxu0 0.0
    %3463 = vmatprep.subr.mxu0 0.0
    %3464 = vmatpush1.msra.mxu0 0.0
    %3465 = vmatprep.subr.mxu0 0.0
    %3466 = vmatpush1.msra.mxu0 0.0
    %3467 = vmatprep.subr.mxu0 0.0
    %3468 = vmatpush1.msra.mxu0 0.0
    %3469 = vmatprep.subr.mxu0 0.0
    %3470 = vmatpush1.msra.mxu0 0.0
    %3471 = vmatprep.subr.mxu0 0.0
    %3472 = vmatpush1.msra.mxu0 0.0
    %3473 = vmatprep.subr.mxu0 0.0
    %3474 = vmatpush1.msra.mxu0 0.0
    %3475 = vmatprep.subr.mxu0 0.0
    %3476 = vmatpush1.msra.mxu0 0.0
    %3477 = vmatprep.subr.mxu0 0.0
    %3478 = vmatpush1.msra.mxu0 0.0
    %3479 = vmatprep.subr.mxu0 0.0
    %3480 = vmatpush1.msra.mxu0 0.0
    %3481 = vmatprep.subr.mxu0 0.0
    %3482 = vmatpush1.msra.mxu0 0.0
    %3483 = vmatprep.subr.mxu0 0.0
    %3484 = vmatpush1.msra.mxu0 0.0
    %3485 = vmatprep.subr.mxu0 0.0
    %3486 = vmatpush1.msra.mxu0 0.0
    %3487 = vmatprep.subr.mxu0 0.0
    %3488 = vmatpush1.msra.mxu0 0.0
    %3489 = vmatprep.subr.mxu0 0.0
    %3490 = vmatpush1.msra.mxu0 0.0
    %3491 = vmatprep.subr.mxu0 0.0
    %3492 = vmatpush1.msra.mxu0 0.0
    %3493 = vmatprep.subr.mxu0 0.0
    %3494 = vmatpush1.msra.mxu0 0.0
    %3495 = vmatprep.subr.mxu0 0.0
    %3496 = vmatpush1.msra.mxu0 0.0
    %3497 = vmatprep.mubr.f32.mxu0 0.0
    %3498 = vmatmul.mubr.f32.gmra.mrb[0].mxu0 %v3431
    %v3499 = vpop.f32.mrb[0].mxu0
    %v3500 = vadd.f32 0.0, %v3499
    %v3501 = vpop.f32.mrb[0].mxu0
    %v3502 = vadd.f32 0.0, %v3501
    %3503 = vdwg.mxu0
    %3504 = vmatprep.subr.mxu0 %v3427
    %3505 = vmatpush1.msra.mxu0 %v3426
    %3506 = vmatprep.subr.mxu0 0.0
    %3507 = vmatpush1.msra.mxu0 0.0
    %3508 = vmatprep.subr.mxu0 0.0
    %3509 = vmatpush1.msra.mxu0 0.0
    %3510 = vmatprep.subr.mxu0 0.0
    %3511 = vmatpush1.msra.mxu0 0.0
    %3512 = vmatprep.subr.mxu0 0.0
    %3513 = vmatpush1.msra.mxu0 0.0
    %3514 = vmatprep.subr.mxu0 0.0
    %3515 = vmatpush1.msra.mxu0 0.0
    %3516 = vmatprep.subr.mxu0 0.0
    %3517 = vmatpush1.msra.mxu0 0.0
    %3518 = vmatprep.subr.mxu0 0.0
    %3519 = vmatpush1.msra.mxu0 0.0
    %3520 = vmatprep.subr.mxu0 0.0
    %3521 = vmatpush1.msra.mxu0 0.0
    %3522 = vmatprep.subr.mxu0 0.0
    %3523 = vmatpush1.msra.mxu0 0.0
    %3524 = vmatprep.subr.mxu0 0.0
    %3525 = vmatpush1.msra.mxu0 0.0
    %3526 = vmatprep.subr.mxu0 0.0
    %3527 = vmatpush1.msra.mxu0 0.0
    %3528 = vmatprep.subr.mxu0 0.0
    %3529 = vmatpush1.msra.mxu0 0.0
    %3530 = vmatprep.subr.mxu0 0.0
    %3531 = vmatpush1.msra.mxu0 0.0
    %3532 = vmatprep.subr.mxu0 0.0
    %3533 = vmatpush1.msra.mxu0 0.0
    %3534 = vmatprep.subr.mxu0 0.0
    %3535 = vmatpush1.msra.mxu0 0.0
    %3536 = vmatprep.subr.mxu0 0.0
    %3537 = vmatpush1.msra.mxu0 0.0
    %3538 = vmatprep.subr.mxu0 0.0
    %3539 = vmatpush1.msra.mxu0 0.0
    %3540 = vmatprep.subr.mxu0 0.0
    %3541 = vmatpush1.msra.mxu0 0.0
    %3542 = vmatprep.subr.mxu0 0.0
    %3543 = vmatpush1.msra.mxu0 0.0
    %3544 = vmatprep.subr.mxu0 0.0
    %3545 = vmatpush1.msra.mxu0 0.0
    %3546 = vmatprep.subr.mxu0 0.0
    %3547 = vmatpush1.msra.mxu0 0.0
    %3548 = vmatprep.subr.mxu0 0.0
    %3549 = vmatpush1.msra.mxu0 0.0
    %3550 = vmatprep.subr.mxu0 0.0
    %3551 = vmatpush1.msra.mxu0 0.0
    %3552 = vmatprep.subr.mxu0 0.0
    %3553 = vmatpush1.msra.mxu0 0.0
    %3554 = vmatprep.subr.mxu0 0.0
    %3555 = vmatpush1.msra.mxu0 0.0
    %3556 = vmatprep.subr.mxu0 0.0
    %3557 = vmatpush1.msra.mxu0 0.0
    %3558 = vmatprep.subr.mxu0 0.0
    %3559 = vmatpush1.msra.mxu0 0.0
    %3560 = vmatprep.subr.mxu0 0.0
    %3561 = vmatpush1.msra.mxu0 0.0
    %3562 = vmatprep.subr.mxu0 0.0
    %3563 = vmatpush1.msra.mxu0 0.0
    %3564 = vmatprep.subr.mxu0 0.0
    %3565 = vmatpush1.msra.mxu0 0.0
    %3566 = vmatprep.subr.mxu0 0.0
    %3567 = vmatpush1.msra.mxu0 0.0
    %3568 = vmatprep.mubr.f32.mxu0 0.0
    %3569 = vmatmul.mubr.f32.gmra.mrb[0].mxu0 %v3431
    %v3570 = vpop.f32.mrb[0].mxu0
    %v3571 = vadd.f32 0.0, %v3570
    %v3572 = vpop.f32.mrb[0].mxu0
    %v3573 = vadd.f32 0.0, %v3572
    %3574 = vdwg.mxu0
    %v3575 = vadd.f32 %v3408, %v3500
    %v3576 = vadd.f32 %v3409, %v3502
    %v3577 = vadd.f32 %v3410, %v3571
    %v3578 = vadd.f32 %v3411, %v3573
    %v3579 = vld [vmem:[%s6] sm:$0xff]
    %3581 = vset.pattern.permute.xlu0 0
    %3582 = vperm.xlu0 %3581, %v3579
    %v3583 = vpop.permute.xlu0 %3582
    %v3585 = vadd.f32 %v3575, %v3583
    %v3586 = vadd.f32 %v3576, %v3583
    %v3587 = vadd.f32 %v3577, %v3583
    %v3588 = vadd.f32 %v3578, %v3583
    %s3589 = scalar_lea.vmem %s6, 8
    %v3590 = vld [vmem:[%s3589] sm:$0xff]
    %s3591 = scalar_lea.vmem %s6, 16
    %v3592 = vld [vmem:[%s3591] sm:$0xff]
    %v3593 = vadd.f32 %v3585, %v3586
    %v3594 = vadd.f32 %v3593, %v3587
    %v3595 = vadd.f32 %v3594, %v3588
    %3596 = vadd.xlane.f32.xlu0 %v3595
    %v3597 = vpop.xlane.xlu0 %3596
    %v3598 = vmul.f32 %v3597, 0.001953125
    %v3599 = vmul.f32 %v3585, %v3585
    %v3600 = vmul.f32 %v3586, %v3586
    %v3601 = vmul.f32 %v3587, %v3587
    %v3602 = vmul.f32 %v3588, %v3588
    %v3603 = vadd.f32 %v3599, %v3600
    %v3604 = vadd.f32 %v3603, %v3601
    %v3605 = vadd.f32 %v3604, %v3602
    %3606 = vadd.xlane.f32.xlu0 %v3605
    %v3607 = vpop.xlane.xlu0 %3606
    %v3608 = vmul.f32 %v3607, 0.001953125
    %v3609 = vmul.f32 %v3598, %v3598
    %v3610 = vsub.f32 %v3608, %v3609
    %v3611 = vmax.f32 %v3610, 0.0
    %v3612 = vadd.f32 %v3611, 1e-05
    %v3613 = vrsqrt.pop %v3612
    %v3614 = vmul.f32 %v3613, %v3590
    %v3615 = vsub.f32 %v3585, %v3598
    %v3616 = vsub.f32 %v3586, %v3598
    %v3617 = vsub.f32 %v3587, %v3598
    %v3618 = vsub.f32 %v3588, %v3598
    %3620 = vset.pattern.permute.xlu0 0
    %3621 = vperm.xlu0 %3620, %v3614
    %v3622 = vpop.permute.xlu0 %3621
    %v3624 = vmul.f32 %v3615, %v3622
    %v3625 = vmul.f32 %v3616, %v3622
    %v3626 = vmul.f32 %v3617, %v3622
    %v3627 = vmul.f32 %v3618, %v3622
    %3629 = vset.pattern.permute.xlu0 0
    %3630 = vperm.xlu0 %3629, %v3592
    %v3631 = vpop.permute.xlu0 %3630
    %v3633 = vadd.f32 %v3624, %v3631
    %v3634 = vadd.f32 %v3625, %v3631
    %v3635 = vadd.f32 %v3626, %v3631
    %v3636 = vadd.f32 %v3627, %v3631
    %v3637 = vmax.f32 %v3633, 0.0
    %v3638 = vmax.f32 %v3634, 0.0
    %v3639 = vmax.f32 %v3635, 0.0
    %v3640 = vmax.f32 %v3636, 0.0
    %v3641 = vld [vmem:[%s7] sm:$0xf]
    %v3642 = vld [vmem:[%s8] sm:$0xf]
    %3644 = vset.pattern.permute.xlu0 0
    %3645 = vperm.xlu0 %3644, %v3642
    %v3646 = vpop.permute.xlu0 %3645
    %v3649 = vsel %vm115, %v3641, 0
    %3651 = vmatprep.subr.mxu0 %v279
    %3652 = vmatpush1.msra.mxu0 %v277
    %3653 = vmatprep.subr.mxu0 0.0
    %3654 = vmatpush1.msra.mxu0 0.0
    %3655 = vmatprep.subr.mxu0 0.0
    %3656 = vmatpush1.msra.mxu0 0.0
    %3657 = vmatprep.subr.mxu0 0.0
    %3658 = vmatpush1.msra.mxu0 0.0
    %3659 = vmatprep.subr.mxu0 0.0
    %3660 = vmatpush1.msra.mxu0 0.0
    %3661 = vmatprep.subr.mxu0 0.0
    %3662 = vmatpush1.msra.mxu0 0.0
    %3663 = vmatprep.subr.mxu0 0.0
    %3664 = vmatpush1.msra.mxu0 0.0
    %3665 = vmatprep.subr.mxu0 0.0
    %3666 = vmatpush1.msra.mxu0 0.0
    %3667 = vmatprep.subr.mxu0 0.0
    %3668 = vmatpush1.msra.mxu0 0.0
    %3669 = vmatprep.subr.mxu0 0.0
    %3670 = vmatpush1.msra.mxu0 0.0
    %3671 = vmatprep.subr.mxu0 0.0
    %3672 = vmatpush1.msra.mxu0 0.0
    %3673 = vmatprep.subr.mxu0 0.0
    %3674 = vmatpush1.msra.mxu0 0.0
    %3675 = vmatprep.subr.mxu0 0.0
    %3676 = vmatpush1.msra.mxu0 0.0
    %3677 = vmatprep.subr.mxu0 0.0
    %3678 = vmatpush1.msra.mxu0 0.0
    %3679 = vmatprep.subr.mxu0 0.0
    %3680 = vmatpush1.msra.mxu0 0.0
    %3681 = vmatprep.subr.mxu0 0.0
    %3682 = vmatpush1.msra.mxu0 0.0
    %3683 = vmatprep.subr.mxu0 0.0
    %3684 = vmatpush1.msra.mxu0 0.0
    %3685 = vmatprep.subr.mxu0 0.0
    %3686 = vmatpush1.msra.mxu0 0.0
    %3687 = vmatprep.subr.mxu0 0.0
    %3688 = vmatpush1.msra.mxu0 0.0
    %3689 = vmatprep.subr.mxu0 0.0
    %3690 = vmatpush1.msra.mxu0 0.0
    %3691 = vmatprep.subr.mxu0 0.0
    %3692 = vmatpush1.msra.mxu0 0.0
    %3693 = vmatprep.subr.mxu0 0.0
    %3694 = vmatpush1.msra.mxu0 0.0
    %3695 = vmatprep.subr.mxu0 0.0
    %3696 = vmatpush1.msra.mxu0 0.0
    %3697 = vmatprep.subr.mxu0 0.0
    %3698 = vmatpush1.msra.mxu0 0.0
    %3699 = vmatprep.subr.mxu0 0.0
    %3700 = vmatpush1.msra.mxu0 0.0
    %3701 = vmatprep.subr.mxu0 0.0
    %3702 = vmatpush1.msra.mxu0 0.0
    %3703 = vmatprep.subr.mxu0 0.0
    %3704 = vmatpush1.msra.mxu0 0.0
    %3705 = vmatprep.subr.mxu0 0.0
    %3706 = vmatpush1.msra.mxu0 0.0
    %3707 = vmatprep.subr.mxu0 0.0
    %3708 = vmatpush1.msra.mxu0 0.0
    %3709 = vmatprep.subr.mxu0 0.0
    %3710 = vmatpush1.msra.mxu0 0.0
    %3711 = vmatprep.subr.mxu0 0.0
    %3712 = vmatpush1.msra.mxu0 0.0
    %3713 = vmatprep.subr.mxu0 0.0
    %3714 = vmatpush1.msra.mxu0 0.0
    %3715 = vmatprep.mubr.f32.mxu0 0.0
    %3716 = vmatmul.mubr.f32.gmra.mrb[0].mxu0 %v3649
    %v3717 = vpop.f32.mrb[0].mxu0
    %v3718 = vadd.f32 %v3646, %v3717
    %v3719 = vpop.f32.mrb[0].mxu0
    %v3720 = vadd.f32 %v3646, %v3719
    %3721 = vdwg.mxu0
    %3722 = vmatprep.subr.mxu0 %v283
    %3723 = vmatpush1.msra.mxu0 %v281
    %3724 = vmatprep.subr.mxu0 0.0
    %3725 = vmatpush1.msra.mxu0 0.0
    %3726 = vmatprep.subr.mxu0 0.0
    %3727 = vmatpush1.msra.mxu0 0.0
    %3728 = vmatprep.subr.mxu0 0.0
    %3729 = vmatpush1.msra.mxu0 0.0
    %3730 = vmatprep.subr.mxu0 0.0
    %3731 = vmatpush1.msra.mxu0 0.0
    %3732 = vmatprep.subr.mxu0 0.0
    %3733 = vmatpush1.msra.mxu0 0.0
    %3734 = vmatprep.subr.mxu0 0.0
    %3735 = vmatpush1.msra.mxu0 0.0
    %3736 = vmatprep.subr.mxu0 0.0
    %3737 = vmatpush1.msra.mxu0 0.0
    %3738 = vmatprep.subr.mxu0 0.0
    %3739 = vmatpush1.msra.mxu0 0.0
    %3740 = vmatprep.subr.mxu0 0.0
    %3741 = vmatpush1.msra.mxu0 0.0
    %3742 = vmatprep.subr.mxu0 0.0
    %3743 = vmatpush1.msra.mxu0 0.0
    %3744 = vmatprep.subr.mxu0 0.0
    %3745 = vmatpush1.msra.mxu0 0.0
    %3746 = vmatprep.subr.mxu0 0.0
    %3747 = vmatpush1.msra.mxu0 0.0
    %3748 = vmatprep.subr.mxu0 0.0
    %3749 = vmatpush1.msra.mxu0 0.0
    %3750 = vmatprep.subr.mxu0 0.0
    %3751 = vmatpush1.msra.mxu0 0.0
    %3752 = vmatprep.subr.mxu0 0.0
    %3753 = vmatpush1.msra.mxu0 0.0
    %3754 = vmatprep.subr.mxu0 0.0
    %3755 = vmatpush1.msra.mxu0 0.0
    %3756 = vmatprep.subr.mxu0 0.0
    %3757 = vmatpush1.msra.mxu0 0.0
    %3758 = vmatprep.subr.mxu0 0.0
    %3759 = vmatpush1.msra.mxu0 0.0
    %3760 = vmatprep.subr.mxu0 0.0
    %3761 = vmatpush1.msra.mxu0 0.0
    %3762 = vmatprep.subr.mxu0 0.0
    %3763 = vmatpush1.msra.mxu0 0.0
    %3764 = vmatprep.subr.mxu0 0.0
    %3765 = vmatpush1.msra.mxu0 0.0
    %3766 = vmatprep.subr.mxu0 0.0
    %3767 = vmatpush1.msra.mxu0 0.0
    %3768 = vmatprep.subr.mxu0 0.0
    %3769 = vmatpush1.msra.mxu0 0.0
    %3770 = vmatprep.subr.mxu0 0.0
    %3771 = vmatpush1.msra.mxu0 0.0
    %3772 = vmatprep.subr.mxu0 0.0
    %3773 = vmatpush1.msra.mxu0 0.0
    %3774 = vmatprep.subr.mxu0 0.0
    %3775 = vmatpush1.msra.mxu0 0.0
    %3776 = vmatprep.subr.mxu0 0.0
    %3777 = vmatpush1.msra.mxu0 0.0
    %3778 = vmatprep.subr.mxu0 0.0
    %3779 = vmatpush1.msra.mxu0 0.0
    %3780 = vmatprep.subr.mxu0 0.0
    %3781 = vmatpush1.msra.mxu0 0.0
    %3782 = vmatprep.subr.mxu0 0.0
    %3783 = vmatpush1.msra.mxu0 0.0
    %3784 = vmatprep.subr.mxu0 0.0
    %3785 = vmatpush1.msra.mxu0 0.0
    %3786 = vmatprep.mubr.f32.mxu0 0.0
    %3787 = vmatmul.mubr.f32.gmra.mrb[0].mxu0 %v3649
    %v3788 = vpop.f32.mrb[0].mxu0
    %v3789 = vadd.f32 %v3646, %v3788
    %v3790 = vpop.f32.mrb[0].mxu0
    %v3791 = vadd.f32 %v3646, %v3790
    %3792 = vdwg.mxu0
    %s3793 = scalar_lea.vmem %s8, 4
    %v3794 = vld [vmem:[%s3793] sm:$0xf]
    %s3795 = scalar_lea.vmem %s8, 8
    %v3796 = vld [vmem:[%s3795] sm:$0xf]
    %v3797 = vsel %vm119, %v3718, 0.0
    %v3798 = vsel %vm119, %v3720, 0.0
    %v3799 = vadd.f32 %v3797, %v3798
    %v3800 = vsel %vm119, %v3789, 0.0
    %v3801 = vadd.f32 %v3799, %v3800
    %v3802 = vsel %vm119, %v3791, 0.0
    %v3803 = vadd.f32 %v3801, %v3802
    %3804 = vadd.xlane.f32.xlu0 %v3803
    %v3805 = vpop.xlane.xlu0 %3804
    %v3806 = vmul.f32 %v3805, 0.001953125
    %v3807 = vmul.f32 %v3718, %v3718
    %v3808 = vmul.f32 %v3720, %v3720
    %v3809 = vmul.f32 %v3789, %v3789
    %v3810 = vmul.f32 %v3791, %v3791
    %v3811 = vsel %vm119, %v3807, 0.0
    %v3812 = vsel %vm119, %v3808, 0.0
    %v3813 = vadd.f32 %v3811, %v3812
    %v3814 = vsel %vm119, %v3809, 0.0
    %v3815 = vadd.f32 %v3813, %v3814
    %v3816 = vsel %vm119, %v3810, 0.0
    %v3817 = vadd.f32 %v3815, %v3816
    %3818 = vadd.xlane.f32.xlu0 %v3817
    %v3819 = vpop.xlane.xlu0 %3818
    %v3820 = vmul.f32 %v3819, 0.001953125
    %v3821 = vmul.f32 %v3806, %v3806
    %v3822 = vsub.f32 %v3820, %v3821
    %v3823 = vmax.f32 %v3822, 0.0
    %v3824 = vadd.f32 %v3823, 1e-05
    %v3825 = vrsqrt.pop %v3824
    %v3826 = vmul.f32 %v3825, %v3794
    %v3827 = vsub.f32 %v3718, %v3806
    %v3828 = vsub.f32 %v3720, %v3806
    %v3829 = vsub.f32 %v3789, %v3806
    %v3830 = vsub.f32 %v3791, %v3806
    %3832 = vset.pattern.permute.xlu0 0
    %3833 = vperm.xlu0 %3832, %v3826
    %v3834 = vpop.permute.xlu0 %3833
    %v3836 = vmul.f32 %v3827, %v3834
    %v3837 = vmul.f32 %v3828, %v3834
    %v3838 = vmul.f32 %v3829, %v3834
    %v3839 = vmul.f32 %v3830, %v3834
    %3841 = vset.pattern.permute.xlu0 0
    %3842 = vperm.xlu0 %3841, %v3796
    %v3843 = vpop.permute.xlu0 %3842
    %v3845 = vadd.f32 %v3836, %v3843
    %v3846 = vadd.f32 %v3837, %v3843
    %v3847 = vadd.f32 %v3838, %v3843
    %v3848 = vadd.f32 %v3839, %v3843
    %v3849 = vmax.f32 %v3845, 0.0
    %v3850 = vmax.f32 %v3846, 0.0
    %v3851 = vmax.f32 %v3847, 0.0
    %v3852 = vmax.f32 %v3848, 0.0
    %v3853 = vld [vmem:[%s10] sm:$0xff]
    %s3854 = scalar_lea.vmem %s10, 8
    %v3855 = vld [vmem:[%s3854] sm:$0xff]
    %v3857 = vsel %vm115, %v3855, 0
    %v3860 = vsel %vm119, %v3849, 0
    %v3863 = vsel %vm119, %v3850, 0
    %v3866 = vsel %vm119, %v3851, 0
    %v3869 = vsel %vm119, %v3852, 0
    %3871 = vmatprep.subr.mxu0 %v3863
    %3872 = vmatpush1.msra.mxu0 %v3860
    %3873 = vmatprep.subr.mxu0 0.0
    %3874 = vmatpush1.msra.mxu0 0.0
    %3875 = vmatprep.subr.mxu0 0.0
    %3876 = vmatpush1.msra.mxu0 0.0
    %3877 = vmatprep.subr.mxu0 0.0
    %3878 = vmatpush1.msra.mxu0 0.0
    %3879 = vmatprep.subr.mxu0 0.0
    %3880 = vmatpush1.msra.mxu0 0.0
    %3881 = vmatprep.subr.mxu0 0.0
    %3882 = vmatpush1.msra.mxu0 0.0
    %3883 = vmatprep.subr.mxu0 0.0
    %3884 = vmatpush1.msra.mxu0 0.0
    %3885 = vmatprep.subr.mxu0 0.0
    %3886 = vmatpush1.msra.mxu0 0.0
    %3887 = vmatprep.subr.mxu0 0.0
    %3888 = vmatpush1.msra.mxu0 0.0
    %3889 = vmatprep.subr.mxu0 0.0
    %3890 = vmatpush1.msra.mxu0 0.0
    %3891 = vmatprep.subr.mxu0 0.0
    %3892 = vmatpush1.msra.mxu0 0.0
    %3893 = vmatprep.subr.mxu0 0.0
    %3894 = vmatpush1.msra.mxu0 0.0
    %3895 = vmatprep.subr.mxu0 0.0
    %3896 = vmatpush1.msra.mxu0 0.0
    %3897 = vmatprep.subr.mxu0 0.0
    %3898 = vmatpush1.msra.mxu0 0.0
    %3899 = vmatprep.subr.mxu0 0.0
    %3900 = vmatpush1.msra.mxu0 0.0
    %3901 = vmatprep.subr.mxu0 0.0
    %3902 = vmatpush1.msra.mxu0 0.0
    %3903 = vmatprep.subr.mxu0 0.0
    %3904 = vmatpush1.msra.mxu0 0.0
    %3905 = vmatprep.subr.mxu0 0.0
    %3906 = vmatpush1.msra.mxu0 0.0
    %3907 = vmatprep.subr.mxu0 0.0
    %3908 = vmatpush1.msra.mxu0 0.0
    %3909 = vmatprep.subr.mxu0 0.0
    %3910 = vmatpush1.msra.mxu0 0.0
    %3911 = vmatprep.subr.mxu0 0.0
    %3912 = vmatpush1.msra.mxu0 0.0
    %3913 = vmatprep.subr.mxu0 0.0
    %3914 = vmatpush1.msra.mxu0 0.0
    %3915 = vmatprep.subr.mxu0 0.0
    %3916 = vmatpush1.msra.mxu0 0.0
    %3917 = vmatprep.subr.mxu0 0.0
    %3918 = vmatpush1.msra.mxu0 0.0
    %3919 = vmatprep.subr.mxu0 0.0
    %3920 = vmatpush1.msra.mxu0 0.0
    %3921 = vmatprep.subr.mxu0 0.0
    %3922 = vmatpush1.msra.mxu0 0.0
    %3923 = vmatprep.subr.mxu0 0.0
    %3924 = vmatpush1.msra.mxu0 0.0
    %3925 = vmatprep.subr.mxu0 0.0
    %3926 = vmatpush1.msra.mxu0 0.0
    %3927 = vmatprep.subr.mxu0 0.0
    %3928 = vmatpush1.msra.mxu0 0.0
    %3929 = vmatprep.subr.mxu0 0.0
    %3930 = vmatpush1.msra.mxu0 0.0
    %3931 = vmatprep.subr.mxu0 0.0
    %3932 = vmatpush1.msra.mxu0 0.0
    %3933 = vmatprep.subr.mxu0 0.0
    %3934 = vmatpush1.msra.mxu0 0.0
    %3935 = vmatprep.mubr.f32.mxu0 0.0
    %3936 = vmatmul.mubr.f32.gmra.mrb[0].mxu0 %v3857
    %v3937 = vpop.f32.mrb[0].mxu0
    %v3938 = vadd.f32 0.0, %v3937
    %v3939 = vpop.f32.mrb[0].mxu0
    %v3940 = vadd.f32 0.0, %v3939
    %3941 = vdwg.mxu0
    %3942 = vmatprep.subr.mxu0 %v3869
    %3943 = vmatpush1.msra.mxu0 %v3866
    %3944 = vmatprep.subr.mxu0 0.0
    %3945 = vmatpush1.msra.mxu0 0.0
    %3946 = vmatprep.subr.mxu0 0.0
    %3947 = vmatpush1.msra.mxu0 0.0
    %3948 = vmatprep.subr.mxu0 0.0
    %3949 = vmatpush1.msra.mxu0 0.0
    %3950 = vmatprep.subr.mxu0 0.0
    %3951 = vmatpush1.msra.mxu0 0.0
    %3952 = vmatprep.subr.mxu0 0.0
    %3953 = vmatpush1.msra.mxu0 0.0
    %3954 = vmatprep.subr.mxu0 0.0
    %3955 = vmatpush1.msra.mxu0 0.0
    %3956 = vmatprep.subr.mxu0 0.0
    %3957 = vmatpush1.msra.mxu0 0.0
    %3958 = vmatprep.subr.mxu0 0.0
    %3959 = vmatpush1.msra.mxu0 0.0
    %3960 = vmatprep.subr.mxu0 0.0
    %3961 = vmatpush1.msra.mxu0 0.0
    %3962 = vmatprep.subr.mxu0 0.0
    %3963 = vmatpush1.msra.mxu0 0.0
    %3964 = vmatprep.subr.mxu0 0.0
    %3965 = vmatpush1.msra.mxu0 0.0
    %3966 = vmatprep.subr.mxu0 0.0
    %3967 = vmatpush1.msra.mxu0 0.0
    %3968 = vmatprep.subr.mxu0 0.0
    %3969 = vmatpush1.msra.mxu0 0.0
    %3970 = vmatprep.subr.mxu0 0.0
    %3971 = vmatpush1.msra.mxu0 0.0
    %3972 = vmatprep.subr.mxu0 0.0
    %3973 = vmatpush1.msra.mxu0 0.0
    %3974 = vmatprep.subr.mxu0 0.0
    %3975 = vmatpush1.msra.mxu0 0.0
    %3976 = vmatprep.subr.mxu0 0.0
    %3977 = vmatpush1.msra.mxu0 0.0
    %3978 = vmatprep.subr.mxu0 0.0
    %3979 = vmatpush1.msra.mxu0 0.0
    %3980 = vmatprep.subr.mxu0 0.0
    %3981 = vmatpush1.msra.mxu0 0.0
    %3982 = vmatprep.subr.mxu0 0.0
    %3983 = vmatpush1.msra.mxu0 0.0
    %3984 = vmatprep.subr.mxu0 0.0
    %3985 = vmatpush1.msra.mxu0 0.0
    %3986 = vmatprep.subr.mxu0 0.0
    %3987 = vmatpush1.msra.mxu0 0.0
    %3988 = vmatprep.subr.mxu0 0.0
    %3989 = vmatpush1.msra.mxu0 0.0
    %3990 = vmatprep.subr.mxu0 0.0
    %3991 = vmatpush1.msra.mxu0 0.0
    %3992 = vmatprep.subr.mxu0 0.0
    %3993 = vmatpush1.msra.mxu0 0.0
    %3994 = vmatprep.subr.mxu0 0.0
    %3995 = vmatpush1.msra.mxu0 0.0
    %3996 = vmatprep.subr.mxu0 0.0
    %3997 = vmatpush1.msra.mxu0 0.0
    %3998 = vmatprep.subr.mxu0 0.0
    %3999 = vmatpush1.msra.mxu0 0.0
    %4000 = vmatprep.subr.mxu0 0.0
    %4001 = vmatpush1.msra.mxu0 0.0
    %4002 = vmatprep.subr.mxu0 0.0
    %4003 = vmatpush1.msra.mxu0 0.0
    %4004 = vmatprep.subr.mxu0 0.0
    %4005 = vmatpush1.msra.mxu0 0.0
    %4006 = vmatprep.mubr.f32.mxu0 0.0
    %4007 = vmatmul.mubr.f32.gmra.mrb[0].mxu0 %v3857
    %v4008 = vpop.f32.mrb[0].mxu0
    %v4009 = vadd.f32 0.0, %v4008
    %v4010 = vpop.f32.mrb[0].mxu0
    %v4011 = vadd.f32 0.0, %v4010
    %4012 = vdwg.mxu0
    %v4014 = vsel %vm115, %v3853, 0
    %4016 = vmatprep.subr.mxu0 %v279
    %4017 = vmatpush1.msra.mxu0 %v277
    %4018 = vmatprep.subr.mxu0 0.0
    %4019 = vmatpush1.msra.mxu0 0.0
    %4020 = vmatprep.subr.mxu0 0.0
    %4021 = vmatpush1.msra.mxu0 0.0
    %4022 = vmatprep.subr.mxu0 0.0
    %4023 = vmatpush1.msra.mxu0 0.0
    %4024 = vmatprep.subr.mxu0 0.0
    %4025 = vmatpush1.msra.mxu0 0.0
    %4026 = vmatprep.subr.mxu0 0.0
    %4027 = vmatpush1.msra.mxu0 0.0
    %4028 = vmatprep.subr.mxu0 0.0
    %4029 = vmatpush1.msra.mxu0 0.0
    %4030 = vmatprep.subr.mxu0 0.0
    %4031 = vmatpush1.msra.mxu0 0.0
    %4032 = vmatprep.subr.mxu0 0.0
    %4033 = vmatpush1.msra.mxu0 0.0
    %4034 = vmatprep.subr.mxu0 0.0
    %4035 = vmatpush1.msra.mxu0 0.0
    %4036 = vmatprep.subr.mxu0 0.0
    %4037 = vmatpush1.msra.mxu0 0.0
    %4038 = vmatprep.subr.mxu0 0.0
    %4039 = vmatpush1.msra.mxu0 0.0
    %4040 = vmatprep.subr.mxu0 0.0
    %4041 = vmatpush1.msra.mxu0 0.0
    %4042 = vmatprep.subr.mxu0 0.0
    %4043 = vmatpush1.msra.mxu0 0.0
    %4044 = vmatprep.subr.mxu0 0.0
    %4045 = vmatpush1.msra.mxu0 0.0
    %4046 = vmatprep.subr.mxu0 0.0
    %4047 = vmatpush1.msra.mxu0 0.0
    %4048 = vmatprep.subr.mxu0 0.0
    %4049 = vmatpush1.msra.mxu0 0.0
    %4050 = vmatprep.subr.mxu0 0.0
    %4051 = vmatpush1.msra.mxu0 0.0
    %4052 = vmatprep.subr.mxu0 0.0
    %4053 = vmatpush1.msra.mxu0 0.0
    %4054 = vmatprep.subr.mxu0 0.0
    %4055 = vmatpush1.msra.mxu0 0.0
    %4056 = vmatprep.subr.mxu0 0.0
    %4057 = vmatpush1.msra.mxu0 0.0
    %4058 = vmatprep.subr.mxu0 0.0
    %4059 = vmatpush1.msra.mxu0 0.0
    %4060 = vmatprep.subr.mxu0 0.0
    %4061 = vmatpush1.msra.mxu0 0.0
    %4062 = vmatprep.subr.mxu0 0.0
    %4063 = vmatpush1.msra.mxu0 0.0
    %4064 = vmatprep.subr.mxu0 0.0
    %4065 = vmatpush1.msra.mxu0 0.0
    %4066 = vmatprep.subr.mxu0 0.0
    %4067 = vmatpush1.msra.mxu0 0.0
    %4068 = vmatprep.subr.mxu0 0.0
    %4069 = vmatpush1.msra.mxu0 0.0
    %4070 = vmatprep.subr.mxu0 0.0
    %4071 = vmatpush1.msra.mxu0 0.0
    %4072 = vmatprep.subr.mxu0 0.0
    %4073 = vmatpush1.msra.mxu0 0.0
    %4074 = vmatprep.subr.mxu0 0.0
    %4075 = vmatpush1.msra.mxu0 0.0
    %4076 = vmatprep.subr.mxu0 0.0
    %4077 = vmatpush1.msra.mxu0 0.0
    %4078 = vmatprep.subr.mxu0 0.0
    %4079 = vmatpush1.msra.mxu0 0.0
    %4080 = vmatprep.mubr.f32.mxu0 0.0
    %4081 = vmatmul.mubr.f32.gmra.mrb[0].mxu0 %v4014
    %v4082 = vpop.f32.mrb[0].mxu0
    %v4083 = vadd.f32 %v3938, %v4082
    %v4084 = vpop.f32.mrb[0].mxu0
    %v4085 = vadd.f32 %v3940, %v4084
    %4086 = vdwg.mxu0
    %4087 = vmatprep.subr.mxu0 %v283
    %4088 = vmatpush1.msra.mxu0 %v281
    %4089 = vmatprep.subr.mxu0 0.0
    %4090 = vmatpush1.msra.mxu0 0.0
    %4091 = vmatprep.subr.mxu0 0.0
    %4092 = vmatpush1.msra.mxu0 0.0
    %4093 = vmatprep.subr.mxu0 0.0
    %4094 = vmatpush1.msra.mxu0 0.0
    %4095 = vmatprep.subr.mxu0 0.0
    %4096 = vmatpush1.msra.mxu0 0.0
    %4097 = vmatprep.subr.mxu0 0.0
    %4098 = vmatpush1.msra.mxu0 0.0
    %4099 = vmatprep.subr.mxu0 0.0
    %4100 = vmatpush1.msra.mxu0 0.0
    %4101 = vmatprep.subr.mxu0 0.0
    %4102 = vmatpush1.msra.mxu0 0.0
    %4103 = vmatprep.subr.mxu0 0.0
    %4104 = vmatpush1.msra.mxu0 0.0
    %4105 = vmatprep.subr.mxu0 0.0
    %4106 = vmatpush1.msra.mxu0 0.0
    %4107 = vmatprep.subr.mxu0 0.0
    %4108 = vmatpush1.msra.mxu0 0.0
    %4109 = vmatprep.subr.mxu0 0.0
    %4110 = vmatpush1.msra.mxu0 0.0
    %4111 = vmatprep.subr.mxu0 0.0
    %4112 = vmatpush1.msra.mxu0 0.0
    %4113 = vmatprep.subr.mxu0 0.0
    %4114 = vmatpush1.msra.mxu0 0.0
    %4115 = vmatprep.subr.mxu0 0.0
    %4116 = vmatpush1.msra.mxu0 0.0
    %4117 = vmatprep.subr.mxu0 0.0
    %4118 = vmatpush1.msra.mxu0 0.0
    %4119 = vmatprep.subr.mxu0 0.0
    %4120 = vmatpush1.msra.mxu0 0.0
    %4121 = vmatprep.subr.mxu0 0.0
    %4122 = vmatpush1.msra.mxu0 0.0
    %4123 = vmatprep.subr.mxu0 0.0
    %4124 = vmatpush1.msra.mxu0 0.0
    %4125 = vmatprep.subr.mxu0 0.0
    %4126 = vmatpush1.msra.mxu0 0.0
    %4127 = vmatprep.subr.mxu0 0.0
    %4128 = vmatpush1.msra.mxu0 0.0
    %4129 = vmatprep.subr.mxu0 0.0
    %4130 = vmatpush1.msra.mxu0 0.0
    %4131 = vmatprep.subr.mxu0 0.0
    %4132 = vmatpush1.msra.mxu0 0.0
    %4133 = vmatprep.subr.mxu0 0.0
    %4134 = vmatpush1.msra.mxu0 0.0
    %4135 = vmatprep.subr.mxu0 0.0
    %4136 = vmatpush1.msra.mxu0 0.0
    %4137 = vmatprep.subr.mxu0 0.0
    %4138 = vmatpush1.msra.mxu0 0.0
    %4139 = vmatprep.subr.mxu0 0.0
    %4140 = vmatpush1.msra.mxu0 0.0
    %4141 = vmatprep.subr.mxu0 0.0
    %4142 = vmatpush1.msra.mxu0 0.0
    %4143 = vmatprep.subr.mxu0 0.0
    %4144 = vmatpush1.msra.mxu0 0.0
    %4145 = vmatprep.subr.mxu0 0.0
    %4146 = vmatpush1.msra.mxu0 0.0
    %4147 = vmatprep.subr.mxu0 0.0
    %4148 = vmatpush1.msra.mxu0 0.0
    %4149 = vmatprep.subr.mxu0 0.0
    %4150 = vmatpush1.msra.mxu0 0.0
    %4151 = vmatprep.mubr.f32.mxu0 0.0
    %4152 = vmatmul.mubr.f32.gmra.mrb[0].mxu0 %v4014
    %v4153 = vpop.f32.mrb[0].mxu0
    %v4154 = vadd.f32 %v4009, %v4153
    %v4155 = vpop.f32.mrb[0].mxu0
    %v4156 = vadd.f32 %v4011, %v4155
    %4157 = vdwg.mxu0
    %v4158 = vadd.f32 %v3637, %v4083
    %v4159 = vadd.f32 %v3638, %v4085
    %v4160 = vadd.f32 %v3639, %v4154
    %v4161 = vadd.f32 %v3640, %v4156
    %4162 = vrot.lane.b32.xlu0 %v4158, 127
    %v4163 = vpop.permute.xlu0 %4162
    %4164 = vrot.lane.b32.xlu0 %v4159, 127
    %v4165 = vpop.permute.xlu0 %4164
    %4166 = vrot.lane.b32.xlu0 %v4160, 127
    %v4167 = vpop.permute.xlu0 %4166
    %4168 = vrot.lane.b32.xlu0 %v4161, 127
    %v4169 = vpop.permute.xlu0 %4168
    %v4170 = vsel %vm1038, %v4167, %v4169
    %v4171 = vsel %vm1038, %v4165, %v4167
    %v4172 = vsel %vm1038, %v4163, %v4165
    %v4173 = vsel %vm1038, %v4169, %v4163
    %v4174 = vmax.f32 %v4158, %v4172
    %v4175 = vmax.f32 %v4159, %v4171
    %v4176 = vmax.f32 %v4160, %v4170
    %v4177 = vmax.f32 %v4161, %v4173
    %4178 = vrot.lane.b32.xlu0 %v4174, 112
    %v4179 = vpop.permute.xlu0 %4178
    %4180 = vrot.lane.b32.xlu0 %v4175, 112
    %v4181 = vpop.permute.xlu0 %4180
    %4182 = vrot.lane.b32.xlu0 %v4176, 112
    %v4183 = vpop.permute.xlu0 %4182
    %4184 = vrot.lane.b32.xlu0 %v4177, 112
    %v4185 = vpop.permute.xlu0 %4184
    %v4186 = vsel %vm1440, %v4183, %v4185
    %v4187 = vsel %vm1440, %v4181, %v4183
    %v4188 = vsel %vm1440, %v4179, %v4181
    %v4189 = vsel %vm1440, %v4185, %v4179
    %v4190 = vmax.f32 %v4174, %v4188
    %v4191 = vmax.f32 %v4175, %v4187
    %v4192 = vmax.f32 %v4176, %v4186
    %v4193 = vmax.f32 %v4177, %v4189
    %v4194 = vld [vmem:[#allocation2] sm:$0xff]
    %v4195 = vld [vmem:[#allocation2 + $0x8] sm:$0xff]
    %v4196 = vld [vmem:[#allocation2 + $0x10] sm:$0xff]
    %v4197 = vld [vmem:[#allocation2 + $0x18] sm:$0xff]
    %v4198 = vld [vmem:[#allocation2 + $0x20] sm:$0xff]
    %v4199 = vld [vmem:[#allocation2 + $0x28] sm:$0xff]
    %v4200 = vld [vmem:[#allocation2 + $0x30] sm:$0xff]
    %v4201 = vld [vmem:[#allocation2 + $0x38] sm:$0xff]
    %v4202 = vld [vmem:[#allocation2 + $0x40] sm:$0xff]
    %v4203 = vld [vmem:[#allocation2 + $0x48] sm:$0xff]
    %v4204 = vld [vmem:[#allocation2 + $0x50] sm:$0xff]
    %v4205 = vld [vmem:[#allocation2 + $0x58] sm:$0xff]
    %v4206 = vld [vmem:[#allocation2 + $0x60] sm:$0xff]
    %v4207 = vld [vmem:[#allocation2 + $0x68] sm:$0xff]
    %v4208 = vld [vmem:[#allocation2 + $0x70] sm:$0xff]
    %v4209 = vld [vmem:[#allocation2 + $0x78] sm:$0xff]
    %v4210 = vld [vmem:[#allocation2 + $0x80] sm:$0xff]
    %v4211 = vld [vmem:[#allocation2 + $0x88] sm:$0xff]
    %v4212 = vld [vmem:[#allocation2 + $0x90] sm:$0xff]
    %v4213 = vld [vmem:[#allocation2 + $0x98] sm:$0xff]
    %v4214 = vld [vmem:[#allocation2 + $0xa0] sm:$0xff]
    %v4215 = vld [vmem:[#allocation2 + $0xa8] sm:$0xff]
    %v4216 = vld [vmem:[#allocation2 + $0xb0] sm:$0xff]
    %v4217 = vld [vmem:[#allocation2 + $0xb8] sm:$0xff]
    %v4218 = vld [vmem:[#allocation2 + $0xc0] sm:$0xff]
    %v4219 = vld [vmem:[#allocation2 + $0xc8] sm:$0xff]
    %v4220 = vld [vmem:[#allocation2 + $0xd0] sm:$0xff]
    %v4221 = vld [vmem:[#allocation2 + $0xd8] sm:$0xff]
    %v4222 = vld [vmem:[#allocation2 + $0xe0] sm:$0xff]
    %v4223 = vld [vmem:[#allocation2 + $0xe8] sm:$0xff]
    %v4224 = vld [vmem:[#allocation2 + $0xf0] sm:$0xff]
    %v4225 = vld [vmem:[#allocation2 + $0xf8] sm:$0xff]
    %v4226 = vld [vmem:[#allocation2 + $0x100] sm:$0xff]
    %v4227 = vld [vmem:[#allocation2 + $0x108] sm:$0xff]
    %v4228 = vld [vmem:[#allocation2 + $0x110] sm:$0xff]
    %v4229 = vld [vmem:[#allocation2 + $0x118] sm:$0xff]
    %v4230 = vld [vmem:[#allocation2 + $0x120] sm:$0xff]
    %v4231 = vld [vmem:[#allocation2 + $0x128] sm:$0xff]
    %v4232 = vld [vmem:[#allocation2 + $0x130] sm:$0xff]
    %v4233 = vld [vmem:[#allocation2 + $0x138] sm:$0xff]
    %v4234 = vld [vmem:[#allocation2 + $0x140] sm:$0xff]
    %v4235 = vld [vmem:[#allocation2 + $0x148] sm:$0xff]
    %v4236 = vld [vmem:[#allocation2 + $0x150] sm:$0xff]
    %v4237 = vld [vmem:[#allocation2 + $0x158] sm:$0xff]
    %v4238 = vld [vmem:[#allocation2 + $0x160] sm:$0xff]
    %v4239 = vld [vmem:[#allocation2 + $0x168] sm:$0xff]
    %v4240 = vld [vmem:[#allocation2 + $0x170] sm:$0xff]
    %v4241 = vld [vmem:[#allocation2 + $0x178] sm:$0xff]
    %v4242 = vld [vmem:[#allocation2 + $0x180] sm:$0xff]
    %v4243 = vld [vmem:[#allocation2 + $0x188] sm:$0xff]
    %v4244 = vld [vmem:[#allocation2 + $0x190] sm:$0xff]
    %v4245 = vld [vmem:[#allocation2 + $0x198] sm:$0xff]
    %v4246 = vld [vmem:[#allocation2 + $0x1a0] sm:$0xff]
    %v4247 = vld [vmem:[#allocation2 + $0x1a8] sm:$0xff]
    %v4248 = vld [vmem:[#allocation2 + $0x1b0] sm:$0xff]
    %v4249 = vld [vmem:[#allocation2 + $0x1b8] sm:$0xff]
    %v4250 = vld [vmem:[#allocation2 + $0x1c0] sm:$0xff]
    %v4251 = vld [vmem:[#allocation2 + $0x1c8] sm:$0xff]
    %v4252 = vld [vmem:[#allocation2 + $0x1d0] sm:$0xff]
    %v4253 = vld [vmem:[#allocation2 + $0x1d8] sm:$0xff]
    %v4254 = vld [vmem:[#allocation2 + $0x1e0] sm:$0xff]
    %v4255 = vld [vmem:[#allocation2 + $0x1e8] sm:$0xff]
    %v4256 = vld [vmem:[#allocation2 + $0x1f0] sm:$0xff]
    %v4257 = vld [vmem:[#allocation2 + $0x1f8] sm:$0xff]
    %4258 = vmatprep.subr.mxu0 0.0
    %4259 = vmatpush1.msra.mxu0 %v4194
    %4260 = vmatprep.subr.mxu0 0.0
    %4261 = vmatpush1.msra.mxu0 %v4195
    %4262 = vmatprep.subr.mxu0 0.0
    %4263 = vmatpush1.msra.mxu0 %v4196
    %4264 = vmatprep.subr.mxu0 0.0
    %4265 = vmatpush1.msra.mxu0 %v4197
    %4266 = vmatprep.subr.mxu0 0.0
    %4267 = vmatpush1.msra.mxu0 %v4198
    %4268 = vmatprep.subr.mxu0 0.0
    %4269 = vmatpush1.msra.mxu0 %v4199
    %4270 = vmatprep.subr.mxu0 0.0
    %4271 = vmatpush1.msra.mxu0 %v4200
    %4272 = vmatprep.subr.mxu0 0.0
    %4273 = vmatpush1.msra.mxu0 %v4201
    %4274 = vmatprep.subr.mxu0 0.0
    %4275 = vmatpush1.msra.mxu0 %v4202
    %4276 = vmatprep.subr.mxu0 0.0
    %4277 = vmatpush1.msra.mxu0 %v4203
    %4278 = vmatprep.subr.mxu0 0.0
    %4279 = vmatpush1.msra.mxu0 %v4204
    %4280 = vmatprep.subr.mxu0 0.0
    %4281 = vmatpush1.msra.mxu0 %v4205
    %4282 = vmatprep.subr.mxu0 0.0
    %4283 = vmatpush1.msra.mxu0 %v4206
    %4284 = vmatprep.subr.mxu0 0.0
    %4285 = vmatpush1.msra.mxu0 %v4207
    %4286 = vmatprep.subr.mxu0 0.0
    %4287 = vmatpush1.msra.mxu0 %v4208
    %4288 = vmatprep.subr.mxu0 0.0
    %4289 = vmatpush1.msra.mxu0 %v4209
    %4290 = vmatprep.subr.mxu0 0.0
    %4291 = vmatpush1.msra.mxu0 %v4210
    %4292 = vmatprep.subr.mxu0 0.0
    %4293 = vmatpush1.msra.mxu0 %v4211
    %4294 = vmatprep.subr.mxu0 0.0
    %4295 = vmatpush1.msra.mxu0 %v4212
    %4296 = vmatprep.subr.mxu0 0.0
    %4297 = vmatpush1.msra.mxu0 %v4213
    %4298 = vmatprep.subr.mxu0 0.0
    %4299 = vmatpush1.msra.mxu0 %v4214
    %4300 = vmatprep.subr.mxu0 0.0
    %4301 = vmatpush1.msra.mxu0 %v4215
    %4302 = vmatprep.subr.mxu0 0.0
    %4303 = vmatpush1.msra.mxu0 %v4216
    %4304 = vmatprep.subr.mxu0 0.0
    %4305 = vmatpush1.msra.mxu0 %v4217
    %4306 = vmatprep.subr.mxu0 0.0
    %4307 = vmatpush1.msra.mxu0 %v4218
    %4308 = vmatprep.subr.mxu0 0.0
    %4309 = vmatpush1.msra.mxu0 %v4219
    %4310 = vmatprep.subr.mxu0 0.0
    %4311 = vmatpush1.msra.mxu0 %v4220
    %4312 = vmatprep.subr.mxu0 0.0
    %4313 = vmatpush1.msra.mxu0 %v4221
    %4314 = vmatprep.subr.mxu0 0.0
    %4315 = vmatpush1.msra.mxu0 %v4222
    %4316 = vmatprep.subr.mxu0 0.0
    %4317 = vmatpush1.msra.mxu0 %v4223
    %4318 = vmatprep.subr.mxu0 0.0
    %4319 = vmatpush1.msra.mxu0 %v4224
    %4320 = vmatprep.subr.mxu0 0.0
    %4321 = vmatpush1.msra.mxu0 %v4225
    %4322 = vmatprep.mubr.f32.mxu0 %v4191
    %4323 = vmatmul.mubr.f32.gmra.mrb[0].mxu0 %v4190
    %v4324 = vpop.f32.mrb[0].mxu0
    %v4325 = vadd.f32 0.0, %v4324
    %v4326 = vpop.f32.mrb[0].mxu0
    %4327 = vdwg.mxu0
    %4328 = vmatprep.subr.mxu0 0.0
    %4329 = vmatpush1.msra.mxu0 %v4226
    %4330 = vmatprep.subr.mxu0 0.0
    %4331 = vmatpush1.msra.mxu0 %v4227
    %4332 = vmatprep.subr.mxu0 0.0
    %4333 = vmatpush1.msra.mxu0 %v4228
    %4334 = vmatprep.subr.mxu0 0.0
    %4335 = vmatpush1.msra.mxu0 %v4229
    %4336 = vmatprep.subr.mxu0 0.0
    %4337 = vmatpush1.msra.mxu0 %v4230
    %4338 = vmatprep.subr.mxu0 0.0
    %4339 = vmatpush1.msra.mxu0 %v4231
    %4340 = vmatprep.subr.mxu0 0.0
    %4341 = vmatpush1.msra.mxu0 %v4232
    %4342 = vmatprep.subr.mxu0 0.0
    %4343 = vmatpush1.msra.mxu0 %v4233
    %4344 = vmatprep.subr.mxu0 0.0
    %4345 = vmatpush1.msra.mxu0 %v4234
    %4346 = vmatprep.subr.mxu0 0.0
    %4347 = vmatpush1.msra.mxu0 %v4235
    %4348 = vmatprep.subr.mxu0 0.0
    %4349 = vmatpush1.msra.mxu0 %v4236
    %4350 = vmatprep.subr.mxu0 0.0
    %4351 = vmatpush1.msra.mxu0 %v4237
    %4352 = vmatprep.subr.mxu0 0.0
    %4353 = vmatpush1.msra.mxu0 %v4238
    %4354 = vmatprep.subr.mxu0 0.0
    %4355 = vmatpush1.msra.mxu0 %v4239
    %4356 = vmatprep.subr.mxu0 0.0
    %4357 = vmatpush1.msra.mxu0 %v4240
    %4358 = vmatprep.subr.mxu0 0.0
    %4359 = vmatpush1.msra.mxu0 %v4241
    %4360 = vmatprep.subr.mxu0 0.0
    %4361 = vmatpush1.msra.mxu0 %v4242
    %4362 = vmatprep.subr.mxu0 0.0
    %4363 = vmatpush1.msra.mxu0 %v4243
    %4364 = vmatprep.subr.mxu0 0.0
    %4365 = vmatpush1.msra.mxu0 %v4244
    %4366 = vmatprep.subr.mxu0 0.0
    %4367 = vmatpush1.msra.mxu0 %v4245
    %4368 = vmatprep.subr.mxu0 0.0
    %4369 = vmatpush1.msra.mxu0 %v4246
    %4370 = vmatprep.subr.mxu0 0.0
    %4371 = vmatpush1.msra.mxu0 %v4247
    %4372 = vmatprep.subr.mxu0 0.0
    %4373 = vmatpush1.msra.mxu0 %v4248
    %4374 = vmatprep.subr.mxu0 0.0
    %4375 = vmatpush1.msra.mxu0 %v4249
    %4376 = vmatprep.subr.mxu0 0.0
    %4377 = vmatpush1.msra.mxu0 %v4250
    %4378 = vmatprep.subr.mxu0 0.0
    %4379 = vmatpush1.msra.mxu0 %v4251
    %4380 = vmatprep.subr.mxu0 0.0
    %4381 = vmatpush1.msra.mxu0 %v4252
    %4382 = vmatprep.subr.mxu0 0.0
    %4383 = vmatpush1.msra.mxu0 %v4253
    %4384 = vmatprep.subr.mxu0 0.0
    %4385 = vmatpush1.msra.mxu0 %v4254
    %4386 = vmatprep.subr.mxu0 0.0
    %4387 = vmatpush1.msra.mxu0 %v4255
    %4388 = vmatprep.subr.mxu0 0.0
    %4389 = vmatpush1.msra.mxu0 %v4256
    %4390 = vmatprep.subr.mxu0 0.0
    %4391 = vmatpush1.msra.mxu0 %v4257
    %4392 = vmatprep.mubr.f32.mxu0 %v4193
    %4393 = vmatmul.mubr.f32.gmra.mrb[0].mxu0 %v4192
    %v4394 = vpop.f32.mrb[0].mxu0
    %v4395 = vadd.f32 %v4325, %v4394
    %v4396 = vpop.f32.mrb[0].mxu0
    %4397 = vdwg.mxu0
    %4398 = vst [vmem:[#allocation5] sm:$0xff] %v4395
    // Predicated region
    $region54: #{tpu_custom_call.1} parent=1 // pred_check
      _
    $region55: #{tpu_custom_call.1} parent=1 // pred_check_branch
      %4400 = sbr.rel (0) target = $region57
    $region56: #{tpu_custom_call.1} parent=1 // pred_region
      %s4402 = ssub.s32 128, 128
      %4403 = vsyncadd [#allocation4], %s4402
      %s4405 = sshll.u32 [#allocation5], 4
      %s4406 = int_to_ptr.vmem [resolvable:$true] %s4405
      %4408 = dma.vmem_to_hbm [thread:$0]  %s4406, 128, %s12, [#allocation4]
    $region57: #{tpu_custom_call.1} parent=1 // pred_fallthru
      _
    // Predicated region
    $region58: #{tpu_custom_call.1} parent=1 // pred_check
      _
    $region59: #{tpu_custom_call.1} parent=1 // pred_check_branch
      %4410 = sbr.rel (0) target = $region61
    $region60: #{tpu_custom_call.1} parent=1 // pred_region
      %4411 = dma.done [#allocation4], 128
    $region61: #{tpu_custom_call.1} parent=1 // pred_fallthru
      _
    %4412 = vsyncpa [#allocation3], 1
    %4413 = vsyncpa [#allocation4], 1

</llo_original>
